<compile_context>
chip_gen: v5e
topology: v5e:2x2
jax: 0.10.0
libtpu: 0.0.40
codegen_flags: <defaults>
</compile_context>

<pallas_src>
import math

import jax
import jax.numpy as jnp
from jax import lax
from jax.experimental import pallas as pl
from jax.experimental.pallas import tpu as pltpu

D_MODEL = 32            # d_model
NHEAD = 4               # temporal attention heads (d_model % nhead == 0)
HD_T = D_MODEL // NHEAD         # 8
DIM_FF = 64             # dim_feedforward (small for the demo)
SEQ = 150               # sequence length; forced to 150 by spatio_attn embed dim
SPATIO_HEADS = 5        # nn.MultiheadAttention(150, 5)
HD_S = SEQ // SPATIO_HEADS      # 30
HEAD_SLOT = 32          # per-head column slot (hd 30 zero-padded to 32)
NSLOTS = SPATIO_HEADS * HEAD_SLOT   # 160
SECTION = 256           # q / k / v section width in the fused spatio weight
LN_EPS = 1e-5
BATCH = 2

F32 = jnp.float32
BF16 = jnp.bfloat16


# ----------------------------------------------------------------------------
# reference-only helpers (row-token formulation, pure f32)
# ----------------------------------------------------------------------------
def _layer_norm(y, g, b):
    mu = jnp.mean(y, axis=-1, keepdims=True)
    var = jnp.mean(jnp.square(y - mu), axis=-1, keepdims=True)
    return (y - mu) * lax.rsqrt(var + LN_EPS) * g + b


def _mha(x, wq, wk, wv, bq, bk, bv, wo, bo, num_heads):
    """torch.nn.MultiheadAttention self-attention on a (T, E) token slab."""
    T, E = x.shape
    hd = E // num_heads
    dn = (((1,), (1,)), ((), ()))
    q = lax.dot_general(x, wq, dn, preferred_element_type=F32) + bq
    k = lax.dot_general(x, wk, dn, preferred_element_type=F32) + bk
    v = lax.dot_general(x, wv, dn, preferred_element_type=F32) + bv
    scale = 1.0 / math.sqrt(hd)
    out = jnp.zeros((T, E), F32) + bo
    for h in range(num_heads):
        sl = slice(h * hd, (h + 1) * hd)
        s = lax.dot_general(q[:, sl] * scale, k[:, sl], dn,
                            preferred_element_type=F32)
        s = s - jnp.max(s, axis=-1, keepdims=True)
        p = jnp.exp(s)
        p = p / jnp.sum(p, axis=-1, keepdims=True)
        oh = jnp.dot(p, v[:, sl], preferred_element_type=F32)
        out = out + lax.dot_general(oh, wo[:, sl], dn, preferred_element_type=F32)
    return out


# ----------------------------------------------------------------------------
# in-kernel helpers ((D, S)-resident layout: d_model on sublanes, seq on lanes)
# ----------------------------------------------------------------------------
def _ln_cols(x):
    """LayerNorm over d_model (= axis 0) of a (D, S) slab, no affine."""
    mu = jnp.mean(x, axis=0, keepdims=True)
    var = jnp.mean(jnp.square(x - mu), axis=0, keepdims=True)
    return (x - mu) * lax.rsqrt(var + LN_EPS)


def _softmax_last(s):
    s = s - jnp.max(s, axis=-1, keepdims=True)
    p = jnp.exp(s)
    return p * pl.reciprocal(jnp.sum(p, axis=-1, keepdims=True), approx=True)


# ----------------------------------------------------------------------------
# Pallas kernel: one grid step = one batch element as a (32, 150) lane-dense
# slab (d_model on sublanes, sequence on lanes).
# ----------------------------------------------------------------------------
def _encoder_kernel(x_ref, swqkv_ref, sb_ref, swo_ref, packw_ref, colp_ref,
                    out_ref):
    # ---- packed small parameters ------------------------------------------
    t_qkv_w = packw_ref[0:3 * D_MODEL, 0:D_MODEL]                       # (96, 32)
    t_wo = packw_ref[3 * D_MODEL:4 * D_MODEL, 0:D_MODEL]                # (32, 32)
    w1 = packw_ref[4 * D_MODEL:4 * D_MODEL + DIM_FF, 0:D_MODEL]         # (64, 32)
    w2 = packw_ref[4 * D_MODEL + DIM_FF:5 * D_MODEL + DIM_FF, 0:DIM_FF]  # (32, 64)
    t_qkv_b = colp_ref[0:3 * D_MODEL, 0:1]                              # (96, 1)
    t_bo = colp_ref[0:D_MODEL, 1:2]
    b1 = colp_ref[0:DIM_FF, 2:3]
    b2 = colp_ref[0:D_MODEL, 3:4]
    n1g, n1b = colp_ref[0:D_MODEL, 4:5], colp_ref[0:D_MODEL, 5:6]

    x = x_ref[0]                                   # (32, 150) f32, lane-dense

    # ---- x += spatio attention(norm1(x)); tokens = the 32 feature rows ----
    # (1/sqrt(30) is folded into the packed q weights/bias)
    y = _ln_cols(x) * n1g + n1b
    qkv = jnp.dot(y.astype(BF16), swqkv_ref[...],
                  preferred_element_type=F32) + sb_ref[0:1, :]          # (32, 768)
    q = qkv[:, 0:NSLOTS].astype(BF16)              # aligned section starts
    k = qkv[:, SECTION:SECTION + NSLOTS].astype(BF16)
    v = qkv[:, 2 * SECTION:2 * SECTION + NSLOTS].astype(BF16)
    dn_nt = (((1,), (1,)), ((), ()))               # contract last dims (scores)
    ctx_parts = []
    for h in range(SPATIO_HEADS):
        sl = slice(h * HEAD_SLOT, (h + 1) * HEAD_SLOT)
        s = lax.dot_general(q[:, sl], k[:, sl], dn_nt,
                            preferred_element_type=F32)                 # (32, 32)
        p = _softmax_last(s).astype(BF16)
        ctx_parts.append(jnp.dot(p, v[:, sl],
                                 preferred_element_type=F32).astype(BF16))
    ctx = jnp.concatenate(ctx_parts, axis=-1)      # (32, 160) bf16, head slots
    x = x + jnp.dot(ctx, swo_ref[...], preferred_element_type=F32) \
          + sb_ref[1:2, 0:SEQ]                     # dropout1 = id

    # ---- x += temporal attention(norm2(x)); tokens = the 150 sequence cols
    # (norm2 affine and 1/sqrt(8) are folded into t_qkv_w / t_qkv_b)
    y = _ln_cols(x).astype(BF16)                                        # (32, 150)
    qkv = jnp.dot(t_qkv_w, y, preferred_element_type=F32) + t_qkv_b     # (96, 150)
    q = qkv[0:D_MODEL].reshape(NHEAD, HD_T, SEQ).astype(BF16)           # (4, 8, 150)
    k = qkv[D_MODEL:2 * D_MODEL].reshape(NHEAD, HD_T, SEQ).astype(BF16)
    v = qkv[2 * D_MODEL:3 * D_MODEL].reshape(NHEAD, HD_T, SEQ).astype(BF16)
    # contract the head_dim (axis 1) directly - no explicit transpose of q
    s = lax.dot_general(q, k, (((1,), (1,)), ((0,), (0,))),
                        preferred_element_type=F32)                     # (4,150,150)
    p = _softmax_last(s).astype(BF16)
    ctx = lax.dot_general(v, p, (((2,), (2,)), ((0,), (0,))),
                          preferred_element_type=F32)                   # (4, 8, 150)
    ctx = ctx.reshape(D_MODEL, SEQ).astype(BF16)
    x = x + jnp.dot(t_wo, ctx, preferred_element_type=F32) + t_bo       # dropout2 = id

    # ---- x += FFN(norm3(x)); norm3 affine folded into w1 / b1 -------------
    y = _ln_cols(x).astype(BF16)
    ff = jnp.dot(w1, y, preferred_element_type=F32) + b1
    ff = jnp.maximum(ff, 0.0).astype(BF16)                              # (64, 150)
    x = x + jnp.dot(w2, ff, preferred_element_type=F32) + b2

    out_ref[0] = x


# ----------------------------------------------------------------------------
# wrapper-side parameter packing (PyTorch-convention params -> 5 arrays)
# ----------------------------------------------------------------------------
def _pack_params(p):
    s_scale = 1.0 / math.sqrt(HD_S)
    t_scale = 1.0 / math.sqrt(HD_T)

    def head_slot_w(w):          # (150_out, 150_in) -> (150_in = K, 160 = slotted N)
        wt = w.T.reshape(SEQ, SPATIO_HEADS, HD_S)
        wt = jnp.pad(wt, ((0, 0), (0, 0), (0, HEAD_SLOT - HD_S)))
        return wt.reshape(SEQ, NSLOTS)

    def head_slot_b(b):          # (1, 150) -> (1, 160)
        v = b.reshape(SPATIO_HEADS, HD_S)
        v = jnp.pad(v, ((0, 0), (0, HEAD_SLOT - HD_S)))
        return v.reshape(1, NSLOTS)

    def pad_sec(a):              # (r, 160) -> (r, 256): lane-align section starts
        return jnp.pad(a, ((0, 0), (0, SECTION - NSLOTS)))

    # fused spatio QKV weight, (K=150, N=768) bf16; scale folded into q section
    swqkv = jnp.concatenate(
        [pad_sec(head_slot_w(p['swq']) * s_scale),
         pad_sec(head_slot_w(p['swk'])),
         pad_sec(head_slot_w(p['swv']))], axis=1).astype(BF16)           # (150, 768)

    sqkv_b = jnp.concatenate(
        [pad_sec(head_slot_b(p['sbq']) * s_scale),
         pad_sec(head_slot_b(p['sbk'])),
         pad_sec(head_slot_b(p['sbv']))], axis=1)                        # (1, 768)
    sbo_row = jnp.pad(p['sbo'], ((0, 0), (0, 3 * SECTION - SEQ)))        # (1, 768)
    sb = jnp.concatenate([sqkv_b, sbo_row], axis=0).astype(F32)          # (2, 768)

    # spatio out-projection, (K=160 head slots, N=150) bf16 (head sum in K)
    wo_t = p['swo'].T.reshape(SPATIO_HEADS, HD_S, SEQ)
    wo_t = jnp.pad(wo_t, ((0, 0), (0, HEAD_SLOT - HD_S), (0, 0)))
    swo = wo_t.reshape(NSLOTS, SEQ).astype(BF16)                         # (160, 150)

    # temporal attention: fold norm2 affine + 1/sqrt(hd); FFN: fold norm3 affine
    n2g, n2b = p['n2g'].reshape(-1), p['n2b'].reshape(-1)
    n3g, n3b = p['n3g'].reshape(-1), p['n3b'].reshape(-1)
    twq = (p['twq'] * n2g[None, :]) * t_scale
    twk = p['twk'] * n2g[None, :]
    twv = p['twv'] * n2g[None, :]
    tbq = (p['tbq'].reshape(-1) + p['twq'] @ n2b) * t_scale
    tbk = p['tbk'].reshape(-1) + p['twk'] @ n2b
    tbv = p['tbv'].reshape(-1) + p['twv'] @ n2b
    w1 = p['w1'] * n3g[None, :]
    b1 = p['b1'].reshape(-1) + p['w1'] @ n3b

    # temporal + FFN weights packed into one (224, 64) bf16 slab
    left = jnp.concatenate([twq, twk, twv, p['two'], w1], axis=0)        # (192, 32)
    left = jnp.pad(left, ((0, 0), (0, DIM_FF - D_MODEL)))                # (192, 64)
    packw = jnp.concatenate([left, p['w2']], axis=0).astype(BF16)        # (224, 64)

    # column biases + norm1 affine packed into one (96, 8) f32 slab
    def col(v):
        v = v.reshape(-1)
        return jnp.pad(v, (0, 3 * D_MODEL - v.shape[0]))[:, None]

    colp = jnp.concatenate(
        [jnp.concatenate([tbq, tbk, tbv])[:, None],
         col(p['tbo']), col(b1), col(p['b2']),
         col(p['n1g']), col(p['n1b']),
         jnp.zeros((3 * D_MODEL, 2), F32)], axis=1).astype(F32)          # (96, 8)

    return swqkv, sb, swo, packw, colp


@jax.jit
def music_encoder(x, p):
    B, S, D = x.shape
    assert S == SEQ and D == D_MODEL
    packed = _pack_params(p)
    xt = jnp.transpose(x, (0, 2, 1))            # (B, D, S) lane-dense resident layout

    in_specs = ([pl.BlockSpec((1, D_MODEL, SEQ), lambda b: (b, 0, 0))]
                + [pl.BlockSpec(a.shape, lambda b, n=a.ndim: (0,) * n)
                   for a in packed])

    flops_per_b = 2 * (D_MODEL * SEQ * 3 * SECTION                     # spatio QKV
                       + 2 * SPATIO_HEADS * D_MODEL * D_MODEL * HEAD_SLOT
                       + D_MODEL * NSLOTS * SEQ                        # spatio out-proj
                       + 3 * D_MODEL * D_MODEL * SEQ                   # temporal QKV
                       + 2 * NHEAD * SEQ * SEQ * HD_T                  # scores + ctx
                       + D_MODEL * D_MODEL * SEQ                       # temporal out-proj
                       + 2 * DIM_FF * D_MODEL * SEQ)                   # FFN
    transc_per_b = SPATIO_HEADS * D_MODEL * D_MODEL + NHEAD * SEQ * SEQ
    param_bytes = int(sum(a.size * a.dtype.itemsize for a in packed))
    cost = pl.CostEstimate(flops=B * flops_per_b,
                           transcendentals=B * transc_per_b,
                           bytes_accessed=2 * x.size * 4 + param_bytes)

    out = pl.pallas_call(
        _encoder_kernel,
        out_shape=jax.ShapeDtypeStruct((B, D_MODEL, SEQ), jnp.float32),
        grid=(B,),
        in_specs=in_specs,
        out_specs=pl.BlockSpec((1, D_MODEL, SEQ), lambda b: (b, 0, 0)),
        compiler_params=pltpu.CompilerParams(
            dimension_semantics=("parallel",),
            vmem_limit_bytes=8 * 1024 * 1024,
        ),
        cost_estimate=cost,
    )(xt, *packed)
    return jnp.transpose(out, (0, 2, 1))        # back to (B, S, D)


# ----------------------------------------------------------------------------
# deterministic synthetic parameters (shapes from MusicEncoder.__init__)
# ----------------------------------------------------------------------------
def init_params(key):
    ks = jax.random.split(key, 20)

    def w(k, shape, scale=0.05):
        return (scale * jax.random.normal(k, shape)).astype(F32)

    p = {}
    for n in ('n1', 'n2', 'n3'):                       # LayerNorm(d_model)
        p[n + 'g'] = jnp.ones((1, D_MODEL), F32)
        p[n + 'b'] = jnp.zeros((1, D_MODEL), F32)
    # spatio_attn = MultiheadAttention(150, 5)
    p['swq'], p['swk'], p['swv'] = w(ks[0], (SEQ, SEQ)), w(ks[1], (SEQ, SEQ)), w(ks[2], (SEQ, SEQ))
    p['sbq'], p['sbk'], p['sbv'] = w(ks[3], (1, SEQ)), w(ks[4], (1, SEQ)), w(ks[5], (1, SEQ))
    p['swo'], p['sbo'] = w(ks[6], (SEQ, SEQ)), w(ks[7], (1, SEQ))
    # temporal_attn = MultiheadAttention(d_model, nhead)
    p['twq'], p['twk'], p['twv'] = (w(ks[8], (D_MODEL, D_MODEL)),
                                    w(ks[9], (D_MODEL, D_MODEL)),
                                    w(ks[10], (D_MODEL, D_MODEL)))
    p['tbq'], p['tbk'], p['tbv'] = (w(ks[11], (1, D_MODEL)),
                                    w(ks[12], (1, D_MODEL)),
                                    w(ks[13], (1, D_MODEL)))
    p['two'], p['tbo'] = w(ks[14], (D_MODEL, D_MODEL)), w(ks[15], (1, D_MODEL))
    # linear1 / linear2
    p['w1'], p['b1'] = w(ks[16], (DIM_FF, D_MODEL)), w(ks[17], (1, DIM_FF))
    p['w2'], p['b2'] = w(ks[18], (D_MODEL, DIM_FF)), w(ks[19], (1, D_MODEL))
    return p


# ----------------------------------------------------------------------------
# plain-JAX f32 reference (same math, row-token formulation)
# ----------------------------------------------------------------------------
def reference_forward(x, p):
    def ln(xb, g, b):
        return jax.vmap(lambda t: _layer_norm(t, g, b))(xb)

    def mha(xb, pre, nh):
        wq, wk, wv, bq, bk, bv, wo, bo = pre
        return jax.vmap(lambda t: _mha(t, wq, wk, wv, bq, bk, bv, wo, bo, nh))(xb)

    sp = (p['swq'], p['swk'], p['swv'], p['sbq'], p['sbk'], p['sbv'], p['swo'], p['sbo'])
    tp = (p['twq'], p['twk'], p['twv'], p['tbq'], p['tbk'], p['tbv'], p['two'], p['tbo'])

    y = ln(x, p['n1g'], p['n1b'])
    x = x + jnp.transpose(mha(jnp.transpose(y, (0, 2, 1)), sp, SPATIO_HEADS), (0, 2, 1))
    y = ln(x, p['n2g'], p['n2b'])
    x = x + mha(y, tp, NHEAD)
    y = ln(x, p['n3g'], p['n3b'])
    h = jnp.maximum(y @ p['w1'].T + p['b1'], 0.0)
    x = x + h @ p['w2'].T + p['b2']
    return x


if __name__ == "__main__":
    key = jax.random.PRNGKey(0)
    kx, kp = jax.random.split(key)
    x = jax.random.normal(kx, (BATCH, SEQ, D_MODEL), dtype=jnp.float32)
    params = init_params(kp)

    out = jax.block_until_ready(music_encoder(x, params))
    ref = reference_forward(x, params)
    assert out.shape == (BATCH, SEQ, D_MODEL)
    if not jnp.allclose(out, ref, atol=5e-2, rtol=5e-2):
        raise AssertionError(
            f"kernel/reference mismatch, max abs diff = {float(jnp.max(jnp.abs(out - ref)))}")
    print("KERNEL_OK")
</pallas_src>

<mosaic_0001>
module attributes {stable_mosaic.version = 11 : i64} {
  func.func @_encoder_kernel(%arg0: i32, %arg1: memref<1x32x150xf32, #tpu.memory_space<vmem>>, %arg2: memref<150x768xbf16, #tpu.memory_space<vmem>>, %arg3: memref<2x768xf32, #tpu.memory_space<vmem>>, %arg4: memref<160x150xbf16, #tpu.memory_space<vmem>>, %arg5: memref<224x64xbf16, #tpu.memory_space<vmem>>, %arg6: memref<96x8xf32, #tpu.memory_space<vmem>>, %arg7: memref<1x32x150xf32, #tpu.memory_space<vmem>>) attributes {dimension_semantics = [#tpu.dimension_semantics<parallel>], iteration_bounds = array<i64: 2>, scalar_prefetch = 0 : i64, scratch_operands = 0 : i64, tpu.core_type = #tpu.core_type<tc>, window_params = [{transform_indices = @transform_0, window_bounds = array<i64: 1, 32, 150>}, {pipeline_mode = #tpu.pipeline_mode<synchronous>, transform_indices = @transform_1, window_bounds = array<i64: 150, 768>}, {pipeline_mode = #tpu.pipeline_mode<synchronous>, transform_indices = @transform_2, window_bounds = array<i64: 2, 768>}, {pipeline_mode = #tpu.pipeline_mode<synchronous>, transform_indices = @transform_3, window_bounds = array<i64: 160, 150>}, {pipeline_mode = #tpu.pipeline_mode<synchronous>, transform_indices = @transform_4, window_bounds = array<i64: 224, 64>}, {pipeline_mode = #tpu.pipeline_mode<synchronous>, transform_indices = @transform_5, window_bounds = array<i64: 96, 8>}, {transform_indices = @transform_6, window_bounds = array<i64: 1, 32, 150>}]} {
    %c0 = arith.constant 0 : index
    %c0_0 = arith.constant 0 : index
    %0 = vector.load %arg5[%c0, %c0_0] : memref<224x64xbf16, #tpu.memory_space<vmem>>, vector<96x32xbf16>
    %c96 = arith.constant 96 : index
    %c0_1 = arith.constant 0 : index
    %1 = vector.load %arg5[%c96, %c0_1] : memref<224x64xbf16, #tpu.memory_space<vmem>>, vector<32x32xbf16>
    %c128 = arith.constant 128 : index
    %c0_2 = arith.constant 0 : index
    %2 = vector.load %arg5[%c128, %c0_2] : memref<224x64xbf16, #tpu.memory_space<vmem>>, vector<64x32xbf16>
    %c192 = arith.constant 192 : index
    %c0_3 = arith.constant 0 : index
    %3 = vector.load %arg5[%c192, %c0_3] : memref<224x64xbf16, #tpu.memory_space<vmem>>, vector<32x64xbf16>
    %c0_4 = arith.constant 0 : index
    %c0_5 = arith.constant 0 : index
    %4 = vector.load %arg6[%c0_4, %c0_5] : memref<96x8xf32, #tpu.memory_space<vmem>>, vector<96x1xf32>
    %c0_6 = arith.constant 0 : index
    %c1 = arith.constant 1 : index
    %5 = vector.load %arg6[%c0_6, %c1] : memref<96x8xf32, #tpu.memory_space<vmem>>, vector<32x1xf32>
    %c0_7 = arith.constant 0 : index
    %c2 = arith.constant 2 : index
    %6 = vector.load %arg6[%c0_7, %c2] : memref<96x8xf32, #tpu.memory_space<vmem>>, vector<64x1xf32>
    %c0_8 = arith.constant 0 : index
    %c3 = arith.constant 3 : index
    %7 = vector.load %arg6[%c0_8, %c3] : memref<96x8xf32, #tpu.memory_space<vmem>>, vector<32x1xf32>
    %c0_9 = arith.constant 0 : index
    %c4 = arith.constant 4 : index
    %8 = vector.load %arg6[%c0_9, %c4] : memref<96x8xf32, #tpu.memory_space<vmem>>, vector<32x1xf32>
    %c0_10 = arith.constant 0 : index
    %c5 = arith.constant 5 : index
    %9 = vector.load %arg6[%c0_10, %c5] : memref<96x8xf32, #tpu.memory_space<vmem>>, vector<32x1xf32>
    %c0_11 = arith.constant 0 : index
    %c0_12 = arith.constant 0 : index
    %c0_13 = arith.constant 0 : index
    %10 = vector.load %arg1[%c0_11, %c0_12, %c0_13] : memref<1x32x150xf32, #tpu.memory_space<vmem>>, vector<1x32x150xf32>
    %11 = vector.shape_cast %10 : vector<1x32x150xf32> to vector<32x150xf32>
    %cst = arith.constant dense<0.000000e+00> : vector<150xf32>
    %12 = vector.multi_reduction <add>, %11, %cst [0] : vector<32x150xf32> to vector<150xf32>
    %13 = vector.shape_cast %12 : vector<150xf32> to vector<1x150xf32>
    %cst_14 = arith.constant 3.200000e+01 : f32
    %14 = vector.broadcast %cst_14 : f32 to vector<1x150xf32>
    %15 = arith.divf %13, %14 : vector<1x150xf32>
    %16 = vector.broadcast %15 : vector<1x150xf32> to vector<32x150xf32>
    %17 = arith.subf %11, %16 : vector<32x150xf32>
    %18 = arith.mulf %17, %17 : vector<32x150xf32>
    %cst_15 = arith.constant dense<0.000000e+00> : vector<150xf32>
    %19 = vector.multi_reduction <add>, %18, %cst_15 [0] : vector<32x150xf32> to vector<150xf32>
    %20 = vector.shape_cast %19 : vector<150xf32> to vector<1x150xf32>
    %cst_16 = arith.constant 3.200000e+01 : f32
    %21 = vector.broadcast %cst_16 : f32 to vector<1x150xf32>
    %22 = arith.divf %20, %21 : vector<1x150xf32>
    %23 = vector.broadcast %15 : vector<1x150xf32> to vector<32x150xf32>
    %24 = arith.subf %11, %23 : vector<32x150xf32>
    %cst_17 = arith.constant 9.99999974E-6 : f32
    %25 = vector.broadcast %cst_17 : f32 to vector<1x150xf32>
    %26 = arith.addf %22, %25 : vector<1x150xf32>
    %27 = math.rsqrt %26 : vector<1x150xf32>
    %28 = vector.broadcast %27 : vector<1x150xf32> to vector<32x150xf32>
    %29 = arith.mulf %24, %28 : vector<32x150xf32>
    %30 = vector.broadcast %8 : vector<32x1xf32> to vector<32x150xf32>
    %31 = arith.mulf %29, %30 : vector<32x150xf32>
    %32 = vector.broadcast %9 : vector<32x1xf32> to vector<32x150xf32>
    %33 = arith.addf %31, %32 : vector<32x150xf32>
    %34 = arith.truncf %33 : vector<32x150xf32> to vector<32x150xbf16>
    %c0_18 = arith.constant 0 : index
    %c0_19 = arith.constant 0 : index
    %35 = vector.load %arg2[%c0_18, %c0_19] : memref<150x768xbf16, #tpu.memory_space<vmem>>, vector<150x768xbf16>
    %cst_20 = arith.constant dense<0.000000e+00> : vector<32x768xf32>
    %36 = tpu.matmul %34, %35, %cst_20 {dimension_numbers = #tpu.dot_dimension_numbers<[1], [0], [0], [1], [0, 0, 1, 1], [], []>} : vector<32x150xbf16>, vector<150x768xbf16>, vector<32x768xf32> -> vector<32x768xf32>
    %c0_21 = arith.constant 0 : index
    %c0_22 = arith.constant 0 : index
    %37 = vector.load %arg3[%c0_21, %c0_22] : memref<2x768xf32, #tpu.memory_space<vmem>>, vector<1x768xf32>
    %38 = vector.broadcast %37 : vector<1x768xf32> to vector<32x768xf32>
    %39 = arith.addf %36, %38 : vector<32x768xf32>
    %40 = vector.extract_strided_slice %39 {offsets = [0, 0], sizes = [32, 160], strides = [1, 1]} : vector<32x768xf32> to vector<32x160xf32>
    %41 = arith.truncf %40 : vector<32x160xf32> to vector<32x160xbf16>
    %42 = vector.extract_strided_slice %39 {offsets = [0, 256], sizes = [32, 160], strides = [1, 1]} : vector<32x768xf32> to vector<32x160xf32>
    %43 = arith.truncf %42 : vector<32x160xf32> to vector<32x160xbf16>
    %44 = vector.extract_strided_slice %39 {offsets = [0, 512], sizes = [32, 160], strides = [1, 1]} : vector<32x768xf32> to vector<32x160xf32>
    %45 = arith.truncf %44 : vector<32x160xf32> to vector<32x160xbf16>
    %46 = vector.extract_strided_slice %41 {offsets = [0, 0], sizes = [32, 32], strides = [1, 1]} : vector<32x160xbf16> to vector<32x32xbf16>
    %47 = vector.extract_strided_slice %43 {offsets = [0, 0], sizes = [32, 32], strides = [1, 1]} : vector<32x160xbf16> to vector<32x32xbf16>
    %cst_23 = arith.constant dense<0.000000e+00> : vector<32x32xf32>
    %48 = tpu.matmul %46, %47, %cst_23 {dimension_numbers = #tpu.dot_dimension_numbers<[1], [1], [0], [0], [0, 0, 1, 0], [], []>} : vector<32x32xbf16>, vector<32x32xbf16>, vector<32x32xf32> -> vector<32x32xf32>
    %cst_24 = arith.constant dense<0xFF800000> : vector<32xf32>
    %49 = vector.multi_reduction <maximumf>, %48, %cst_24 [1] : vector<32x32xf32> to vector<32xf32>
    %50 = vector.shape_cast %49 : vector<32xf32> to vector<32x1xf32>
    %51 = vector.broadcast %50 : vector<32x1xf32> to vector<32x32xf32>
    %52 = arith.subf %48, %51 : vector<32x32xf32>
    %53 = math.exp %52 : vector<32x32xf32>
    %cst_25 = arith.constant dense<0.000000e+00> : vector<32xf32>
    %54 = vector.multi_reduction <add>, %53, %cst_25 [1] : vector<32x32xf32> to vector<32xf32>
    %55 = vector.shape_cast %54 : vector<32xf32> to vector<32x1xf32>
    %56 = tpu.reciprocal %55 {approx = true} : vector<32x1xf32> -> vector<32x1xf32>
    %57 = vector.broadcast %56 : vector<32x1xf32> to vector<32x32xf32>
    %58 = arith.mulf %53, %57 : vector<32x32xf32>
    %59 = arith.truncf %58 : vector<32x32xf32> to vector<32x32xbf16>
    %60 = vector.extract_strided_slice %45 {offsets = [0, 0], sizes = [32, 32], strides = [1, 1]} : vector<32x160xbf16> to vector<32x32xbf16>
    %cst_26 = arith.constant dense<0.000000e+00> : vector<32x32xf32>
    %61 = tpu.matmul %59, %60, %cst_26 {dimension_numbers = #tpu.dot_dimension_numbers<[1], [0], [0], [1], [0, 0, 1, 1], [], []>} : vector<32x32xbf16>, vector<32x32xbf16>, vector<32x32xf32> -> vector<32x32xf32>
    %62 = arith.truncf %61 : vector<32x32xf32> to vector<32x32xbf16>
    %63 = vector.extract_strided_slice %41 {offsets = [0, 32], sizes = [32, 32], strides = [1, 1]} : vector<32x160xbf16> to vector<32x32xbf16>
    %64 = vector.extract_strided_slice %43 {offsets = [0, 32], sizes = [32, 32], strides = [1, 1]} : vector<32x160xbf16> to vector<32x32xbf16>
    %cst_27 = arith.constant dense<0.000000e+00> : vector<32x32xf32>
    %65 = tpu.matmul %63, %64, %cst_27 {dimension_numbers = #tpu.dot_dimension_numbers<[1], [1], [0], [0], [0, 0, 1, 0], [], []>} : vector<32x32xbf16>, vector<32x32xbf16>, vector<32x32xf32> -> vector<32x32xf32>
    %cst_28 = arith.constant dense<0xFF800000> : vector<32xf32>
    %66 = vector.multi_reduction <maximumf>, %65, %cst_28 [1] : vector<32x32xf32> to vector<32xf32>
    %67 = vector.shape_cast %66 : vector<32xf32> to vector<32x1xf32>
    %68 = vector.broadcast %67 : vector<32x1xf32> to vector<32x32xf32>
    %69 = arith.subf %65, %68 : vector<32x32xf32>
    %70 = math.exp %69 : vector<32x32xf32>
    %cst_29 = arith.constant dense<0.000000e+00> : vector<32xf32>
    %71 = vector.multi_reduction <add>, %70, %cst_29 [1] : vector<32x32xf32> to vector<32xf32>
    %72 = vector.shape_cast %71 : vector<32xf32> to vector<32x1xf32>
    %73 = tpu.reciprocal %72 {approx = true} : vector<32x1xf32> -> vector<32x1xf32>
    %74 = vector.broadcast %73 : vector<32x1xf32> to vector<32x32xf32>
    %75 = arith.mulf %70, %74 : vector<32x32xf32>
    %76 = arith.truncf %75 : vector<32x32xf32> to vector<32x32xbf16>
    %77 = vector.extract_strided_slice %45 {offsets = [0, 32], sizes = [32, 32], strides = [1, 1]} : vector<32x160xbf16> to vector<32x32xbf16>
    %cst_30 = arith.constant dense<0.000000e+00> : vector<32x32xf32>
    %78 = tpu.matmul %76, %77, %cst_30 {dimension_numbers = #tpu.dot_dimension_numbers<[1], [0], [0], [1], [0, 0, 1, 1], [], []>} : vector<32x32xbf16>, vector<32x32xbf16>, vector<32x32xf32> -> vector<32x32xf32>
    %79 = arith.truncf %78 : vector<32x32xf32> to vector<32x32xbf16>
    %80 = vector.extract_strided_slice %41 {offsets = [0, 64], sizes = [32, 32], strides = [1, 1]} : vector<32x160xbf16> to vector<32x32xbf16>
    %81 = vector.extract_strided_slice %43 {offsets = [0, 64], sizes = [32, 32], strides = [1, 1]} : vector<32x160xbf16> to vector<32x32xbf16>
    %cst_31 = arith.constant dense<0.000000e+00> : vector<32x32xf32>
    %82 = tpu.matmul %80, %81, %cst_31 {dimension_numbers = #tpu.dot_dimension_numbers<[1], [1], [0], [0], [0, 0, 1, 0], [], []>} : vector<32x32xbf16>, vector<32x32xbf16>, vector<32x32xf32> -> vector<32x32xf32>
    %cst_32 = arith.constant dense<0xFF800000> : vector<32xf32>
    %83 = vector.multi_reduction <maximumf>, %82, %cst_32 [1] : vector<32x32xf32> to vector<32xf32>
    %84 = vector.shape_cast %83 : vector<32xf32> to vector<32x1xf32>
    %85 = vector.broadcast %84 : vector<32x1xf32> to vector<32x32xf32>
    %86 = arith.subf %82, %85 : vector<32x32xf32>
    %87 = math.exp %86 : vector<32x32xf32>
    %cst_33 = arith.constant dense<0.000000e+00> : vector<32xf32>
    %88 = vector.multi_reduction <add>, %87, %cst_33 [1] : vector<32x32xf32> to vector<32xf32>
    %89 = vector.shape_cast %88 : vector<32xf32> to vector<32x1xf32>
    %90 = tpu.reciprocal %89 {approx = true} : vector<32x1xf32> -> vector<32x1xf32>
    %91 = vector.broadcast %90 : vector<32x1xf32> to vector<32x32xf32>
    %92 = arith.mulf %87, %91 : vector<32x32xf32>
    %93 = arith.truncf %92 : vector<32x32xf32> to vector<32x32xbf16>
    %94 = vector.extract_strided_slice %45 {offsets = [0, 64], sizes = [32, 32], strides = [1, 1]} : vector<32x160xbf16> to vector<32x32xbf16>
    %cst_34 = arith.constant dense<0.000000e+00> : vector<32x32xf32>
    %95 = tpu.matmul %93, %94, %cst_34 {dimension_numbers = #tpu.dot_dimension_numbers<[1], [0], [0], [1], [0, 0, 1, 1], [], []>} : vector<32x32xbf16>, vector<32x32xbf16>, vector<32x32xf32> -> vector<32x32xf32>
    %96 = arith.truncf %95 : vector<32x32xf32> to vector<32x32xbf16>
    %97 = vector.extract_strided_slice %41 {offsets = [0, 96], sizes = [32, 32], strides = [1, 1]} : vector<32x160xbf16> to vector<32x32xbf16>
    %98 = vector.extract_strided_slice %43 {offsets = [0, 96], sizes = [32, 32], strides = [1, 1]} : vector<32x160xbf16> to vector<32x32xbf16>
    %cst_35 = arith.constant dense<0.000000e+00> : vector<32x32xf32>
    %99 = tpu.matmul %97, %98, %cst_35 {dimension_numbers = #tpu.dot_dimension_numbers<[1], [1], [0], [0], [0, 0, 1, 0], [], []>} : vector<32x32xbf16>, vector<32x32xbf16>, vector<32x32xf32> -> vector<32x32xf32>
    %cst_36 = arith.constant dense<0xFF800000> : vector<32xf32>
    %100 = vector.multi_reduction <maximumf>, %99, %cst_36 [1] : vector<32x32xf32> to vector<32xf32>
    %101 = vector.shape_cast %100 : vector<32xf32> to vector<32x1xf32>
    %102 = vector.broadcast %101 : vector<32x1xf32> to vector<32x32xf32>
    %103 = arith.subf %99, %102 : vector<32x32xf32>
    %104 = math.exp %103 : vector<32x32xf32>
    %cst_37 = arith.constant dense<0.000000e+00> : vector<32xf32>
    %105 = vector.multi_reduction <add>, %104, %cst_37 [1] : vector<32x32xf32> to vector<32xf32>
    %106 = vector.shape_cast %105 : vector<32xf32> to vector<32x1xf32>
    %107 = tpu.reciprocal %106 {approx = true} : vector<32x1xf32> -> vector<32x1xf32>
    %108 = vector.broadcast %107 : vector<32x1xf32> to vector<32x32xf32>
    %109 = arith.mulf %104, %108 : vector<32x32xf32>
    %110 = arith.truncf %109 : vector<32x32xf32> to vector<32x32xbf16>
    %111 = vector.extract_strided_slice %45 {offsets = [0, 96], sizes = [32, 32], strides = [1, 1]} : vector<32x160xbf16> to vector<32x32xbf16>
    %cst_38 = arith.constant dense<0.000000e+00> : vector<32x32xf32>
    %112 = tpu.matmul %110, %111, %cst_38 {dimension_numbers = #tpu.dot_dimension_numbers<[1], [0], [0], [1], [0, 0, 1, 1], [], []>} : vector<32x32xbf16>, vector<32x32xbf16>, vector<32x32xf32> -> vector<32x32xf32>
    %113 = arith.truncf %112 : vector<32x32xf32> to vector<32x32xbf16>
    %114 = vector.extract_strided_slice %41 {offsets = [0, 128], sizes = [32, 32], strides = [1, 1]} : vector<32x160xbf16> to vector<32x32xbf16>
    %115 = vector.extract_strided_slice %43 {offsets = [0, 128], sizes = [32, 32], strides = [1, 1]} : vector<32x160xbf16> to vector<32x32xbf16>
    %cst_39 = arith.constant dense<0.000000e+00> : vector<32x32xf32>
    %116 = tpu.matmul %114, %115, %cst_39 {dimension_numbers = #tpu.dot_dimension_numbers<[1], [1], [0], [0], [0, 0, 1, 0], [], []>} : vector<32x32xbf16>, vector<32x32xbf16>, vector<32x32xf32> -> vector<32x32xf32>
    %cst_40 = arith.constant dense<0xFF800000> : vector<32xf32>
    %117 = vector.multi_reduction <maximumf>, %116, %cst_40 [1] : vector<32x32xf32> to vector<32xf32>
    %118 = vector.shape_cast %117 : vector<32xf32> to vector<32x1xf32>
    %119 = vector.broadcast %118 : vector<32x1xf32> to vector<32x32xf32>
    %120 = arith.subf %116, %119 : vector<32x32xf32>
    %121 = math.exp %120 : vector<32x32xf32>
    %cst_41 = arith.constant dense<0.000000e+00> : vector<32xf32>
    %122 = vector.multi_reduction <add>, %121, %cst_41 [1] : vector<32x32xf32> to vector<32xf32>
    %123 = vector.shape_cast %122 : vector<32xf32> to vector<32x1xf32>
    %124 = tpu.reciprocal %123 {approx = true} : vector<32x1xf32> -> vector<32x1xf32>
    %125 = vector.broadcast %124 : vector<32x1xf32> to vector<32x32xf32>
    %126 = arith.mulf %121, %125 : vector<32x32xf32>
    %127 = arith.truncf %126 : vector<32x32xf32> to vector<32x32xbf16>
    %128 = vector.extract_strided_slice %45 {offsets = [0, 128], sizes = [32, 32], strides = [1, 1]} : vector<32x160xbf16> to vector<32x32xbf16>
    %cst_42 = arith.constant dense<0.000000e+00> : vector<32x32xf32>
    %129 = tpu.matmul %127, %128, %cst_42 {dimension_numbers = #tpu.dot_dimension_numbers<[1], [0], [0], [1], [0, 0, 1, 1], [], []>} : vector<32x32xbf16>, vector<32x32xbf16>, vector<32x32xf32> -> vector<32x32xf32>
    %130 = arith.truncf %129 : vector<32x32xf32> to vector<32x32xbf16>
    %131 = tpu.concatenate %62, %79, %96, %113, %130 in 1 : vector<32x32xbf16>, vector<32x32xbf16>, vector<32x32xbf16>, vector<32x32xbf16>, vector<32x32xbf16> -> vector<32x160xbf16>
    %c0_43 = arith.constant 0 : index
    %c0_44 = arith.constant 0 : index
    %132 = vector.load %arg4[%c0_43, %c0_44] : memref<160x150xbf16, #tpu.memory_space<vmem>>, vector<160x150xbf16>
    %cst_45 = arith.constant dense<0.000000e+00> : vector<32x150xf32>
    %133 = tpu.matmul %131, %132, %cst_45 {dimension_numbers = #tpu.dot_dimension_numbers<[1], [0], [0], [1], [0, 0, 1, 1], [], []>} : vector<32x160xbf16>, vector<160x150xbf16>, vector<32x150xf32> -> vector<32x150xf32>
    %134 = arith.addf %11, %133 : vector<32x150xf32>
    %c1_46 = arith.constant 1 : index
    %c0_47 = arith.constant 0 : index
    %135 = vector.load %arg3[%c1_46, %c0_47] : memref<2x768xf32, #tpu.memory_space<vmem>>, vector<1x150xf32>
    %136 = vector.broadcast %135 : vector<1x150xf32> to vector<32x150xf32>
    %137 = arith.addf %134, %136 : vector<32x150xf32>
    %cst_48 = arith.constant dense<0.000000e+00> : vector<150xf32>
    %138 = vector.multi_reduction <add>, %137, %cst_48 [0] : vector<32x150xf32> to vector<150xf32>
    %139 = vector.shape_cast %138 : vector<150xf32> to vector<1x150xf32>
    %cst_49 = arith.constant 3.200000e+01 : f32
    %140 = vector.broadcast %cst_49 : f32 to vector<1x150xf32>
    %141 = arith.divf %139, %140 : vector<1x150xf32>
    %142 = vector.broadcast %141 : vector<1x150xf32> to vector<32x150xf32>
    %143 = arith.subf %137, %142 : vector<32x150xf32>
    %144 = arith.mulf %143, %143 : vector<32x150xf32>
    %cst_50 = arith.constant dense<0.000000e+00> : vector<150xf32>
    %145 = vector.multi_reduction <add>, %144, %cst_50 [0] : vector<32x150xf32> to vector<150xf32>
    %146 = vector.shape_cast %145 : vector<150xf32> to vector<1x150xf32>
    %cst_51 = arith.constant 3.200000e+01 : f32
    %147 = vector.broadcast %cst_51 : f32 to vector<1x150xf32>
    %148 = arith.divf %146, %147 : vector<1x150xf32>
    %149 = vector.broadcast %141 : vector<1x150xf32> to vector<32x150xf32>
    %150 = arith.subf %137, %149 : vector<32x150xf32>
    %cst_52 = arith.constant 9.99999974E-6 : f32
    %151 = vector.broadcast %cst_52 : f32 to vector<1x150xf32>
    %152 = arith.addf %148, %151 : vector<1x150xf32>
    %153 = math.rsqrt %152 : vector<1x150xf32>
    %154 = vector.broadcast %153 : vector<1x150xf32> to vector<32x150xf32>
    %155 = arith.mulf %150, %154 : vector<32x150xf32>
    %156 = arith.truncf %155 : vector<32x150xf32> to vector<32x150xbf16>
    %cst_53 = arith.constant dense<0.000000e+00> : vector<96x150xf32>
    %157 = tpu.matmul %0, %156, %cst_53 {dimension_numbers = #tpu.dot_dimension_numbers<[1], [0], [0], [1], [0, 0, 1, 1], [], []>} : vector<96x32xbf16>, vector<32x150xbf16>, vector<96x150xf32> -> vector<96x150xf32>
    %158 = vector.broadcast %4 : vector<96x1xf32> to vector<96x150xf32>
    %159 = arith.addf %157, %158 : vector<96x150xf32>
    %160 = vector.extract_strided_slice %159 {offsets = [0, 0], sizes = [32, 150], strides = [1, 1]} : vector<96x150xf32> to vector<32x150xf32>
    %161 = vector.shape_cast %160 : vector<32x150xf32> to vector<4x8x150xf32>
    %162 = arith.truncf %161 : vector<4x8x150xf32> to vector<4x8x150xbf16>
    %163 = vector.extract_strided_slice %159 {offsets = [32, 0], sizes = [32, 150], strides = [1, 1]} : vector<96x150xf32> to vector<32x150xf32>
    %164 = vector.shape_cast %163 : vector<32x150xf32> to vector<4x8x150xf32>
    %165 = arith.truncf %164 : vector<4x8x150xf32> to vector<4x8x150xbf16>
    %166 = vector.extract_strided_slice %159 {offsets = [64, 0], sizes = [32, 150], strides = [1, 1]} : vector<96x150xf32> to vector<32x150xf32>
    %167 = vector.shape_cast %166 : vector<32x150xf32> to vector<4x8x150xf32>
    %168 = arith.truncf %167 : vector<4x8x150xf32> to vector<4x8x150xbf16>
    %cst_54 = arith.constant dense<0.000000e+00> : vector<4x150x150xf32>
    %169 = tpu.matmul %162, %165, %cst_54 {dimension_numbers = #tpu.dot_dimension_numbers<[1], [1], [2], [2], [0, 0, 0, 2, 1, 2], [0], [0]>} : vector<4x8x150xbf16>, vector<4x8x150xbf16>, vector<4x150x150xf32> -> vector<4x150x150xf32>
    %cst_55 = arith.constant dense<0xFF800000> : vector<4x150xf32>
    %170 = vector.multi_reduction <maximumf>, %169, %cst_55 [2] : vector<4x150x150xf32> to vector<4x150xf32>
    %171 = vector.shape_cast %170 : vector<4x150xf32> to vector<4x150x1xf32>
    %172 = vector.broadcast %171 : vector<4x150x1xf32> to vector<4x150x150xf32>
    %173 = arith.subf %169, %172 : vector<4x150x150xf32>
    %174 = math.exp %173 : vector<4x150x150xf32>
    %cst_56 = arith.constant dense<0.000000e+00> : vector<4x150xf32>
    %175 = vector.multi_reduction <add>, %174, %cst_56 [2] : vector<4x150x150xf32> to vector<4x150xf32>
    %176 = vector.shape_cast %175 : vector<4x150xf32> to vector<4x150x1xf32>
    %177 = tpu.reciprocal %176 {approx = true} : vector<4x150x1xf32> -> vector<4x150x1xf32>
    %178 = vector.broadcast %177 : vector<4x150x1xf32> to vector<4x150x150xf32>
    %179 = arith.mulf %174, %178 : vector<4x150x150xf32>
    %180 = arith.truncf %179 : vector<4x150x150xf32> to vector<4x150x150xbf16>
    %cst_57 = arith.constant dense<0.000000e+00> : vector<4x8x150xf32>
    %181 = tpu.matmul %168, %180, %cst_57 {dimension_numbers = #tpu.dot_dimension_numbers<[2], [2], [1], [1], [0, 0, 0, 1, 1, 1], [0], [0]>} : vector<4x8x150xbf16>, vector<4x150x150xbf16>, vector<4x8x150xf32> -> vector<4x8x150xf32>
    %182 = vector.shape_cast %181 : vector<4x8x150xf32> to vector<32x150xf32>
    %183 = arith.truncf %182 : vector<32x150xf32> to vector<32x150xbf16>
    %cst_58 = arith.constant dense<0.000000e+00> : vector<32x150xf32>
    %184 = tpu.matmul %1, %183, %cst_58 {dimension_numbers = #tpu.dot_dimension_numbers<[1], [0], [0], [1], [0, 0, 1, 1], [], []>} : vector<32x32xbf16>, vector<32x150xbf16>, vector<32x150xf32> -> vector<32x150xf32>
    %185 = arith.addf %137, %184 : vector<32x150xf32>
    %186 = vector.broadcast %5 : vector<32x1xf32> to vector<32x150xf32>
    %187 = arith.addf %185, %186 : vector<32x150xf32>
    %cst_59 = arith.constant dense<0.000000e+00> : vector<150xf32>
    %188 = vector.multi_reduction <add>, %187, %cst_59 [0] : vector<32x150xf32> to vector<150xf32>
    %189 = vector.shape_cast %188 : vector<150xf32> to vector<1x150xf32>
    %cst_60 = arith.constant 3.200000e+01 : f32
    %190 = vector.broadcast %cst_60 : f32 to vector<1x150xf32>
    %191 = arith.divf %189, %190 : vector<1x150xf32>
    %192 = vector.broadcast %191 : vector<1x150xf32> to vector<32x150xf32>
    %193 = arith.subf %187, %192 : vector<32x150xf32>
    %194 = arith.mulf %193, %193 : vector<32x150xf32>
    %cst_61 = arith.constant dense<0.000000e+00> : vector<150xf32>
    %195 = vector.multi_reduction <add>, %194, %cst_61 [0] : vector<32x150xf32> to vector<150xf32>
    %196 = vector.shape_cast %195 : vector<150xf32> to vector<1x150xf32>
    %cst_62 = arith.constant 3.200000e+01 : f32
    %197 = vector.broadcast %cst_62 : f32 to vector<1x150xf32>
    %198 = arith.divf %196, %197 : vector<1x150xf32>
    %199 = vector.broadcast %191 : vector<1x150xf32> to vector<32x150xf32>
    %200 = arith.subf %187, %199 : vector<32x150xf32>
    %cst_63 = arith.constant 9.99999974E-6 : f32
    %201 = vector.broadcast %cst_63 : f32 to vector<1x150xf32>
    %202 = arith.addf %198, %201 : vector<1x150xf32>
    %203 = math.rsqrt %202 : vector<1x150xf32>
    %204 = vector.broadcast %203 : vector<1x150xf32> to vector<32x150xf32>
    %205 = arith.mulf %200, %204 : vector<32x150xf32>
    %206 = arith.truncf %205 : vector<32x150xf32> to vector<32x150xbf16>
    %cst_64 = arith.constant dense<0.000000e+00> : vector<64x150xf32>
    %207 = tpu.matmul %2, %206, %cst_64 {dimension_numbers = #tpu.dot_dimension_numbers<[1], [0], [0], [1], [0, 0, 1, 1], [], []>} : vector<64x32xbf16>, vector<32x150xbf16>, vector<64x150xf32> -> vector<64x150xf32>
    %208 = vector.broadcast %6 : vector<64x1xf32> to vector<64x150xf32>
    %209 = arith.addf %207, %208 : vector<64x150xf32>
    %cst_65 = arith.constant 0.000000e+00 : f32
    %210 = vector.broadcast %cst_65 : f32 to vector<64x150xf32>
    %211 = arith.maximumf %209, %210 : vector<64x150xf32>
    %212 = arith.truncf %211 : vector<64x150xf32> to vector<64x150xbf16>
    %cst_66 = arith.constant dense<0.000000e+00> : vector<32x150xf32>
    %213 = tpu.matmul %3, %212, %cst_66 {dimension_numbers = #tpu.dot_dimension_numbers<[1], [0], [0], [1], [0, 0, 1, 1], [], []>} : vector<32x64xbf16>, vector<64x150xbf16>, vector<32x150xf32> -> vector<32x150xf32>
    %214 = arith.addf %187, %213 : vector<32x150xf32>
    %215 = vector.broadcast %7 : vector<32x1xf32> to vector<32x150xf32>
    %216 = arith.addf %214, %215 : vector<32x150xf32>
    %c0_67 = arith.constant 0 : index
    %c0_68 = arith.constant 0 : index
    %c0_69 = arith.constant 0 : index
    %217 = vector.load %arg7[%c0_67, %c0_68, %c0_69] : memref<1x32x150xf32, #tpu.memory_space<vmem>>, vector<1x32x150xf32>
    %218 = vector.shape_cast %217 : vector<1x32x150xf32> to vector<32x150xf32>
    %219 = vector.shape_cast %216 : vector<32x150xf32> to vector<1x32x150xf32>
    tpu.vector_store %arg7[%c0_67, %c0_68, %c0_69], %219 {strides = array<i32>} : memref<1x32x150xf32, #tpu.memory_space<vmem>>, vector<1x32x150xf32>,
    return
  }
  func.func @transform_0(%arg0: i32) -> (i32, i32, i32) {
    %c0_i32 = arith.constant 0 : i32
    %c0_i32_0 = arith.constant 0 : i32
    %c0_i32_1 = arith.constant 0 : i32
    return %arg0, %c0_i32, %c0_i32_0 : i32, i32, i32
  }
  func.func @transform_1(%arg0: i32) -> (i32, i32) {
    %c0_i32 = arith.constant 0 : i32
    %c0_i32_0 = arith.constant 0 : i32
    %c0_i32_1 = arith.constant 0 : i32
    return %c0_i32, %c0_i32_0 : i32, i32
  }
  func.func @transform_2(%arg0: i32) -> (i32, i32) {
    %c0_i32 = arith.constant 0 : i32
    %c0_i32_0 = arith.constant 0 : i32
    %c0_i32_1 = arith.constant 0 : i32
    return %c0_i32, %c0_i32_0 : i32, i32
  }
  func.func @transform_3(%arg0: i32) -> (i32, i32) {
    %c0_i32 = arith.constant 0 : i32
    %c0_i32_0 = arith.constant 0 : i32
    %c0_i32_1 = arith.constant 0 : i32
    return %c0_i32, %c0_i32_0 : i32, i32
  }
  func.func @transform_4(%arg0: i32) -> (i32, i32) {
    %c0_i32 = arith.constant 0 : i32
    %c0_i32_0 = arith.constant 0 : i32
    %c0_i32_1 = arith.constant 0 : i32
    return %c0_i32, %c0_i32_0 : i32, i32
  }
  func.func @transform_5(%arg0: i32) -> (i32, i32) {
    %c0_i32 = arith.constant 0 : i32
    %c0_i32_0 = arith.constant 0 : i32
    %c0_i32_1 = arith.constant 0 : i32
    return %c0_i32, %c0_i32_0 : i32, i32
  }
  func.func @transform_6(%arg0: i32) -> (i32, i32, i32) {
    %c0_i32 = arith.constant 0 : i32
    %c0_i32_0 = arith.constant 0 : i32
    %c0_i32_1 = arith.constant 0 : i32
    return %arg0, %c0_i32, %c0_i32_0 : i32, i32, i32
  }
}

</mosaic_0001>

<llo_original>
// kernel: music_encoder.1
$region0: #{music_encoder.1}
  #allocation0 [shape = 'u32[]', space=smem, size = 0x4, offset = 0x4, fixed_abs, tag = 'smem constant byte address 0x4 - core index']
  #allocation1 [shape = 'u32[72,128]{1,0:T(1,128)}', space=vmem, size = 0x9000, scoped, tag = 'internal scratch']
  %s0 = inlined_call_operand.vmem [shape: f32[2,32,150], index: 0, kind: input, shape index: {}]
  %s1 = inlined_call_operand.vmem [shape: bf16[150,768], index: 1, kind: input, shape index: {}]
  %s2 = inlined_call_operand.vmem [shape: f32[2,768], index: 2, kind: input, shape index: {}]
  %s3 = inlined_call_operand.vmem [shape: bf16[160,150], index: 3, kind: input, shape index: {}]
  %s4 = inlined_call_operand.vmem [shape: bf16[224,64], index: 4, kind: input, shape index: {}]
  %s5 = inlined_call_operand.vmem [shape: f32[96,8], index: 5, kind: input, shape index: {}]
  %s6 = inlined_call_operand.hbm [shape: f32[2,32,150], index: 6, kind: output, shape index: {}]
  %s7 = sld [smem:[#allocation0]]
  $region57: #{music_encoder.1} parent=0
    _
  %s9 = ssub.s32 1, %s7
  %s10 = scalar_select 0, %s9, %s7
  $region1: #{music_encoder.1} parent=0
    #allocation2 [shape = 'u8[65536]{0}', space=vmem, size = 0x10000, scoped, tag = 'output window, operand 0']
    #allocation3 [shape = 's32[2]{0}', space=sflag, size = 0x8, scoped, tag = 'scoped memory for music_encoder.1']
    %11 = vsyncpa [#allocation3], 0
    %s12 = scalar_lea.sflag [#allocation3], 1
    %13 = vsyncpa %s12, 0
    loop: start=0, step=1, limit=4
    $region2: #{music_encoder.1} parent=1 // loop_pre_header
      _
    $region3: #{music_encoder.1} parent=1 // loop_header
      %s15 = sphi 0, %s19
      %p16 = scmp.ge.s32.totalorder %s15, 4
      %s25 = sphi 0, %s27
      %s28 = sphi 0, %s25
      %s29 = sphi 0, %s28
      %s45 = sphi 0, %s29
      %s49 = sphi 0, %s49
      %s51 = sphi 0, %s49
      %s52 = sphi 0, %s51
      %s66 = sphi 0, %s52
      %s70 = sphi 0, %s70
      %s72 = sphi 0, %s70
      %s73 = sphi 0, %s72
      %s87 = sphi 0, %s73
      %s91 = sphi 0, %s91
      %s93 = sphi 0, %s91
      %s94 = sphi 0, %s93
      %s108 = sphi 0, %s94
      %s112 = sphi 0, %s112
      %s114 = sphi 0, %s112
      %s115 = sphi 0, %s114
      %s129 = sphi 0, %s115
      %s133 = sphi 0, %s133
      %s135 = sphi 0, %s133
      %s136 = sphi 0, %s135
      %s150 = sphi 0, %s136
      %s156 = sphi 0, %s158
      %s159 = sphi 0, %s156
      %s160 = sphi 0, %s159
      %s176 = sphi 0, %s160
    $region4: #{music_encoder.1} parent=1 // loop_header_branch
      %18 = sbr.rel (%p16) target = $region8
    $region5: #{music_encoder.1} parent=1 // loop_body
      %s20 = ssub.s32 %s15, 1
      %s21 = ssub.s32 %s15, 2
      %s22 = sadd.s32 %s15, 1
      %s23 = ssub.s32 %s15, %s22
      %p24 = scmp.eq.s32.totalorder %s23, 0
      %s26 = sadd.s32 %s25, 1
      %s27 = scalar_select %p24, %s25, %s26
      %p30 = pneg %p24
      %p31 = scmp.eq.s32.totalorder %s15, 1
      %p32 = por %p30, %p31
      %p33 = scmp.ne.s32.totalorder %s25, %s28
      %p34 = scmp.eq.s32.totalorder %s15, 0
      %p35 = por %p33, %p34
      %p36 = scmp.ne.s32.totalorder %s25, %s28
      %p37 = scmp.eq.s32.totalorder %s20, 1
      %p38 = por %p36, %p37
      %p39 = scmp.ne.s32.totalorder %s28, %s29
      %p40 = scmp.eq.s32.totalorder %s20, 0
      %p41 = por %p39, %p40
      %p42 = scmp.ne.s32.totalorder %s28, %s29
      %p43 = scmp.eq.s32.totalorder %s21, 1
      %p44 = por %p42, %p43
      %p46 = scmp.ne.s32.totalorder %s29, %s45
      %p47 = scmp.eq.s32.totalorder %s21, 0
      %p48 = por %p46, %p47
      %s50 = sadd.s32 %s49, 1
      %p53 = scmp.eq.s32.totalorder %s15, 1
      %p54 = scmp.ne.s32.totalorder %s49, %s51
      %p55 = scmp.eq.s32.totalorder %s15, 0
      %p56 = por %p54, %p55
      %p57 = scmp.ne.s32.totalorder %s49, %s51
      %p58 = scmp.eq.s32.totalorder %s20, 1
      %p59 = por %p57, %p58
      %p60 = scmp.ne.s32.totalorder %s51, %s52
      %p61 = scmp.eq.s32.totalorder %s20, 0
      %p62 = por %p60, %p61
      %p63 = scmp.ne.s32.totalorder %s51, %s52
      %p64 = scmp.eq.s32.totalorder %s21, 1
      %p65 = por %p63, %p64
      %p67 = scmp.ne.s32.totalorder %s52, %s66
      %p68 = scmp.eq.s32.totalorder %s21, 0
      %p69 = por %p67, %p68
      %s71 = sadd.s32 %s70, 1
      %p74 = scmp.eq.s32.totalorder %s15, 1
      %p75 = scmp.ne.s32.totalorder %s70, %s72
      %p76 = scmp.eq.s32.totalorder %s15, 0
      %p77 = por %p75, %p76
      %p78 = scmp.ne.s32.totalorder %s70, %s72
      %p79 = scmp.eq.s32.totalorder %s20, 1
      %p80 = por %p78, %p79
      %p81 = scmp.ne.s32.totalorder %s72, %s73
      %p82 = scmp.eq.s32.totalorder %s20, 0
      %p83 = por %p81, %p82
      %p84 = scmp.ne.s32.totalorder %s72, %s73
      %p85 = scmp.eq.s32.totalorder %s21, 1
      %p86 = por %p84, %p85
      %p88 = scmp.ne.s32.totalorder %s73, %s87
      %p89 = scmp.eq.s32.totalorder %s21, 0
      %p90 = por %p88, %p89
      %s92 = sadd.s32 %s91, 1
      %p95 = scmp.eq.s32.totalorder %s15, 1
      %p96 = scmp.ne.s32.totalorder %s91, %s93
      %p97 = scmp.eq.s32.totalorder %s15, 0
      %p98 = por %p96, %p97
      %p99 = scmp.ne.s32.totalorder %s91, %s93
      %p100 = scmp.eq.s32.totalorder %s20, 1
      %p101 = por %p99, %p100
      %p102 = scmp.ne.s32.totalorder %s93, %s94
      %p103 = scmp.eq.s32.totalorder %s20, 0
      %p104 = por %p102, %p103
      %p105 = scmp.ne.s32.totalorder %s93, %s94
      %p106 = scmp.eq.s32.totalorder %s21, 1
      %p107 = por %p105, %p106
      %p109 = scmp.ne.s32.totalorder %s94, %s108
      %p110 = scmp.eq.s32.totalorder %s21, 0
      %p111 = por %p109, %p110
      %s113 = sadd.s32 %s112, 1
      %p116 = scmp.eq.s32.totalorder %s15, 1
      %p117 = scmp.ne.s32.totalorder %s112, %s114
      %p118 = scmp.eq.s32.totalorder %s15, 0
      %p119 = por %p117, %p118
      %p120 = scmp.ne.s32.totalorder %s112, %s114
      %p121 = scmp.eq.s32.totalorder %s20, 1
      %p122 = por %p120, %p121
      %p123 = scmp.ne.s32.totalorder %s114, %s115
      %p124 = scmp.eq.s32.totalorder %s20, 0
      %p125 = por %p123, %p124
      %p126 = scmp.ne.s32.totalorder %s114, %s115
      %p127 = scmp.eq.s32.totalorder %s21, 1
      %p128 = por %p126, %p127
      %p130 = scmp.ne.s32.totalorder %s115, %s129
      %p131 = scmp.eq.s32.totalorder %s21, 0
      %p132 = por %p130, %p131
      %s134 = sadd.s32 %s133, 1
      %p137 = scmp.eq.s32.totalorder %s15, 1
      %p138 = scmp.ne.s32.totalorder %s133, %s135
      %p139 = scmp.eq.s32.totalorder %s15, 0
      %p140 = por %p138, %p139
      %p141 = scmp.ne.s32.totalorder %s133, %s135
      %p142 = scmp.eq.s32.totalorder %s20, 1
      %p143 = por %p141, %p142
      %p144 = scmp.ne.s32.totalorder %s135, %s136
      %p145 = scmp.eq.s32.totalorder %s20, 0
      %p146 = por %p144, %p145
      %p147 = scmp.ne.s32.totalorder %s135, %s136
      %p148 = scmp.eq.s32.totalorder %s21, 1
      %p149 = por %p147, %p148
      %p151 = scmp.ne.s32.totalorder %s136, %s150
      %p152 = scmp.eq.s32.totalorder %s21, 0
      %p153 = por %p151, %p152
      %s154 = ssub.s32 %s15, %s22
      %p155 = scmp.eq.s32.totalorder %s154, 0
      %s157 = sadd.s32 %s156, 1
      %s158 = scalar_select %p155, %s156, %s157
      %p161 = pneg %p155
      %p162 = scmp.eq.s32.totalorder %s15, 1
      %p163 = por %p161, %p162
      %p164 = scmp.ne.s32.totalorder %s156, %s159
      %p165 = scmp.eq.s32.totalorder %s15, 0
      %p166 = por %p164, %p165
      %p167 = scmp.ne.s32.totalorder %s156, %s159
      %p168 = scmp.eq.s32.totalorder %s20, 1
      %p169 = por %p167, %p168
      %p170 = scmp.ne.s32.totalorder %s159, %s160
      %p171 = scmp.eq.s32.totalorder %s20, 0
      %p172 = por %p170, %p171
      %p173 = scmp.ne.s32.totalorder %s159, %s160
      %p174 = scmp.eq.s32.totalorder %s21, 1
      %p175 = por %p173, %p174
      %p177 = scmp.ne.s32.totalorder %s160, %s176
      %p178 = scmp.eq.s32.totalorder %s21, 0
      %p179 = por %p177, %p178
      %p180 = scmp.le.s32.totalorder 1, %s15
      %p181 = scmp.lt.s32.totalorder %s15, 3
      %p182 = pnand %p180, %p181
      %p183 = pneg %p182
      // Predicated region
      $region9: #{music_encoder.1} parent=5 // pred_check
        _
      $region10: #{music_encoder.1} parent=5 // pred_check_branch
        %185 = sbr.rel (%p182) target = $region12
      $region11: #{music_encoder.1} parent=5 // pred_region
        %s186 = ssub.s32 %s15, 1
        // Predicated region
        $region13: #{music_encoder.1} parent=11 // pred_check
          %p187 = pneg %p62
        $region14: #{music_encoder.1} parent=11 // pred_check_branch
          %189 = sbr.rel (%p187) target = $region16
        $region15: #{music_encoder.1} parent=11 // pred_region
          _
        $region16: #{music_encoder.1} parent=11 // pred_fallthru
          _
        // Predicated region
        $region17: #{music_encoder.1} parent=11 // pred_check
          %p190 = pneg %p83
        $region18: #{music_encoder.1} parent=11 // pred_check_branch
          %192 = sbr.rel (%p190) target = $region20
        $region19: #{music_encoder.1} parent=11 // pred_region
          _
        $region20: #{music_encoder.1} parent=11 // pred_fallthru
          _
        // Predicated region
        $region21: #{music_encoder.1} parent=11 // pred_check
          %p193 = pneg %p104
        $region22: #{music_encoder.1} parent=11 // pred_check_branch
          %195 = sbr.rel (%p193) target = $region24
        $region23: #{music_encoder.1} parent=11 // pred_region
          _
        $region24: #{music_encoder.1} parent=11 // pred_fallthru
          _
        // Predicated region
        $region25: #{music_encoder.1} parent=11 // pred_check
          %p196 = pneg %p125
        $region26: #{music_encoder.1} parent=11 // pred_check_branch
          %198 = sbr.rel (%p196) target = $region28
        $region27: #{music_encoder.1} parent=11 // pred_region
          _
        $region28: #{music_encoder.1} parent=11 // pred_fallthru
          _
        // Predicated region
        $region29: #{music_encoder.1} parent=11 // pred_check
          %p199 = pneg %p146
        $region30: #{music_encoder.1} parent=11 // pred_check_branch
          %201 = sbr.rel (%p199) target = $region32
        $region31: #{music_encoder.1} parent=11 // pred_region
          _
        $region32: #{music_encoder.1} parent=11 // pred_fallthru
          _
      $region12: #{music_encoder.1} parent=5 // pred_fallthru
        _
      %p202 = scmp.lt.s32.totalorder %s15, 2
      // Predicated region
      $region33: #{music_encoder.1} parent=5 // pred_check
        %p203 = pneg %p202
      $region34: #{music_encoder.1} parent=5 // pred_check_branch
        %205 = sbr.rel (%p203) target = $region36
      $region35: #{music_encoder.1} parent=5 // pred_region
        // Predicated region
        $region37: #{music_encoder.1} parent=35 // pred_check
          %p206 = pneg %p35
        $region38: #{music_encoder.1} parent=35 // pred_check_branch
          %208 = sbr.rel (%p206) target = $region40
        $region39: #{music_encoder.1} parent=35 // pred_region
          %p209 = scmp.lt.s32.totalorder %s15, 1
          %s210 = scalar_select %p209, %s15, 1
          %s211 = smul.addr %s210, 8
          %s212 = smul.addr %s211, 8
          %s213 = scalar_lea.vmem %s0, %s212
        $region40: #{music_encoder.1} parent=35 // pred_fallthru
          _
      $region36: #{music_encoder.1} parent=5 // pred_fallthru
        _
      %p214 = scmp.le.s32.totalorder 1, %s15
      %p215 = scmp.lt.s32.totalorder %s15, 3
      %p216 = pnand %p214, %p215
      %p217 = pneg %p216
      // Predicated region
      $region41: #{music_encoder.1} parent=5 // pred_check
        _
      $region42: #{music_encoder.1} parent=5 // pred_check_branch
        %219 = sbr.rel (%p216) target = $region44
      $region43: #{music_encoder.1} parent=5 // pred_region
        %s220 = ssub.s32 %s15, 1
        %p221 = scmp.lt.s32.totalorder %s20, 1
        %s222 = scalar_select %p221, %s20, 1
        %s223 = smul.addr %s222, 8
        %s224 = smul.addr %s223, 8
        %s225 = scalar_lea.vmem %s0, %s224
        %p226 = pneg %p41
        %p227 = pneg %p38
        %p228 = pneg %p62
        %p229 = pneg %p59
        %p230 = pneg %p83
        %p231 = pneg %p80
        %p232 = pneg %p104
        %p233 = pneg %p101
        %p234 = pneg %p125
        %p235 = pneg %p122
        %p236 = pneg %p146
        %p237 = pneg %p143
        %p238 = pneg %p172
        %p239 = pneg %p169
        %s240 = sand.u32 %s159, 1
        %s241 = scalar_lea.sflag [#allocation3], %s240
        %s242 = sand.u32 %s159, 1
        %s243 = smul.addr %s242, 64
        %s244 = scalar_lea.vmem [#allocation2], %s243
        %p245 = scmp.lt.s32.totalorder %s20, 1
        %s246 = scalar_select %p245, %s20, 1
        %s247 = smul.addr %s246, 8
        %s248 = smul.addr %s247, 8
        %s249 = scalar_lea.vmem %s0, %s248
        %v251 = vld [vmem:[%s4] sm:$0xf]
        %v252 = vld [vmem:[%s4 + $0x4] sm:$0xf]
        %v253 = vld [vmem:[%s4 + $0x8] sm:$0xf]
        %v254 = vld [vmem:[%s4 + $0xc] sm:$0xf]
        %v255 = vld [vmem:[%s4 + $0x10] sm:$0xf]
        %v256 = vld [vmem:[%s4 + $0x14] sm:$0xf]
        %v257 = vld [vmem:[%s4 + $0x18] sm:$0xf]
        %v258 = vld [vmem:[%s4 + $0x1c] sm:$0xf]
        %v259 = vld [vmem:[%s4 + $0x20] sm:$0xf]
        %v260 = vld [vmem:[%s4 + $0x24] sm:$0xf]
        %v261 = vld [vmem:[%s4 + $0x28] sm:$0xf]
        %v262 = vld [vmem:[%s4 + $0x2c] sm:$0xf]
        %v263 = vld [vmem:[%s4 + $0x30] sm:$0xf]
        %v264 = vld [vmem:[%s4 + $0x34] sm:$0xf]
        %v265 = vld [vmem:[%s4 + $0x38] sm:$0xf]
        %v266 = vld [vmem:[%s4 + $0x3c] sm:$0xf]
        %v267 = vld [vmem:[%s4 + $0x40] sm:$0xf]
        %v268 = vld [vmem:[%s4 + $0x44] sm:$0xf]
        %v269 = vld [vmem:[%s4 + $0x48] sm:$0xf]
        %v270 = vld [vmem:[%s4 + $0x4c] sm:$0xf]
        %v271 = vld [vmem:[%s4 + $0x50] sm:$0xf]
        %v272 = vld [vmem:[%s4 + $0x54] sm:$0xf]
        %v273 = vld [vmem:[%s4 + $0x58] sm:$0xf]
        %v274 = vld [vmem:[%s4 + $0x5c] sm:$0xf]
        %v275 = vld [vmem:[%s4 + $0x60] sm:$0xf]
        %v276 = vld [vmem:[%s4 + $0x64] sm:$0xf]
        %v277 = vld [vmem:[%s4 + $0x68] sm:$0xf]
        %v278 = vld [vmem:[%s4 + $0x6c] sm:$0xf]
        %v279 = vld [vmem:[%s5] sm:$0xff]
        %v280 = vld [vmem:[%s5 + $0x8] sm:$0xff]
        %v281 = vld [vmem:[%s5 + $0x10] sm:$0xff]
        %v282 = vld [vmem:[%s5 + $0x18] sm:$0xff]
        %v283 = vld [vmem:[%s5 + $0x20] sm:$0xff]
        %v284 = vld [vmem:[%s5 + $0x28] sm:$0xff]
        %v285 = vld [vmem:[%s5 + $0x30] sm:$0xff]
        %v286 = vld [vmem:[%s5 + $0x38] sm:$0xff]
        %v287 = vld [vmem:[%s5 + $0x40] sm:$0xff]
        %v288 = vld [vmem:[%s5 + $0x48] sm:$0xff]
        %v289 = vld [vmem:[%s5 + $0x50] sm:$0xff]
        %v290 = vld [vmem:[%s5 + $0x58] sm:$0xff]
        %v291 = vld [vmem:[%s249] sm:$0xff]
        %v292 = vld [vmem:[%s249 + $0x8] sm:$0xff]
        %v293 = vld [vmem:[%s249 + $0x10] sm:$0xff]
        %v294 = vld [vmem:[%s249 + $0x18] sm:$0xff]
        %v295 = vld [vmem:[%s249 + $0x20] sm:$0xff]
        %v296 = vld [vmem:[%s249 + $0x28] sm:$0xff]
        %v297 = vld [vmem:[%s249 + $0x30] sm:$0xff]
        %v298 = vld [vmem:[%s249 + $0x38] sm:$0xff]
        %v299 = vadd.f32 %v291, %v293
        %v300 = vadd.f32 %v299, %v295
        %v301 = vadd.f32 %v300, %v297
        %v302 = vrot.slane %v301, 4
        %v303 = vadd.f32 %v301, %v302
        %v304 = vrot.slane %v303, 2
        %v305 = vadd.f32 %v303, %v304
        %v306 = vrot.slane %v305, 1
        %v307 = vadd.f32 %v305, %v306
        %vm308 = vcmask 179200
        %v309 = vsel %vm308, %v292, 0.0
        %v310 = vsel %vm308, %v294, 0.0
        %v311 = vadd.f32 %v309, %v310
        %v312 = vsel %vm308, %v296, 0.0
        %v313 = vadd.f32 %v311, %v312
        %v314 = vsel %vm308, %v298, 0.0
        %v315 = vadd.f32 %v313, %v314
        %v316 = vrot.slane %v315, 4
        %v317 = vadd.f32 %v315, %v316
        %v318 = vrot.slane %v317, 2
        %v319 = vadd.f32 %v317, %v318
        %v320 = vrot.slane %v319, 1
        %v321 = vadd.f32 %v319, %v320
        %v322 = vrcp.pop 32.0
        %v323 = vmul.f32 32.0, %v322
        %v324 = vsub.f32 1.0, %v323
        %v325 = vmul.f32 %v322, %v324
        %v326 = vadd.f32 %v322, %v325
        %vm327 = vweird.f32 %v322
        %v328 = vsel %vm327, %v322, %v326
        %v329 = vmul.f32 %v307, %v328
        %v330 = vmul.f32 %v321, %v328
        %v331 = vsub.f32 %v291, %v329
        %v332 = vsub.f32 %v292, %v330
        %v333 = vsub.f32 %v293, %v329
        %v334 = vsub.f32 %v294, %v330
        %v335 = vsub.f32 %v295, %v329
        %v336 = vsub.f32 %v296, %v330
        %v337 = vsub.f32 %v297, %v329
        %v338 = vsub.f32 %v298, %v330
        %v339 = vmul.f32 %v331, %v331
        %v340 = vmul.f32 %v332, %v332
        %v341 = vmul.f32 %v333, %v333
        %v342 = vmul.f32 %v334, %v334
        %v343 = vmul.f32 %v335, %v335
        %v344 = vmul.f32 %v336, %v336
        %v345 = vmul.f32 %v337, %v337
        %v346 = vmul.f32 %v338, %v338
        %v347 = vadd.f32 %v339, %v341
        %v348 = vadd.f32 %v347, %v343
        %v349 = vadd.f32 %v348, %v345
        %v350 = vrot.slane %v349, 4
        %v351 = vadd.f32 %v349, %v350
        %v352 = vrot.slane %v351, 2
        %v353 = vadd.f32 %v351, %v352
        %v354 = vrot.slane %v353, 1
        %v355 = vadd.f32 %v353, %v354
        %v356 = vsel %vm308, %v340, 0.0
        %v357 = vsel %vm308, %v342, 0.0
        %v358 = vadd.f32 %v356, %v357
        %v359 = vsel %vm308, %v344, 0.0
        %v360 = vadd.f32 %v358, %v359
        %v361 = vsel %vm308, %v346, 0.0
        %v362 = vadd.f32 %v360, %v361
        %v363 = vrot.slane %v362, 4
        %v364 = vadd.f32 %v362, %v363
        %v365 = vrot.slane %v364, 2
        %v366 = vadd.f32 %v364, %v365
        %v367 = vrot.slane %v366, 1
        %v368 = vadd.f32 %v366, %v367
        %v369 = vmul.f32 %v355, %v328
        %v370 = vmul.f32 %v368, %v328
        %v371 = vadd.f32 %v369, 1e-05
        %v372 = vadd.f32 %v370, 1e-05
        %v373 = vrsqrt.pop %v371
        %v374 = vmul.f32 %v373, %v371
        %v375 = vmul.f32 %v374, %v373
        %v376 = vmul.f32 0.5, %v375
        %v377 = vsub.f32 1.5, %v376
        %v378 = vmul.f32 %v373, %v377
        %vm379 = vweird.f32 %v371
        %vm380 = vweird.f32 %v373
        %vm381 = vmor %vm379, %vm380
        %v382 = vsel %vm381, %v373, %v378
        %v383 = vrsqrt.pop %v372
        %v384 = vmul.f32 %v383, %v372
        %v385 = vmul.f32 %v384, %v383
        %v386 = vmul.f32 0.5, %v385
        %v387 = vsub.f32 1.5, %v386
        %v388 = vmul.f32 %v383, %v387
        %vm389 = vweird.f32 %v372
        %vm390 = vweird.f32 %v383
        %vm391 = vmor %vm389, %vm390
        %v392 = vsel %vm391, %v383, %v388
        %v393 = vmul.f32 %v331, %v382
        %v394 = vmul.f32 %v332, %v392
        %v395 = vmul.f32 %v333, %v382
        %v396 = vmul.f32 %v334, %v392
        %v397 = vmul.f32 %v335, %v382
        %v398 = vmul.f32 %v336, %v392
        %v399 = vmul.f32 %v337, %v382
        %v400 = vmul.f32 %v338, %v392
        %402 = vset.pattern.permute.xlu0 4
        %403 = vperm.xlu0 %402, %v279
        %v404 = vpop.permute.xlu0 %403
        %407 = vset.pattern.permute.xlu0 4
        %408 = vperm.xlu0 %407, %v280
        %v409 = vpop.permute.xlu0 %408
        %412 = vset.pattern.permute.xlu0 4
        %413 = vperm.xlu0 %412, %v281
        %v414 = vpop.permute.xlu0 %413
        %417 = vset.pattern.permute.xlu0 4
        %418 = vperm.xlu0 %417, %v282
        %v419 = vpop.permute.xlu0 %418
        %v421 = vmul.f32 %v393, %v404
        %v422 = vmul.f32 %v394, %v404
        %v423 = vmul.f32 %v395, %v409
        %v424 = vmul.f32 %v396, %v409
        %v425 = vmul.f32 %v397, %v414
        %v426 = vmul.f32 %v398, %v414
        %v427 = vmul.f32 %v399, %v419
        %v428 = vmul.f32 %v400, %v419
        %429 = vset.pattern.permute.xlu0 5
        %430 = vperm.xlu0 %429, %v279
        %v431 = vpop.permute.xlu0 %430
        %433 = vset.pattern.permute.xlu0 5
        %434 = vperm.xlu0 %433, %v280
        %v435 = vpop.permute.xlu0 %434
        %437 = vset.pattern.permute.xlu0 5
        %438 = vperm.xlu0 %437, %v281
        %v439 = vpop.permute.xlu0 %438
        %441 = vset.pattern.permute.xlu0 5
        %442 = vperm.xlu0 %441, %v282
        %v443 = vpop.permute.xlu0 %442
        %v445 = vadd.f32 %v421, %v431
        %v446 = vadd.f32 %v422, %v431
        %v447 = vadd.f32 %v423, %v435
        %v448 = vadd.f32 %v424, %v435
        %v449 = vadd.f32 %v425, %v439
        %v450 = vadd.f32 %v426, %v439
        %v451 = vadd.f32 %v427, %v443
        %v452 = vadd.f32 %v428, %v443
        %v453 = vpack.c.bf16 %v447, %v445
        %v454 = vpack.c.bf16 %v448, %v446
        %v455 = vpack.c.bf16 %v451, %v449
        %v456 = vpack.c.bf16 %v452, %v450
        %v457 = vld [vmem:[%s1] sm:$0xff]
        %v458 = vld [vmem:[%s1 + $0x8] sm:$0xff]
        %v459 = vld [vmem:[%s1 + $0x10] sm:$0xff]
        %v460 = vld [vmem:[%s1 + $0x18] sm:$0xff]
        %v461 = vld [vmem:[%s1 + $0x20] sm:$0xff]
        %v462 = vld [vmem:[%s1 + $0x28] sm:$0xff]
        %v463 = vld [vmem:[%s1 + $0x30] sm:$0xff]
        %v464 = vld [vmem:[%s1 + $0x38] sm:$0xff]
        %v465 = vld [vmem:[%s1 + $0x40] sm:$0xff]
        %v466 = vld [vmem:[%s1 + $0x48] sm:$0xff]
        %v467 = vld [vmem:[%s1 + $0x50] sm:$0xff]
        %v468 = vld [vmem:[%s1 + $0x58] sm:$0xff]
        %v469 = vld [vmem:[%s1 + $0x60] sm:$0xff]
        %v470 = vld [vmem:[%s1 + $0x68] sm:$0xff]
        %v471 = vld [vmem:[%s1 + $0x70] sm:$0xff]
        %v472 = vld [vmem:[%s1 + $0x78] sm:$0xff]
        %v473 = vld [vmem:[%s1 + $0x80] sm:$0xff]
        %v474 = vld [vmem:[%s1 + $0x88] sm:$0xff]
        %v475 = vld [vmem:[%s1 + $0x90] sm:$0xff]
        %v476 = vld [vmem:[%s1 + $0x98] sm:$0xff]
        %v477 = vld [vmem:[%s1 + $0xa0] sm:$0xff]
        %v478 = vld [vmem:[%s1 + $0xa8] sm:$0xff]
        %v479 = vld [vmem:[%s1 + $0xb0] sm:$0xff]
        %v480 = vld [vmem:[%s1 + $0xb8] sm:$0xff]
        %v481 = vld [vmem:[%s1 + $0xc0] sm:$0xff]
        %v482 = vld [vmem:[%s1 + $0xc8] sm:$0xff]
        %v483 = vld [vmem:[%s1 + $0xd0] sm:$0xff]
        %v484 = vld [vmem:[%s1 + $0xd8] sm:$0xff]
        %v485 = vld [vmem:[%s1 + $0xe0] sm:$0xff]
        %v486 = vld [vmem:[%s1 + $0xe8] sm:$0xff]
        %v487 = vld [vmem:[%s1 + $0xf0] sm:$0xff]
        %v488 = vld [vmem:[%s1 + $0xf8] sm:$0xff]
        %v489 = vld [vmem:[%s1 + $0x100] sm:$0xff]
        %v490 = vld [vmem:[%s1 + $0x108] sm:$0xff]
        %v491 = vld [vmem:[%s1 + $0x110] sm:$0xff]
        %v492 = vld [vmem:[%s1 + $0x118] sm:$0xff]
        %v493 = vld [vmem:[%s1 + $0x120] sm:$0xff]
        %v494 = vld [vmem:[%s1 + $0x128] sm:$0xff]
        %v495 = vld [vmem:[%s1 + $0x130] sm:$0xff]
        %v496 = vld [vmem:[%s1 + $0x138] sm:$0xff]
        %v497 = vld [vmem:[%s1 + $0x140] sm:$0xff]
        %v498 = vld [vmem:[%s1 + $0x148] sm:$0xff]
        %v499 = vld [vmem:[%s1 + $0x150] sm:$0xff]
        %v500 = vld [vmem:[%s1 + $0x158] sm:$0xff]
        %v501 = vld [vmem:[%s1 + $0x160] sm:$0xff]
        %v502 = vld [vmem:[%s1 + $0x168] sm:$0xff]
        %v503 = vld [vmem:[%s1 + $0x170] sm:$0xff]
        %v504 = vld [vmem:[%s1 + $0x178] sm:$0xff]
        %v505 = vld [vmem:[%s1 + $0x180] sm:$0xff]
        %v506 = vld [vmem:[%s1 + $0x188] sm:$0xff]
        %v507 = vld [vmem:[%s1 + $0x190] sm:$0xff]
        %v508 = vld [vmem:[%s1 + $0x198] sm:$0xff]
        %v509 = vld [vmem:[%s1 + $0x1a0] sm:$0xff]
        %v510 = vld [vmem:[%s1 + $0x1a8] sm:$0xff]
        %v511 = vld [vmem:[%s1 + $0x1b0] sm:$0x77]
        %v512 = vld [vmem:[%s1 + $0x1b8] sm:$0x77]
        %v513 = vld [vmem:[%s1 + $0x1c0] sm:$0x77]
        %v514 = vld [vmem:[%s2] ss:$2 sm:$0x3f]
        %v516 = vperm.slane %v514, 0
        %v517 = vperm.slane %v514, 1
        %v518 = vperm.slane %v514, 2
        %v519 = vperm.slane %v514, 3
        %v520 = vperm.slane %v514, 4
        %v521 = vperm.slane %v514, 5
        %v585 = vunpack.c.l.b16 %v457
        %v586 = vunpack.c.h.b16 %v457
        %v587 = vunpack.c.l.b16 %v458
        %v588 = vunpack.c.h.b16 %v458
        %v589 = vunpack.c.l.b16 %v459
        %v590 = vunpack.c.h.b16 %v459
        %v591 = vunpack.c.l.b16 %v460
        %v592 = vunpack.c.h.b16 %v460
        %v593 = vunpack.c.l.b16 %v461
        %v594 = vunpack.c.h.b16 %v461
        %v595 = vunpack.c.l.b16 %v462
        %v596 = vunpack.c.h.b16 %v462
        %v597 = vunpack.c.l.b16 %v463
        %v598 = vunpack.c.h.b16 %v463
        %v599 = vunpack.c.l.b16 %v464
        %v600 = vunpack.c.h.b16 %v464
        %v601 = vunpack.c.l.b16 %v465
        %v602 = vunpack.c.h.b16 %v465
        %v603 = vunpack.c.l.b16 %v466
        %v604 = vunpack.c.h.b16 %v466
        %v605 = vunpack.c.l.b16 %v467
        %v606 = vunpack.c.h.b16 %v467
        %v607 = vunpack.c.l.b16 %v468
        %v608 = vunpack.c.h.b16 %v468
        %v609 = vunpack.c.l.b16 %v469
        %v610 = vunpack.c.h.b16 %v469
        %v611 = vunpack.c.l.b16 %v470
        %v612 = vunpack.c.h.b16 %v470
        %v613 = vunpack.c.l.b16 %v471
        %v614 = vunpack.c.h.b16 %v471
        %v615 = vunpack.c.l.b16 %v472
        %v616 = vunpack.c.h.b16 %v472
        %v617 = vunpack.c.l.b16 %v473
        %v618 = vunpack.c.h.b16 %v473
        %v619 = vunpack.c.l.b16 %v474
        %v620 = vunpack.c.h.b16 %v474
        %v621 = vunpack.c.l.b16 %v475
        %v622 = vunpack.c.h.b16 %v475
        %v623 = vunpack.c.l.b16 %v476
        %v624 = vunpack.c.h.b16 %v476
        %v625 = vunpack.c.l.b16 %v477
        %v626 = vunpack.c.h.b16 %v477
        %v627 = vunpack.c.l.b16 %v478
        %v628 = vunpack.c.h.b16 %v478
        %v629 = vunpack.c.l.b16 %v479
        %v630 = vunpack.c.h.b16 %v479
        %v631 = vunpack.c.l.b16 %v480
        %v632 = vunpack.c.h.b16 %v480
        %v633 = vunpack.c.l.b16 %v481
        %v634 = vunpack.c.h.b16 %v481
        %v635 = vunpack.c.l.b16 %v482
        %v636 = vunpack.c.h.b16 %v482
        %v637 = vunpack.c.l.b16 %v483
        %v638 = vunpack.c.h.b16 %v483
        %v639 = vunpack.c.l.b16 %v484
        %v640 = vunpack.c.h.b16 %v484
        %v641 = vunpack.c.l.b16 %v485
        %v642 = vunpack.c.h.b16 %v485
        %v643 = vunpack.c.l.b16 %v486
        %v644 = vunpack.c.h.b16 %v486
        %v645 = vunpack.c.l.b16 %v487
        %v646 = vunpack.c.h.b16 %v487
        %v647 = vunpack.c.l.b16 %v488
        %v648 = vunpack.c.h.b16 %v488
        %v649 = vunpack.c.l.b16 %v489
        %v650 = vunpack.c.h.b16 %v489
        %v651 = vunpack.c.l.b16 %v490
        %v652 = vunpack.c.h.b16 %v490
        %v653 = vunpack.c.l.b16 %v491
        %v654 = vunpack.c.h.b16 %v491
        %v655 = vunpack.c.l.b16 %v492
        %v656 = vunpack.c.h.b16 %v492
        %v657 = vunpack.c.l.b16 %v493
        %v658 = vunpack.c.h.b16 %v493
        %v659 = vunpack.c.l.b16 %v494
        %v660 = vunpack.c.h.b16 %v494
        %v661 = vunpack.c.l.b16 %v495
        %v662 = vunpack.c.h.b16 %v495
        %v663 = vunpack.c.l.b16 %v496
        %v664 = vunpack.c.h.b16 %v496
        %v665 = vunpack.c.l.b16 %v497
        %v666 = vunpack.c.h.b16 %v497
        %v667 = vunpack.c.l.b16 %v498
        %v668 = vunpack.c.h.b16 %v498
        %v669 = vunpack.c.l.b16 %v499
        %v670 = vunpack.c.h.b16 %v499
        %v671 = vunpack.c.l.b16 %v500
        %v672 = vunpack.c.h.b16 %v500
        %v673 = vunpack.c.l.b16 %v501
        %v674 = vunpack.c.h.b16 %v501
        %v675 = vunpack.c.l.b16 %v502
        %v676 = vunpack.c.h.b16 %v502
        %v677 = vunpack.c.l.b16 %v503
        %v678 = vunpack.c.h.b16 %v503
        %v679 = vunpack.c.l.b16 %v504
        %v680 = vunpack.c.h.b16 %v504
        %v681 = vunpack.c.l.b16 %v505
        %v682 = vunpack.c.h.b16 %v505
        %v683 = vunpack.c.l.b16 %v506
        %v684 = vunpack.c.h.b16 %v506
        %v685 = vunpack.c.l.b16 %v507
        %v686 = vunpack.c.h.b16 %v507
        %v687 = vunpack.c.l.b16 %v508
        %v688 = vunpack.c.h.b16 %v508
        %v689 = vunpack.c.l.b16 %v509
        %v690 = vunpack.c.h.b16 %v509
        %v691 = vunpack.c.l.b16 %v510
        %v692 = vunpack.c.h.b16 %v510
        %v693 = vunpack.c.l.b16 %v511
        %v694 = vunpack.c.h.b16 %v511
        %v695 = vunpack.c.l.b16 %v512
        %v696 = vunpack.c.h.b16 %v512
        %v697 = vunpack.c.l.b16 %v513
        %v698 = vunpack.c.h.b16 %v513
        %v699 = vpack.c.b16 %v591, %v585
        %v700 = vpack.c.b16 %v592, %v586
        %v701 = vpack.c.b16 %v593, %v587
        %v702 = vpack.c.b16 %v594, %v588
        %v703 = vpack.c.b16 %v595, %v589
        %v704 = vpack.c.b16 %v596, %v590
        %v705 = vpack.c.b16 %v603, %v597
        %v706 = vpack.c.b16 %v604, %v598
        %v707 = vpack.c.b16 %v605, %v599
        %v708 = vpack.c.b16 %v606, %v600
        %v709 = vpack.c.b16 %v607, %v601
        %v710 = vpack.c.b16 %v608, %v602
        %v711 = vpack.c.b16 %v615, %v609
        %v712 = vpack.c.b16 %v616, %v610
        %v713 = vpack.c.b16 %v617, %v611
        %v714 = vpack.c.b16 %v618, %v612
        %v715 = vpack.c.b16 %v619, %v613
        %v716 = vpack.c.b16 %v620, %v614
        %v717 = vpack.c.b16 %v627, %v621
        %v718 = vpack.c.b16 %v628, %v622
        %v719 = vpack.c.b16 %v629, %v623
        %v720 = vpack.c.b16 %v630, %v624
        %v721 = vpack.c.b16 %v631, %v625
        %v722 = vpack.c.b16 %v632, %v626
        %v723 = vpack.c.b16 %v639, %v633
        %v724 = vpack.c.b16 %v640, %v634
        %v725 = vpack.c.b16 %v641, %v635
        %v726 = vpack.c.b16 %v642, %v636
        %v727 = vpack.c.b16 %v643, %v637
        %v728 = vpack.c.b16 %v644, %v638
        %v729 = vpack.c.b16 %v651, %v645
        %v730 = vpack.c.b16 %v652, %v646
        %v731 = vpack.c.b16 %v653, %v647
        %v732 = vpack.c.b16 %v654, %v648
        %v733 = vpack.c.b16 %v655, %v649
        %v734 = vpack.c.b16 %v656, %v650
        %v735 = vpack.c.b16 %v663, %v657
        %v736 = vpack.c.b16 %v664, %v658
        %v737 = vpack.c.b16 %v665, %v659
        %v738 = vpack.c.b16 %v666, %v660
        %v739 = vpack.c.b16 %v667, %v661
        %v740 = vpack.c.b16 %v668, %v662
        %v741 = vpack.c.b16 %v675, %v669
        %v742 = vpack.c.b16 %v676, %v670
        %v743 = vpack.c.b16 %v677, %v671
        %v744 = vpack.c.b16 %v678, %v672
        %v745 = vpack.c.b16 %v679, %v673
        %v746 = vpack.c.b16 %v680, %v674
        %v747 = vpack.c.b16 %v687, %v681
        %v748 = vpack.c.b16 %v688, %v682
        %v749 = vpack.c.b16 %v689, %v683
        %v750 = vpack.c.b16 %v690, %v684
        %v751 = vpack.c.b16 %v691, %v685
        %v752 = vpack.c.b16 %v692, %v686
        %v753 = vpack.c.b16 %v693, %v693
        %v754 = vpack.c.b16 %v694, %v694
        %v755 = vpack.c.b16 %v695, %v695
        %v756 = vpack.c.b16 %v696, %v696
        %v757 = vpack.c.b16 %v697, %v697
        %v758 = vpack.c.b16 %v698, %v698
        %v814 = vsel %vm308, %v454, 0
        %v817 = vsel %vm308, %v456, 0
        %vm819 = vcmask 1042432
        %v821 = vsel %vm819, %v753, 0
        %v824 = vsel %vm819, %v754, 0
        %v827 = vsel %vm819, %v755, 0
        %v830 = vsel %vm819, %v756, 0
        %v833 = vsel %vm819, %v757, 0
        %v836 = vsel %vm819, %v758, 0
        %838 = vmatpush.bf16.msra.mxu0 %v741
        %839 = vmatpush.bf16.msra.mxu0 %v735
        %840 = vmatpush.bf16.msra.mxu0 %v729
        %841 = vmatpush.bf16.msra.mxu0 %v723
        %842 = vmatpush.bf16.msra.mxu0 %v717
        %843 = vmatpush.bf16.msra.mxu0 %v711
        %844 = vmatpush.bf16.msra.mxu0 %v705
        %845 = vmatpush.bf16.msra.mxu0 %v699
        %846 = vmatmul.bf16.gmra.mxu0 %v453
        %v847 = vpop.f32.mrf.mxu0
        %v848 = vadd.f32 %v516, %v847
        %v849 = vpop.f32.mrf.mxu0
        %v850 = vadd.f32 %v516, %v849
        %851 = vmatmul.bf16.gmra.mxu0 %v455
        %v852 = vpop.f32.mrf.mxu0
        %v853 = vadd.f32 %v516, %v852
        %v854 = vpop.f32.mrf.mxu0
        %v855 = vadd.f32 %v516, %v854
        %856 = vdwg.mxu0
        %857 = vmatpush.bf16.msra.mxu0 0
        %858 = vmatpush.bf16.msra.mxu0 0
        %859 = vmatpush.bf16.msra.mxu0 0
        %860 = vmatpush.bf16.msra.mxu0 0
        %861 = vmatpush.bf16.msra.mxu0 0
        %862 = vmatpush.bf16.msra.mxu0 0
        %863 = vmatpush.bf16.msra.mxu0 %v821
        %864 = vmatpush.bf16.msra.mxu0 %v747
        %865 = vmatmul.bf16.gmra.mxu0 %v814
        %v866 = vpop.f32.mrf.mxu0
        %v867 = vadd.f32 %v848, %v866
        %v868 = vpop.f32.mrf.mxu0
        %v869 = vadd.f32 %v850, %v868
        %870 = vmatmul.bf16.gmra.mxu0 %v817
        %v871 = vpop.f32.mrf.mxu0
        %v872 = vadd.f32 %v853, %v871
        %v873 = vpop.f32.mrf.mxu0
        %v874 = vadd.f32 %v855, %v873
        %875 = vdwg.mxu0
        %876 = vmatpush.bf16.msra.mxu0 %v742
        %877 = vmatpush.bf16.msra.mxu0 %v736
        %878 = vmatpush.bf16.msra.mxu0 %v730
        %879 = vmatpush.bf16.msra.mxu0 %v724
        %880 = vmatpush.bf16.msra.mxu0 %v718
        %881 = vmatpush.bf16.msra.mxu0 %v712
        %882 = vmatpush.bf16.msra.mxu0 %v706
        %883 = vmatpush.bf16.msra.mxu0 %v700
        %884 = vmatmul.bf16.gmra.mxu0 %v453
        %v885 = vpop.f32.mrf.mxu0
        %v886 = vadd.f32 %v517, %v885
        %v887 = vpop.f32.mrf.mxu0
        %v888 = vadd.f32 %v517, %v887
        %889 = vmatmul.bf16.gmra.mxu0 %v455
        %v890 = vpop.f32.mrf.mxu0
        %v891 = vadd.f32 %v517, %v890
        %v892 = vpop.f32.mrf.mxu0
        %v893 = vadd.f32 %v517, %v892
        %894 = vdwg.mxu0
        %895 = vmatpush.bf16.msra.mxu0 0
        %896 = vmatpush.bf16.msra.mxu0 0
        %897 = vmatpush.bf16.msra.mxu0 0
        %898 = vmatpush.bf16.msra.mxu0 0
        %899 = vmatpush.bf16.msra.mxu0 0
        %900 = vmatpush.bf16.msra.mxu0 0
        %901 = vmatpush.bf16.msra.mxu0 %v824
        %902 = vmatpush.bf16.msra.mxu0 %v748
        %903 = vmatmul.bf16.gmra.mxu0 %v814
        %v904 = vpop.f32.mrf.mxu0
        %v905 = vadd.f32 %v886, %v904
        %v906 = vpop.f32.mrf.mxu0
        %v907 = vadd.f32 %v888, %v906
        %908 = vmatmul.bf16.gmra.mxu0 %v817
        %v909 = vpop.f32.mrf.mxu0
        %v910 = vadd.f32 %v891, %v909
        %v911 = vpop.f32.mrf.mxu0
        %v912 = vadd.f32 %v893, %v911
        %913 = vdwg.mxu0
        %914 = vmatpush.bf16.msra.mxu0 %v743
        %915 = vmatpush.bf16.msra.mxu0 %v737
        %916 = vmatpush.bf16.msra.mxu0 %v731
        %917 = vmatpush.bf16.msra.mxu0 %v725
        %918 = vmatpush.bf16.msra.mxu0 %v719
        %919 = vmatpush.bf16.msra.mxu0 %v713
        %920 = vmatpush.bf16.msra.mxu0 %v707
        %921 = vmatpush.bf16.msra.mxu0 %v701
        %922 = vmatmul.bf16.gmra.mxu0 %v453
        %v923 = vpop.f32.mrf.mxu0
        %v924 = vadd.f32 %v518, %v923
        %v925 = vpop.f32.mrf.mxu0
        %v926 = vadd.f32 %v518, %v925
        %927 = vmatmul.bf16.gmra.mxu0 %v455
        %v928 = vpop.f32.mrf.mxu0
        %v929 = vadd.f32 %v518, %v928
        %v930 = vpop.f32.mrf.mxu0
        %v931 = vadd.f32 %v518, %v930
        %932 = vdwg.mxu0
        %933 = vmatpush.bf16.msra.mxu0 0
        %934 = vmatpush.bf16.msra.mxu0 0
        %935 = vmatpush.bf16.msra.mxu0 0
        %936 = vmatpush.bf16.msra.mxu0 0
        %937 = vmatpush.bf16.msra.mxu0 0
        %938 = vmatpush.bf16.msra.mxu0 0
        %939 = vmatpush.bf16.msra.mxu0 %v827
        %940 = vmatpush.bf16.msra.mxu0 %v749
        %941 = vmatmul.bf16.gmra.mxu0 %v814
        %v942 = vpop.f32.mrf.mxu0
        %v943 = vadd.f32 %v924, %v942
        %v944 = vpop.f32.mrf.mxu0
        %v945 = vadd.f32 %v926, %v944
        %946 = vmatmul.bf16.gmra.mxu0 %v817
        %v947 = vpop.f32.mrf.mxu0
        %v948 = vadd.f32 %v929, %v947
        %v949 = vpop.f32.mrf.mxu0
        %v950 = vadd.f32 %v931, %v949
        %951 = vdwg.mxu0
        %952 = vmatpush.bf16.msra.mxu0 %v744
        %953 = vmatpush.bf16.msra.mxu0 %v738
        %954 = vmatpush.bf16.msra.mxu0 %v732
        %955 = vmatpush.bf16.msra.mxu0 %v726
        %956 = vmatpush.bf16.msra.mxu0 %v720
        %957 = vmatpush.bf16.msra.mxu0 %v714
        %958 = vmatpush.bf16.msra.mxu0 %v708
        %959 = vmatpush.bf16.msra.mxu0 %v702
        %960 = vmatmul.bf16.gmra.mxu0 %v453
        %v961 = vpop.f32.mrf.mxu0
        %v962 = vadd.f32 %v519, %v961
        %v963 = vpop.f32.mrf.mxu0
        %v964 = vadd.f32 %v519, %v963
        %965 = vmatmul.bf16.gmra.mxu0 %v455
        %v966 = vpop.f32.mrf.mxu0
        %v967 = vadd.f32 %v519, %v966
        %v968 = vpop.f32.mrf.mxu0
        %v969 = vadd.f32 %v519, %v968
        %970 = vdwg.mxu0
        %971 = vmatpush.bf16.msra.mxu0 0
        %972 = vmatpush.bf16.msra.mxu0 0
        %973 = vmatpush.bf16.msra.mxu0 0
        %974 = vmatpush.bf16.msra.mxu0 0
        %975 = vmatpush.bf16.msra.mxu0 0
        %976 = vmatpush.bf16.msra.mxu0 0
        %977 = vmatpush.bf16.msra.mxu0 %v830
        %978 = vmatpush.bf16.msra.mxu0 %v750
        %979 = vmatmul.bf16.gmra.mxu0 %v814
        %v980 = vpop.f32.mrf.mxu0
        %v981 = vadd.f32 %v962, %v980
        %v982 = vpop.f32.mrf.mxu0
        %v983 = vadd.f32 %v964, %v982
        %984 = vmatmul.bf16.gmra.mxu0 %v817
        %v985 = vpop.f32.mrf.mxu0
        %v986 = vadd.f32 %v967, %v985
        %v987 = vpop.f32.mrf.mxu0
        %v988 = vadd.f32 %v969, %v987
        %989 = vdwg.mxu0
        %990 = vmatpush.bf16.msra.mxu0 %v745
        %991 = vmatpush.bf16.msra.mxu0 %v739
        %992 = vmatpush.bf16.msra.mxu0 %v733
        %993 = vmatpush.bf16.msra.mxu0 %v727
        %994 = vmatpush.bf16.msra.mxu0 %v721
        %995 = vmatpush.bf16.msra.mxu0 %v715
        %996 = vmatpush.bf16.msra.mxu0 %v709
        %997 = vmatpush.bf16.msra.mxu0 %v703
        %998 = vmatmul.bf16.gmra.mxu0 %v453
        %v999 = vpop.f32.mrf.mxu0
        %v1000 = vadd.f32 %v520, %v999
        %v1001 = vpop.f32.mrf.mxu0
        %v1002 = vadd.f32 %v520, %v1001
        %1003 = vmatmul.bf16.gmra.mxu0 %v455
        %v1004 = vpop.f32.mrf.mxu0
        %v1005 = vadd.f32 %v520, %v1004
        %v1006 = vpop.f32.mrf.mxu0
        %v1007 = vadd.f32 %v520, %v1006
        %1008 = vdwg.mxu0
        %1009 = vmatpush.bf16.msra.mxu0 0
        %1010 = vmatpush.bf16.msra.mxu0 0
        %1011 = vmatpush.bf16.msra.mxu0 0
        %1012 = vmatpush.bf16.msra.mxu0 0
        %1013 = vmatpush.bf16.msra.mxu0 0
        %1014 = vmatpush.bf16.msra.mxu0 0
        %1015 = vmatpush.bf16.msra.mxu0 %v833
        %1016 = vmatpush.bf16.msra.mxu0 %v751
        %1017 = vmatmul.bf16.gmra.mxu0 %v814
        %v1018 = vpop.f32.mrf.mxu0
        %v1019 = vadd.f32 %v1000, %v1018
        %v1020 = vpop.f32.mrf.mxu0
        %v1021 = vadd.f32 %v1002, %v1020
        %1022 = vmatmul.bf16.gmra.mxu0 %v817
        %v1023 = vpop.f32.mrf.mxu0
        %v1024 = vadd.f32 %v1005, %v1023
        %v1025 = vpop.f32.mrf.mxu0
        %v1026 = vadd.f32 %v1007, %v1025
        %1027 = vdwg.mxu0
        %1028 = vmatpush.bf16.msra.mxu0 %v746
        %1029 = vmatpush.bf16.msra.mxu0 %v740
        %1030 = vmatpush.bf16.msra.mxu0 %v734
        %1031 = vmatpush.bf16.msra.mxu0 %v728
        %1032 = vmatpush.bf16.msra.mxu0 %v722
        %1033 = vmatpush.bf16.msra.mxu0 %v716
        %1034 = vmatpush.bf16.msra.mxu0 %v710
        %1035 = vmatpush.bf16.msra.mxu0 %v704
        %1036 = vmatmul.bf16.gmra.mxu0 %v453
        %v1037 = vpop.f32.mrf.mxu0
        %v1038 = vadd.f32 %v521, %v1037
        %v1039 = vpop.f32.mrf.mxu0
        %v1040 = vadd.f32 %v521, %v1039
        %1041 = vmatmul.bf16.gmra.mxu0 %v455
        %v1042 = vpop.f32.mrf.mxu0
        %v1043 = vadd.f32 %v521, %v1042
        %v1044 = vpop.f32.mrf.mxu0
        %v1045 = vadd.f32 %v521, %v1044
        %1046 = vdwg.mxu0
        %1047 = vmatpush.bf16.msra.mxu0 0
        %1048 = vmatpush.bf16.msra.mxu0 0
        %1049 = vmatpush.bf16.msra.mxu0 0
        %1050 = vmatpush.bf16.msra.mxu0 0
        %1051 = vmatpush.bf16.msra.mxu0 0
        %1052 = vmatpush.bf16.msra.mxu0 0
        %1053 = vmatpush.bf16.msra.mxu0 %v836
        %1054 = vmatpush.bf16.msra.mxu0 %v752
        %1055 = vmatmul.bf16.gmra.mxu0 %v814
        %v1056 = vpop.f32.mrf.mxu0
        %v1057 = vadd.f32 %v1038, %v1056
        %v1058 = vpop.f32.mrf.mxu0
        %v1059 = vadd.f32 %v1040, %v1058
        %1060 = vmatmul.bf16.gmra.mxu0 %v817
        %v1061 = vpop.f32.mrf.mxu0
        %v1062 = vadd.f32 %v1043, %v1061
        %v1063 = vpop.f32.mrf.mxu0
        %v1064 = vadd.f32 %v1045, %v1063
        %1065 = vdwg.mxu0
        %v1066 = vpack.c.bf16 %v905, %v867
        %v1067 = vpack.c.bf16 %v907, %v869
        %v1068 = vpack.c.bf16 %v910, %v872
        %v1069 = vpack.c.bf16 %v912, %v874
        %v1070 = vpack.c.bf16 %v981, %v943
        %v1071 = vpack.c.bf16 %v983, %v945
        %v1072 = vpack.c.bf16 %v986, %v948
        %v1073 = vpack.c.bf16 %v988, %v950
        %v1074 = vpack.c.bf16 %v1057, %v1019
        %v1075 = vpack.c.bf16 %v1059, %v1021
        %v1076 = vpack.c.bf16 %v1062, %v1024
        %v1077 = vpack.c.bf16 %v1064, %v1026
        %v1082 = vunpack.c.l.b16 %v1066
        %v1083 = vunpack.c.l.b16 %v1067
        %v1084 = vunpack.c.l.b16 %v1068
        %v1085 = vunpack.c.l.b16 %v1069
        %v1086 = vpack.c.b16 %v1083, %v1082
        %v1087 = vpack.c.b16 %v1085, %v1084
        %v1092 = vunpack.c.l.b16 %v1070
        %v1093 = vunpack.c.l.b16 %v1071
        %v1094 = vunpack.c.l.b16 %v1072
        %v1095 = vunpack.c.l.b16 %v1073
        %v1096 = vpack.c.b16 %v1093, %v1092
        %v1097 = vpack.c.b16 %v1095, %v1094
        %vm1098 = vcmask 261120
        %v1100 = vsel %vm1098, %v1086, 0
        %v1103 = vsel %vm1098, %v1087, 0
        %v1106 = vsel %vm1098, %v1096, 0
        %v1109 = vsel %vm1098, %v1097, 0
        %1111 = vmatpush.bf16.xpose.msra.mxu0 0
        %1112 = vmatpush.bf16.xpose.msra.mxu0 0
        %1113 = vmatpush.bf16.xpose.msra.mxu0 0
        %1114 = vmatpush.bf16.xpose.msra.mxu0 0
        %1115 = vmatpush.bf16.xpose.msra.mxu0 0
        %1116 = vmatpush.bf16.xpose.msra.mxu0 0
        %1117 = vmatpush.bf16.xpose.msra.mxu0 %v1109
        %1118 = vmatpush.bf16.xpose.msra.mxu0 %v1106
        %1119 = vmatmul.bf16.gmra.mxu0 %v1100
        %v1120 = vpop.f32.mrf.mxu0
        %v1121 = vadd.f32 0.0, %v1120
        %v1122 = vpop.f32.mrf.mxu0
        %v1123 = vadd.f32 0.0, %v1122
        %1124 = vmatmul.bf16.gmra.mxu0 %v1103
        %v1125 = vpop.f32.mrf.mxu0
        %v1126 = vadd.f32 0.0, %v1125
        %v1127 = vpop.f32.mrf.mxu0
        %v1128 = vadd.f32 0.0, %v1127
        %1129 = vdwg.mxu0
        %v1130 = vsel %vm1098, %v1121, -inf
        %1131 = vmax.xlane.f32.xlu0 %v1130
        %v1132 = vpop.xlane.xlu0 %1131
        %v1133 = vsel %vm1098, %v1123, -inf
        %1134 = vmax.xlane.f32.xlu0 %v1133
        %v1135 = vpop.xlane.xlu0 %1134
        %v1136 = vsel %vm1098, %v1126, -inf
        %1137 = vmax.xlane.f32.xlu0 %v1136
        %v1138 = vpop.xlane.xlu0 %1137
        %v1139 = vsel %vm1098, %v1128, -inf
        %1140 = vmax.xlane.f32.xlu0 %v1139
        %v1141 = vpop.xlane.xlu0 %1140
        %v1142 = vsub.f32 %v1121, %v1132
        %v1143 = vsub.f32 %v1123, %v1135
        %v1144 = vsub.f32 %v1126, %v1138
        %v1145 = vsub.f32 %v1128, %v1141
        %v1146 = vmul.f32 %v1142, 1.442695
        %v1147 = vpow.pop %v1146
        %v1148 = vmul.f32 %v1143, 1.442695
        %v1149 = vpow.pop %v1148
        %v1150 = vmul.f32 %v1144, 1.442695
        %v1151 = vpow.pop %v1150
        %v1152 = vmul.f32 %v1145, 1.442695
        %v1153 = vpow.pop %v1152
        %v1154 = vsel %vm1098, %v1147, 0.0
        %1155 = vadd.xlane.f32.xlu0 %v1154
        %v1156 = vpop.xlane.xlu0 %1155
        %v1157 = vsel %vm1098, %v1149, 0.0
        %1158 = vadd.xlane.f32.xlu0 %v1157
        %v1159 = vpop.xlane.xlu0 %1158
        %v1160 = vsel %vm1098, %v1151, 0.0
        %1161 = vadd.xlane.f32.xlu0 %v1160
        %v1162 = vpop.xlane.xlu0 %1161
        %v1163 = vsel %vm1098, %v1153, 0.0
        %1164 = vadd.xlane.f32.xlu0 %v1163
        %v1165 = vpop.xlane.xlu0 %1164
        %v1166 = vrcp.pop %v1156
        %v1167 = vrcp.pop %v1159
        %v1168 = vrcp.pop %v1162
        %v1169 = vrcp.pop %v1165
        %v1170 = vmul.f32 %v1147, %v1166
        %v1171 = vmul.f32 %v1149, %v1167
        %v1172 = vmul.f32 %v1151, %v1168
        %v1173 = vmul.f32 %v1153, %v1169
        %v1174 = vpack.c.bf16 %v1171, %v1170
        %v1175 = vpack.c.bf16 %v1173, %v1172
        %v1180 = vunpack.c.l.b16 %v1074
        %v1181 = vunpack.c.l.b16 %v1075
        %v1182 = vunpack.c.l.b16 %v1076
        %v1183 = vunpack.c.l.b16 %v1077
        %v1184 = vpack.c.b16 %v1181, %v1180
        %v1185 = vpack.c.b16 %v1183, %v1182
        %v1189 = vsel %vm1098, %v1174, 0
        %v1192 = vsel %vm1098, %v1175, 0
        %1194 = vmatpush.bf16.msra.mxu0 0
        %1195 = vmatpush.bf16.msra.mxu0 0
        %1196 = vmatpush.bf16.msra.mxu0 0
        %1197 = vmatpush.bf16.msra.mxu0 0
        %1198 = vmatpush.bf16.msra.mxu0 0
        %1199 = vmatpush.bf16.msra.mxu0 0
        %1200 = vmatpush.bf16.msra.mxu0 %v1185
        %1201 = vmatpush.bf16.msra.mxu0 %v1184
        %1202 = vmatmul.bf16.gmra.mxu0 %v1189
        %v1203 = vpop.f32.mrf.mxu0
        %v1204 = vadd.f32 0.0, %v1203
        %v1205 = vpop.f32.mrf.mxu0
        %v1206 = vadd.f32 0.0, %v1205
        %1207 = vmatmul.bf16.gmra.mxu0 %v1192
        %v1208 = vpop.f32.mrf.mxu0
        %v1209 = vadd.f32 0.0, %v1208
        %v1210 = vpop.f32.mrf.mxu0
        %v1211 = vadd.f32 0.0, %v1210
        %1212 = vdwg.mxu0
        %v1213 = vpack.c.bf16 %v1204, %v1204
        %v1214 = vpack.c.bf16 %v1206, %v1206
        %v1215 = vpack.c.bf16 %v1209, %v1209
        %v1216 = vpack.c.bf16 %v1211, %v1211
        %1217 = vrot.lane.b32.xlu0 %v1086, 96
        %v1218 = vpop.permute.xlu0 %1217
        %1219 = vrot.lane.b32.xlu0 %v1087, 96
        %v1220 = vpop.permute.xlu0 %1219
        %1221 = vrot.lane.b32.xlu0 %v1096, 96
        %v1222 = vpop.permute.xlu0 %1221
        %1223 = vrot.lane.b32.xlu0 %v1097, 96
        %v1224 = vpop.permute.xlu0 %1223
        %v1226 = vsel %vm1098, %v1218, 0
        %v1229 = vsel %vm1098, %v1220, 0
        %v1232 = vsel %vm1098, %v1222, 0
        %v1235 = vsel %vm1098, %v1224, 0
        %1237 = vmatpush.bf16.xpose.msra.mxu0 0
        %1238 = vmatpush.bf16.xpose.msra.mxu0 0
        %1239 = vmatpush.bf16.xpose.msra.mxu0 0
        %1240 = vmatpush.bf16.xpose.msra.mxu0 0
        %1241 = vmatpush.bf16.xpose.msra.mxu0 0
        %1242 = vmatpush.bf16.xpose.msra.mxu0 0
        %1243 = vmatpush.bf16.xpose.msra.mxu0 %v1235
        %1244 = vmatpush.bf16.xpose.msra.mxu0 %v1232
        %1245 = vmatmul.bf16.gmra.mxu0 %v1226
        %v1246 = vpop.f32.mrf.mxu0
        %v1247 = vadd.f32 0.0, %v1246
        %v1248 = vpop.f32.mrf.mxu0
        %v1249 = vadd.f32 0.0, %v1248
        %1250 = vmatmul.bf16.gmra.mxu0 %v1229
        %v1251 = vpop.f32.mrf.mxu0
        %v1252 = vadd.f32 0.0, %v1251
        %v1253 = vpop.f32.mrf.mxu0
        %v1254 = vadd.f32 0.0, %v1253
        %1255 = vdwg.mxu0
        %v1256 = vsel %vm1098, %v1247, -inf
        %1257 = vmax.xlane.f32.xlu0 %v1256
        %v1258 = vpop.xlane.xlu0 %1257
        %v1259 = vsel %vm1098, %v1249, -inf
        %1260 = vmax.xlane.f32.xlu0 %v1259
        %v1261 = vpop.xlane.xlu0 %1260
        %v1262 = vsel %vm1098, %v1252, -inf
        %1263 = vmax.xlane.f32.xlu0 %v1262
        %v1264 = vpop.xlane.xlu0 %1263
        %v1265 = vsel %vm1098, %v1254, -inf
        %1266 = vmax.xlane.f32.xlu0 %v1265
        %v1267 = vpop.xlane.xlu0 %1266
        %v1268 = vsub.f32 %v1247, %v1258
        %v1269 = vsub.f32 %v1249, %v1261
        %v1270 = vsub.f32 %v1252, %v1264
        %v1271 = vsub.f32 %v1254, %v1267
        %v1272 = vmul.f32 %v1268, 1.442695
        %v1273 = vpow.pop %v1272
        %v1274 = vmul.f32 %v1269, 1.442695
        %v1275 = vpow.pop %v1274
        %v1276 = vmul.f32 %v1270, 1.442695
        %v1277 = vpow.pop %v1276
        %v1278 = vmul.f32 %v1271, 1.442695
        %v1279 = vpow.pop %v1278
        %v1280 = vsel %vm1098, %v1273, 0.0
        %1281 = vadd.xlane.f32.xlu0 %v1280
        %v1282 = vpop.xlane.xlu0 %1281
        %v1283 = vsel %vm1098, %v1275, 0.0
        %1284 = vadd.xlane.f32.xlu0 %v1283
        %v1285 = vpop.xlane.xlu0 %1284
        %v1286 = vsel %vm1098, %v1277, 0.0
        %1287 = vadd.xlane.f32.xlu0 %v1286
        %v1288 = vpop.xlane.xlu0 %1287
        %v1289 = vsel %vm1098, %v1279, 0.0
        %1290 = vadd.xlane.f32.xlu0 %v1289
        %v1291 = vpop.xlane.xlu0 %1290
        %v1292 = vrcp.pop %v1282
        %v1293 = vrcp.pop %v1285
        %v1294 = vrcp.pop %v1288
        %v1295 = vrcp.pop %v1291
        %v1296 = vmul.f32 %v1273, %v1292
        %v1297 = vmul.f32 %v1275, %v1293
        %v1298 = vmul.f32 %v1277, %v1294
        %v1299 = vmul.f32 %v1279, %v1295
        %v1300 = vpack.c.bf16 %v1297, %v1296
        %v1301 = vpack.c.bf16 %v1299, %v1298
        %1302 = vrot.lane.b32.xlu0 %v1184, 96
        %v1303 = vpop.permute.xlu0 %1302
        %1304 = vrot.lane.b32.xlu0 %v1185, 96
        %v1305 = vpop.permute.xlu0 %1304
        %v1309 = vsel %vm1098, %v1300, 0
        %v1312 = vsel %vm1098, %v1301, 0
        %1314 = vmatpush.bf16.msra.mxu0 0
        %1315 = vmatpush.bf16.msra.mxu0 0
        %1316 = vmatpush.bf16.msra.mxu0 0
        %1317 = vmatpush.bf16.msra.mxu0 0
        %1318 = vmatpush.bf16.msra.mxu0 0
        %1319 = vmatpush.bf16.msra.mxu0 0
        %1320 = vmatpush.bf16.msra.mxu0 %v1305
        %1321 = vmatpush.bf16.msra.mxu0 %v1303
        %1322 = vmatmul.bf16.gmra.mxu0 %v1309
        %v1323 = vpop.f32.mrf.mxu0
        %v1324 = vadd.f32 0.0, %v1323
        %v1325 = vpop.f32.mrf.mxu0
        %v1326 = vadd.f32 0.0, %v1325
        %1327 = vmatmul.bf16.gmra.mxu0 %v1312
        %v1328 = vpop.f32.mrf.mxu0
        %v1329 = vadd.f32 0.0, %v1328
        %v1330 = vpop.f32.mrf.mxu0
        %v1331 = vadd.f32 0.0, %v1330
        %1332 = vdwg.mxu0
        %v1333 = vpack.c.bf16 %v1324, %v1324
        %v1334 = vpack.c.bf16 %v1326, %v1326
        %v1335 = vpack.c.bf16 %v1329, %v1329
        %v1336 = vpack.c.bf16 %v1331, %v1331
        %1337 = vrot.lane.b32.xlu0 %v1086, 64
        %v1338 = vpop.permute.xlu0 %1337
        %1339 = vrot.lane.b32.xlu0 %v1087, 64
        %v1340 = vpop.permute.xlu0 %1339
        %1341 = vrot.lane.b32.xlu0 %v1096, 64
        %v1342 = vpop.permute.xlu0 %1341
        %1343 = vrot.lane.b32.xlu0 %v1097, 64
        %v1344 = vpop.permute.xlu0 %1343
        %v1346 = vsel %vm1098, %v1338, 0
        %v1349 = vsel %vm1098, %v1340, 0
        %v1352 = vsel %vm1098, %v1342, 0
        %v1355 = vsel %vm1098, %v1344, 0
        %1357 = vmatpush.bf16.xpose.msra.mxu0 0
        %1358 = vmatpush.bf16.xpose.msra.mxu0 0
        %1359 = vmatpush.bf16.xpose.msra.mxu0 0
        %1360 = vmatpush.bf16.xpose.msra.mxu0 0
        %1361 = vmatpush.bf16.xpose.msra.mxu0 0
        %1362 = vmatpush.bf16.xpose.msra.mxu0 0
        %1363 = vmatpush.bf16.xpose.msra.mxu0 %v1355
        %1364 = vmatpush.bf16.xpose.msra.mxu0 %v1352
        %1365 = vmatmul.bf16.gmra.mxu0 %v1346
        %v1366 = vpop.f32.mrf.mxu0
        %v1367 = vadd.f32 0.0, %v1366
        %v1368 = vpop.f32.mrf.mxu0
        %v1369 = vadd.f32 0.0, %v1368
        %1370 = vmatmul.bf16.gmra.mxu0 %v1349
        %v1371 = vpop.f32.mrf.mxu0
        %v1372 = vadd.f32 0.0, %v1371
        %v1373 = vpop.f32.mrf.mxu0
        %v1374 = vadd.f32 0.0, %v1373
        %1375 = vdwg.mxu0
        %v1376 = vsel %vm1098, %v1367, -inf
        %1377 = vmax.xlane.f32.xlu0 %v1376
        %v1378 = vpop.xlane.xlu0 %1377
        %v1379 = vsel %vm1098, %v1369, -inf
        %1380 = vmax.xlane.f32.xlu0 %v1379
        %v1381 = vpop.xlane.xlu0 %1380
        %v1382 = vsel %vm1098, %v1372, -inf
        %1383 = vmax.xlane.f32.xlu0 %v1382
        %v1384 = vpop.xlane.xlu0 %1383
        %v1385 = vsel %vm1098, %v1374, -inf
        %1386 = vmax.xlane.f32.xlu0 %v1385
        %v1387 = vpop.xlane.xlu0 %1386
        %v1388 = vsub.f32 %v1367, %v1378
        %v1389 = vsub.f32 %v1369, %v1381
        %v1390 = vsub.f32 %v1372, %v1384
        %v1391 = vsub.f32 %v1374, %v1387
        %v1392 = vmul.f32 %v1388, 1.442695
        %v1393 = vpow.pop %v1392
        %v1394 = vmul.f32 %v1389, 1.442695
        %v1395 = vpow.pop %v1394
        %v1396 = vmul.f32 %v1390, 1.442695
        %v1397 = vpow.pop %v1396
        %v1398 = vmul.f32 %v1391, 1.442695
        %v1399 = vpow.pop %v1398
        %v1400 = vsel %vm1098, %v1393, 0.0
        %1401 = vadd.xlane.f32.xlu0 %v1400
        %v1402 = vpop.xlane.xlu0 %1401
        %v1403 = vsel %vm1098, %v1395, 0.0
        %1404 = vadd.xlane.f32.xlu0 %v1403
        %v1405 = vpop.xlane.xlu0 %1404
        %v1406 = vsel %vm1098, %v1397, 0.0
        %1407 = vadd.xlane.f32.xlu0 %v1406
        %v1408 = vpop.xlane.xlu0 %1407
        %v1409 = vsel %vm1098, %v1399, 0.0
        %1410 = vadd.xlane.f32.xlu0 %v1409
        %v1411 = vpop.xlane.xlu0 %1410
        %v1412 = vrcp.pop %v1402
        %v1413 = vrcp.pop %v1405
        %v1414 = vrcp.pop %v1408
        %v1415 = vrcp.pop %v1411
        %v1416 = vmul.f32 %v1393, %v1412
        %v1417 = vmul.f32 %v1395, %v1413
        %v1418 = vmul.f32 %v1397, %v1414
        %v1419 = vmul.f32 %v1399, %v1415
        %v1420 = vpack.c.bf16 %v1417, %v1416
        %v1421 = vpack.c.bf16 %v1419, %v1418
        %1422 = vrot.lane.b32.xlu0 %v1184, 64
        %v1423 = vpop.permute.xlu0 %1422
        %1424 = vrot.lane.b32.xlu0 %v1185, 64
        %v1425 = vpop.permute.xlu0 %1424
        %v1429 = vsel %vm1098, %v1420, 0
        %v1432 = vsel %vm1098, %v1421, 0
        %1434 = vmatpush.bf16.msra.mxu0 0
        %1435 = vmatpush.bf16.msra.mxu0 0
        %1436 = vmatpush.bf16.msra.mxu0 0
        %1437 = vmatpush.bf16.msra.mxu0 0
        %1438 = vmatpush.bf16.msra.mxu0 0
        %1439 = vmatpush.bf16.msra.mxu0 0
        %1440 = vmatpush.bf16.msra.mxu0 %v1425
        %1441 = vmatpush.bf16.msra.mxu0 %v1423
        %1442 = vmatmul.bf16.gmra.mxu0 %v1429
        %v1443 = vpop.f32.mrf.mxu0
        %v1444 = vadd.f32 0.0, %v1443
        %v1445 = vpop.f32.mrf.mxu0
        %v1446 = vadd.f32 0.0, %v1445
        %1447 = vmatmul.bf16.gmra.mxu0 %v1432
        %v1448 = vpop.f32.mrf.mxu0
        %v1449 = vadd.f32 0.0, %v1448
        %v1450 = vpop.f32.mrf.mxu0
        %v1451 = vadd.f32 0.0, %v1450
        %1452 = vdwg.mxu0
        %v1453 = vpack.c.bf16 %v1444, %v1444
        %v1454 = vpack.c.bf16 %v1446, %v1446
        %v1455 = vpack.c.bf16 %v1449, %v1449
        %v1456 = vpack.c.bf16 %v1451, %v1451
        %1457 = vrot.lane.b32.xlu0 %v1086, 32
        %v1458 = vpop.permute.xlu0 %1457
        %1459 = vrot.lane.b32.xlu0 %v1087, 32
        %v1460 = vpop.permute.xlu0 %1459
        %1461 = vrot.lane.b32.xlu0 %v1096, 32
        %v1462 = vpop.permute.xlu0 %1461
        %1463 = vrot.lane.b32.xlu0 %v1097, 32
        %v1464 = vpop.permute.xlu0 %1463
        %v1466 = vsel %vm1098, %v1458, 0
        %v1469 = vsel %vm1098, %v1460, 0
        %v1472 = vsel %vm1098, %v1462, 0
        %v1475 = vsel %vm1098, %v1464, 0
        %1477 = vmatpush.bf16.xpose.msra.mxu0 0
        %1478 = vmatpush.bf16.xpose.msra.mxu0 0
        %1479 = vmatpush.bf16.xpose.msra.mxu0 0
        %1480 = vmatpush.bf16.xpose.msra.mxu0 0
        %1481 = vmatpush.bf16.xpose.msra.mxu0 0
        %1482 = vmatpush.bf16.xpose.msra.mxu0 0
        %1483 = vmatpush.bf16.xpose.msra.mxu0 %v1475
        %1484 = vmatpush.bf16.xpose.msra.mxu0 %v1472
        %1485 = vmatmul.bf16.gmra.mxu0 %v1466
        %v1486 = vpop.f32.mrf.mxu0
        %v1487 = vadd.f32 0.0, %v1486
        %v1488 = vpop.f32.mrf.mxu0
        %v1489 = vadd.f32 0.0, %v1488
        %1490 = vmatmul.bf16.gmra.mxu0 %v1469
        %v1491 = vpop.f32.mrf.mxu0
        %v1492 = vadd.f32 0.0, %v1491
        %v1493 = vpop.f32.mrf.mxu0
        %v1494 = vadd.f32 0.0, %v1493
        %1495 = vdwg.mxu0
        %v1496 = vsel %vm1098, %v1487, -inf
        %1497 = vmax.xlane.f32.xlu0 %v1496
        %v1498 = vpop.xlane.xlu0 %1497
        %v1499 = vsel %vm1098, %v1489, -inf
        %1500 = vmax.xlane.f32.xlu0 %v1499
        %v1501 = vpop.xlane.xlu0 %1500
        %v1502 = vsel %vm1098, %v1492, -inf
        %1503 = vmax.xlane.f32.xlu0 %v1502
        %v1504 = vpop.xlane.xlu0 %1503
        %v1505 = vsel %vm1098, %v1494, -inf
        %1506 = vmax.xlane.f32.xlu0 %v1505
        %v1507 = vpop.xlane.xlu0 %1506
        %v1508 = vsub.f32 %v1487, %v1498
        %v1509 = vsub.f32 %v1489, %v1501
        %v1510 = vsub.f32 %v1492, %v1504
        %v1511 = vsub.f32 %v1494, %v1507
        %v1512 = vmul.f32 %v1508, 1.442695
        %v1513 = vpow.pop %v1512
        %v1514 = vmul.f32 %v1509, 1.442695
        %v1515 = vpow.pop %v1514
        %v1516 = vmul.f32 %v1510, 1.442695
        %v1517 = vpow.pop %v1516
        %v1518 = vmul.f32 %v1511, 1.442695
        %v1519 = vpow.pop %v1518
        %v1520 = vsel %vm1098, %v1513, 0.0
        %1521 = vadd.xlane.f32.xlu0 %v1520
        %v1522 = vpop.xlane.xlu0 %1521
        %v1523 = vsel %vm1098, %v1515, 0.0
        %1524 = vadd.xlane.f32.xlu0 %v1523
        %v1525 = vpop.xlane.xlu0 %1524
        %v1526 = vsel %vm1098, %v1517, 0.0
        %1527 = vadd.xlane.f32.xlu0 %v1526
        %v1528 = vpop.xlane.xlu0 %1527
        %v1529 = vsel %vm1098, %v1519, 0.0
        %1530 = vadd.xlane.f32.xlu0 %v1529
        %v1531 = vpop.xlane.xlu0 %1530
        %v1532 = vrcp.pop %v1522
        %v1533 = vrcp.pop %v1525
        %v1534 = vrcp.pop %v1528
        %v1535 = vrcp.pop %v1531
        %v1536 = vmul.f32 %v1513, %v1532
        %v1537 = vmul.f32 %v1515, %v1533
        %v1538 = vmul.f32 %v1517, %v1534
        %v1539 = vmul.f32 %v1519, %v1535
        %v1540 = vpack.c.bf16 %v1537, %v1536
        %v1541 = vpack.c.bf16 %v1539, %v1538
        %1542 = vrot.lane.b32.xlu0 %v1184, 32
        %v1543 = vpop.permute.xlu0 %1542
        %1544 = vrot.lane.b32.xlu0 %v1185, 32
        %v1545 = vpop.permute.xlu0 %1544
        %v1549 = vsel %vm1098, %v1540, 0
        %v1552 = vsel %vm1098, %v1541, 0
        %1554 = vmatpush.bf16.msra.mxu0 0
        %1555 = vmatpush.bf16.msra.mxu0 0
        %1556 = vmatpush.bf16.msra.mxu0 0
        %1557 = vmatpush.bf16.msra.mxu0 0
        %1558 = vmatpush.bf16.msra.mxu0 0
        %1559 = vmatpush.bf16.msra.mxu0 0
        %1560 = vmatpush.bf16.msra.mxu0 %v1545
        %1561 = vmatpush.bf16.msra.mxu0 %v1543
        %1562 = vmatmul.bf16.gmra.mxu0 %v1549
        %v1563 = vpop.f32.mrf.mxu0
        %v1564 = vadd.f32 0.0, %v1563
        %v1565 = vpop.f32.mrf.mxu0
        %v1566 = vadd.f32 0.0, %v1565
        %1567 = vmatmul.bf16.gmra.mxu0 %v1552
        %v1568 = vpop.f32.mrf.mxu0
        %v1569 = vadd.f32 0.0, %v1568
        %v1570 = vpop.f32.mrf.mxu0
        %v1571 = vadd.f32 0.0, %v1570
        %1572 = vdwg.mxu0
        %v1573 = vpack.c.bf16 %v1564, %v1564
        %v1574 = vpack.c.bf16 %v1566, %v1566
        %v1575 = vpack.c.bf16 %v1569, %v1569
        %v1576 = vpack.c.bf16 %v1571, %v1571
        %v1577 = vunpack.c.h.b16 %v1066
        %v1578 = vunpack.c.h.b16 %v1067
        %v1579 = vunpack.c.h.b16 %v1068
        %v1580 = vunpack.c.h.b16 %v1069
        %v1581 = vpack.c.b16 %v1578, %v1577
        %v1582 = vpack.c.b16 %v1580, %v1579
        %v1583 = vunpack.c.h.b16 %v1070
        %v1584 = vunpack.c.h.b16 %v1071
        %v1585 = vunpack.c.h.b16 %v1072
        %v1586 = vunpack.c.h.b16 %v1073
        %v1587 = vpack.c.b16 %v1584, %v1583
        %v1588 = vpack.c.b16 %v1586, %v1585
        %v1590 = vsel %vm1098, %v1581, 0
        %v1593 = vsel %vm1098, %v1582, 0
        %v1596 = vsel %vm1098, %v1587, 0
        %v1599 = vsel %vm1098, %v1588, 0
        %1601 = vmatpush.bf16.xpose.msra.mxu0 0
        %1602 = vmatpush.bf16.xpose.msra.mxu0 0
        %1603 = vmatpush.bf16.xpose.msra.mxu0 0
        %1604 = vmatpush.bf16.xpose.msra.mxu0 0
        %1605 = vmatpush.bf16.xpose.msra.mxu0 0
        %1606 = vmatpush.bf16.xpose.msra.mxu0 0
        %1607 = vmatpush.bf16.xpose.msra.mxu0 %v1599
        %1608 = vmatpush.bf16.xpose.msra.mxu0 %v1596
        %1609 = vmatmul.bf16.gmra.mxu0 %v1590
        %v1610 = vpop.f32.mrf.mxu0
        %v1611 = vadd.f32 0.0, %v1610
        %v1612 = vpop.f32.mrf.mxu0
        %v1613 = vadd.f32 0.0, %v1612
        %1614 = vmatmul.bf16.gmra.mxu0 %v1593
        %v1615 = vpop.f32.mrf.mxu0
        %v1616 = vadd.f32 0.0, %v1615
        %v1617 = vpop.f32.mrf.mxu0
        %v1618 = vadd.f32 0.0, %v1617
        %1619 = vdwg.mxu0
        %v1620 = vsel %vm1098, %v1611, -inf
        %1621 = vmax.xlane.f32.xlu0 %v1620
        %v1622 = vpop.xlane.xlu0 %1621
        %v1623 = vsel %vm1098, %v1613, -inf
        %1624 = vmax.xlane.f32.xlu0 %v1623
        %v1625 = vpop.xlane.xlu0 %1624
        %v1626 = vsel %vm1098, %v1616, -inf
        %1627 = vmax.xlane.f32.xlu0 %v1626
        %v1628 = vpop.xlane.xlu0 %1627
        %v1629 = vsel %vm1098, %v1618, -inf
        %1630 = vmax.xlane.f32.xlu0 %v1629
        %v1631 = vpop.xlane.xlu0 %1630
        %v1632 = vsub.f32 %v1611, %v1622
        %v1633 = vsub.f32 %v1613, %v1625
        %v1634 = vsub.f32 %v1616, %v1628
        %v1635 = vsub.f32 %v1618, %v1631
        %v1636 = vmul.f32 %v1632, 1.442695
        %v1637 = vpow.pop %v1636
        %v1638 = vmul.f32 %v1633, 1.442695
        %v1639 = vpow.pop %v1638
        %v1640 = vmul.f32 %v1634, 1.442695
        %v1641 = vpow.pop %v1640
        %v1642 = vmul.f32 %v1635, 1.442695
        %v1643 = vpow.pop %v1642
        %v1644 = vsel %vm1098, %v1637, 0.0
        %1645 = vadd.xlane.f32.xlu0 %v1644
        %v1646 = vpop.xlane.xlu0 %1645
        %v1647 = vsel %vm1098, %v1639, 0.0
        %1648 = vadd.xlane.f32.xlu0 %v1647
        %v1649 = vpop.xlane.xlu0 %1648
        %v1650 = vsel %vm1098, %v1641, 0.0
        %1651 = vadd.xlane.f32.xlu0 %v1650
        %v1652 = vpop.xlane.xlu0 %1651
        %v1653 = vsel %vm1098, %v1643, 0.0
        %1654 = vadd.xlane.f32.xlu0 %v1653
        %v1655 = vpop.xlane.xlu0 %1654
        %v1656 = vrcp.pop %v1646
        %v1657 = vrcp.pop %v1649
        %v1658 = vrcp.pop %v1652
        %v1659 = vrcp.pop %v1655
        %v1660 = vmul.f32 %v1637, %v1656
        %v1661 = vmul.f32 %v1639, %v1657
        %v1662 = vmul.f32 %v1641, %v1658
        %v1663 = vmul.f32 %v1643, %v1659
        %v1664 = vpack.c.bf16 %v1661, %v1660
        %v1665 = vpack.c.bf16 %v1663, %v1662
        %v1666 = vunpack.c.h.b16 %v1074
        %v1667 = vunpack.c.h.b16 %v1075
        %v1668 = vunpack.c.h.b16 %v1076
        %v1669 = vunpack.c.h.b16 %v1077
        %v1670 = vpack.c.b16 %v1667, %v1666
        %v1671 = vpack.c.b16 %v1669, %v1668
        %v1675 = vsel %vm1098, %v1664, 0
        %v1678 = vsel %vm1098, %v1665, 0
        %1680 = vmatpush.bf16.msra.mxu0 0
        %1681 = vmatpush.bf16.msra.mxu0 0
        %1682 = vmatpush.bf16.msra.mxu0 0
        %1683 = vmatpush.bf16.msra.mxu0 0
        %1684 = vmatpush.bf16.msra.mxu0 0
        %1685 = vmatpush.bf16.msra.mxu0 0
        %1686 = vmatpush.bf16.msra.mxu0 %v1671
        %1687 = vmatpush.bf16.msra.mxu0 %v1670
        %1688 = vmatmul.bf16.gmra.mxu0 %v1675
        %v1689 = vpop.f32.mrf.mxu0
        %v1690 = vadd.f32 0.0, %v1689
        %v1691 = vpop.f32.mrf.mxu0
        %v1692 = vadd.f32 0.0, %v1691
        %1693 = vmatmul.bf16.gmra.mxu0 %v1678
        %v1694 = vpop.f32.mrf.mxu0
        %v1695 = vadd.f32 0.0, %v1694
        %v1696 = vpop.f32.mrf.mxu0
        %v1697 = vadd.f32 0.0, %v1696
        %1698 = vdwg.mxu0
        %v1699 = vpack.c.bf16 %v1690, %v1690
        %v1700 = vpack.c.bf16 %v1692, %v1692
        %v1701 = vpack.c.bf16 %v1695, %v1695
        %v1702 = vpack.c.bf16 %v1697, %v1697
        %v1707 = vunpack.c.l.b16 %v1213
        %v1708 = vunpack.c.l.b16 %v1214
        %v1709 = vunpack.c.l.b16 %v1215
        %v1710 = vunpack.c.l.b16 %v1216
        %v1711 = vpack.c.b16 %v1708, %v1707
        %v1712 = vpack.c.b16 %v1710, %v1709
        %v1717 = vunpack.c.l.b16 %v1333
        %v1718 = vunpack.c.l.b16 %v1334
        %v1719 = vunpack.c.l.b16 %v1335
        %v1720 = vunpack.c.l.b16 %v1336
        %v1721 = vpack.c.b16 %v1718, %v1717
        %v1722 = vpack.c.b16 %v1720, %v1719
        %1723 = vrot.lane.b32.xlu0 %v1721, 32
        %v1724 = vpop.permute.xlu0 %1723
        %1725 = vrot.lane.b32.xlu0 %v1722, 32
        %v1726 = vpop.permute.xlu0 %1725
        %v1731 = vunpack.c.l.b16 %v1453
        %v1732 = vunpack.c.l.b16 %v1454
        %v1733 = vunpack.c.l.b16 %v1455
        %v1734 = vunpack.c.l.b16 %v1456
        %v1735 = vpack.c.b16 %v1732, %v1731
        %v1736 = vpack.c.b16 %v1734, %v1733
        %1737 = vrot.lane.b32.xlu0 %v1735, 64
        %v1738 = vpop.permute.xlu0 %1737
        %1739 = vrot.lane.b32.xlu0 %v1736, 64
        %v1740 = vpop.permute.xlu0 %1739
        %v1745 = vunpack.c.l.b16 %v1573
        %v1746 = vunpack.c.l.b16 %v1574
        %v1747 = vunpack.c.l.b16 %v1575
        %v1748 = vunpack.c.l.b16 %v1576
        %v1749 = vpack.c.b16 %v1746, %v1745
        %v1750 = vpack.c.b16 %v1748, %v1747
        %1751 = vrot.lane.b32.xlu0 %v1749, 96
        %v1752 = vpop.permute.xlu0 %1751
        %1753 = vrot.lane.b32.xlu0 %v1750, 96
        %v1754 = vpop.permute.xlu0 %1753
        %v1759 = vunpack.c.l.b16 %v1699
        %v1760 = vunpack.c.l.b16 %v1700
        %v1761 = vunpack.c.l.b16 %v1701
        %v1762 = vunpack.c.l.b16 %v1702
        %v1763 = vpack.c.b16 %v1760, %v1759
        %v1764 = vpack.c.b16 %v1762, %v1761
        %v1767 = vsel %vm1098, %v1711, %v1724
        %v1770 = vsel %vm1098, %v1712, %v1726
        %vm1771 = vcmask 523264
        %v1773 = vsel %vm1771, %v1767, %v1738
        %v1775 = vsel %vm1771, %v1770, %v1740
        %vm1776 = vcmask 785408
        %v1778 = vsel %vm1776, %v1773, %v1752
        %v1781 = vsel %vm1776, %v1775, %v1754
        %v1783 = vld [vmem:[%s3] sm:$0xff]
        %v1784 = vld [vmem:[%s3 + $0x8] sm:$0xff]
        %v1785 = vld [vmem:[%s3 + $0x10] sm:$0xff]
        %v1786 = vld [vmem:[%s3 + $0x18] sm:$0xff]
        %v1787 = vld [vmem:[%s3 + $0x20] sm:$0xff]
        %v1788 = vld [vmem:[%s3 + $0x28] sm:$0xff]
        %v1789 = vld [vmem:[%s3 + $0x30] sm:$0xff]
        %v1790 = vld [vmem:[%s3 + $0x38] sm:$0xff]
        %v1791 = vld [vmem:[%s3 + $0x40] sm:$0xff]
        %v1792 = vld [vmem:[%s3 + $0x48] sm:$0xff]
        %v1793 = vld [vmem:[%s3 + $0x50] sm:$0xff]
        %v1794 = vld [vmem:[%s3 + $0x58] sm:$0xff]
        %v1795 = vld [vmem:[%s3 + $0x60] sm:$0xff]
        %v1796 = vld [vmem:[%s3 + $0x68] sm:$0xff]
        %v1797 = vld [vmem:[%s3 + $0x70] sm:$0xff]
        %v1798 = vld [vmem:[%s3 + $0x78] sm:$0xff]
        %v1799 = vld [vmem:[%s3 + $0x80] sm:$0xff]
        %v1800 = vld [vmem:[%s3 + $0x88] sm:$0xff]
        %v1801 = vld [vmem:[%s3 + $0x90] sm:$0xff]
        %v1802 = vld [vmem:[%s3 + $0x98] sm:$0xff]
        %v1823 = vunpack.c.l.b16 %v1783
        %v1824 = vunpack.c.h.b16 %v1783
        %v1825 = vunpack.c.l.b16 %v1784
        %v1826 = vunpack.c.h.b16 %v1784
        %v1827 = vunpack.c.l.b16 %v1785
        %v1828 = vunpack.c.h.b16 %v1785
        %v1829 = vunpack.c.l.b16 %v1786
        %v1830 = vunpack.c.h.b16 %v1786
        %v1831 = vunpack.c.l.b16 %v1787
        %v1832 = vunpack.c.h.b16 %v1787
        %v1833 = vunpack.c.l.b16 %v1788
        %v1834 = vunpack.c.h.b16 %v1788
        %v1835 = vunpack.c.l.b16 %v1789
        %v1836 = vunpack.c.h.b16 %v1789
        %v1837 = vunpack.c.l.b16 %v1790
        %v1838 = vunpack.c.h.b16 %v1790
        %v1839 = vunpack.c.l.b16 %v1791
        %v1840 = vunpack.c.h.b16 %v1791
        %v1841 = vunpack.c.l.b16 %v1792
        %v1842 = vunpack.c.h.b16 %v1792
        %v1843 = vunpack.c.l.b16 %v1793
        %v1844 = vunpack.c.h.b16 %v1793
        %v1845 = vunpack.c.l.b16 %v1794
        %v1846 = vunpack.c.h.b16 %v1794
        %v1847 = vunpack.c.l.b16 %v1795
        %v1848 = vunpack.c.h.b16 %v1795
        %v1849 = vunpack.c.l.b16 %v1796
        %v1850 = vunpack.c.h.b16 %v1796
        %v1851 = vunpack.c.l.b16 %v1797
        %v1852 = vunpack.c.h.b16 %v1797
        %v1853 = vunpack.c.l.b16 %v1798
        %v1854 = vunpack.c.h.b16 %v1798
        %v1855 = vunpack.c.l.b16 %v1799
        %v1856 = vunpack.c.h.b16 %v1799
        %v1857 = vunpack.c.l.b16 %v1800
        %v1858 = vunpack.c.h.b16 %v1800
        %v1859 = vunpack.c.l.b16 %v1801
        %v1860 = vunpack.c.h.b16 %v1801
        %v1861 = vunpack.c.l.b16 %v1802
        %v1862 = vunpack.c.h.b16 %v1802
        %v1863 = vpack.c.b16 %v1825, %v1823
        %v1864 = vpack.c.b16 %v1826, %v1824
        %v1865 = vpack.c.b16 %v1829, %v1827
        %v1866 = vpack.c.b16 %v1830, %v1828
        %v1867 = vpack.c.b16 %v1833, %v1831
        %v1868 = vpack.c.b16 %v1834, %v1832
        %v1869 = vpack.c.b16 %v1837, %v1835
        %v1870 = vpack.c.b16 %v1838, %v1836
        %v1871 = vpack.c.b16 %v1841, %v1839
        %v1872 = vpack.c.b16 %v1842, %v1840
        %v1873 = vpack.c.b16 %v1845, %v1843
        %v1874 = vpack.c.b16 %v1846, %v1844
        %v1875 = vpack.c.b16 %v1849, %v1847
        %v1876 = vpack.c.b16 %v1850, %v1848
        %v1877 = vpack.c.b16 %v1853, %v1851
        %v1878 = vpack.c.b16 %v1854, %v1852
        %v1879 = vpack.c.b16 %v1857, %v1855
        %v1880 = vpack.c.b16 %v1858, %v1856
        %v1881 = vpack.c.b16 %v1861, %v1859
        %v1882 = vpack.c.b16 %v1862, %v1860
        %v1904 = vsel %vm1098, %v1763, 0
        %v1907 = vsel %vm1098, %v1764, 0
        %1909 = vmatpush.bf16.msra.mxu0 %v1877
        %1910 = vmatpush.bf16.msra.mxu0 %v1875
        %1911 = vmatpush.bf16.msra.mxu0 %v1873
        %1912 = vmatpush.bf16.msra.mxu0 %v1871
        %1913 = vmatpush.bf16.msra.mxu0 %v1869
        %1914 = vmatpush.bf16.msra.mxu0 %v1867
        %1915 = vmatpush.bf16.msra.mxu0 %v1865
        %1916 = vmatpush.bf16.msra.mxu0 %v1863
        %1917 = vmatmul.bf16.gmra.mxu0 %v1778
        %v1918 = vpop.f32.mrf.mxu0
        %v1919 = vadd.f32 0.0, %v1918
        %v1920 = vpop.f32.mrf.mxu0
        %v1921 = vadd.f32 0.0, %v1920
        %1922 = vmatmul.bf16.gmra.mxu0 %v1781
        %v1923 = vpop.f32.mrf.mxu0
        %v1924 = vadd.f32 0.0, %v1923
        %v1925 = vpop.f32.mrf.mxu0
        %v1926 = vadd.f32 0.0, %v1925
        %1927 = vdwg.mxu0
        %1928 = vmatpush.bf16.msra.mxu0 0
        %1929 = vmatpush.bf16.msra.mxu0 0
        %1930 = vmatpush.bf16.msra.mxu0 0
        %1931 = vmatpush.bf16.msra.mxu0 0
        %1932 = vmatpush.bf16.msra.mxu0 0
        %1933 = vmatpush.bf16.msra.mxu0 0
        %1934 = vmatpush.bf16.msra.mxu0 %v1881
        %1935 = vmatpush.bf16.msra.mxu0 %v1879
        %1936 = vmatmul.bf16.gmra.mxu0 %v1904
        %v1937 = vpop.f32.mrf.mxu0
        %v1938 = vadd.f32 %v1919, %v1937
        %v1939 = vpop.f32.mrf.mxu0
        %v1940 = vadd.f32 %v1921, %v1939
        %1941 = vmatmul.bf16.gmra.mxu0 %v1907
        %v1942 = vpop.f32.mrf.mxu0
        %v1943 = vadd.f32 %v1924, %v1942
        %v1944 = vpop.f32.mrf.mxu0
        %v1945 = vadd.f32 %v1926, %v1944
        %1946 = vdwg.mxu0
        %1947 = vmatpush.bf16.msra.mxu0 %v1878
        %1948 = vmatpush.bf16.msra.mxu0 %v1876
        %1949 = vmatpush.bf16.msra.mxu0 %v1874
        %1950 = vmatpush.bf16.msra.mxu0 %v1872
        %1951 = vmatpush.bf16.msra.mxu0 %v1870
        %1952 = vmatpush.bf16.msra.mxu0 %v1868
        %1953 = vmatpush.bf16.msra.mxu0 %v1866
        %1954 = vmatpush.bf16.msra.mxu0 %v1864
        %1955 = vmatmul.bf16.gmra.mxu0 %v1778
        %v1956 = vpop.f32.mrf.mxu0
        %v1957 = vadd.f32 0.0, %v1956
        %v1958 = vpop.f32.mrf.mxu0
        %v1959 = vadd.f32 0.0, %v1958
        %1960 = vmatmul.bf16.gmra.mxu0 %v1781
        %v1961 = vpop.f32.mrf.mxu0
        %v1962 = vadd.f32 0.0, %v1961
        %v1963 = vpop.f32.mrf.mxu0
        %v1964 = vadd.f32 0.0, %v1963
        %1965 = vdwg.mxu0
        %1966 = vmatpush.bf16.msra.mxu0 0
        %1967 = vmatpush.bf16.msra.mxu0 0
        %1968 = vmatpush.bf16.msra.mxu0 0
        %1969 = vmatpush.bf16.msra.mxu0 0
        %1970 = vmatpush.bf16.msra.mxu0 0
        %1971 = vmatpush.bf16.msra.mxu0 0
        %1972 = vmatpush.bf16.msra.mxu0 %v1882
        %1973 = vmatpush.bf16.msra.mxu0 %v1880
        %1974 = vmatmul.bf16.gmra.mxu0 %v1904
        %v1975 = vpop.f32.mrf.mxu0
        %v1976 = vadd.f32 %v1957, %v1975
        %v1977 = vpop.f32.mrf.mxu0
        %v1978 = vadd.f32 %v1959, %v1977
        %1979 = vmatmul.bf16.gmra.mxu0 %v1907
        %v1980 = vpop.f32.mrf.mxu0
        %v1981 = vadd.f32 %v1962, %v1980
        %v1982 = vpop.f32.mrf.mxu0
        %v1983 = vadd.f32 %v1964, %v1982
        %1984 = vdwg.mxu0
        %v1985 = vadd.f32 %v291, %v1938
        %v1986 = vadd.f32 %v292, %v1976
        %v1987 = vadd.f32 %v293, %v1940
        %v1988 = vadd.f32 %v294, %v1978
        %v1989 = vadd.f32 %v295, %v1943
        %v1990 = vadd.f32 %v296, %v1981
        %v1991 = vadd.f32 %v297, %v1945
        %v1992 = vadd.f32 %v298, %v1983
        %s1993 = scalar_lea.vmem %s2, 1
        %v1994 = vld [vmem:[%s1993] ss:$2 sm:$0x3]
        %v1996 = vperm.slane %v1994, 0
        %v1997 = vperm.slane %v1994, 1
        %v2000 = vadd.f32 %v1985, %v1996
        %v2001 = vadd.f32 %v1986, %v1997
        %v2002 = vadd.f32 %v1987, %v1996
        %v2003 = vadd.f32 %v1988, %v1997
        %v2004 = vadd.f32 %v1989, %v1996
        %v2005 = vadd.f32 %v1990, %v1997
        %v2006 = vadd.f32 %v1991, %v1996
        %v2007 = vadd.f32 %v1992, %v1997
        %v2008 = vadd.f32 %v2000, %v2002
        %v2009 = vadd.f32 %v2008, %v2004
        %v2010 = vadd.f32 %v2009, %v2006
        %v2011 = vrot.slane %v2010, 4
        %v2012 = vadd.f32 %v2010, %v2011
        %v2013 = vrot.slane %v2012, 2
        %v2014 = vadd.f32 %v2012, %v2013
        %v2015 = vrot.slane %v2014, 1
        %v2016 = vadd.f32 %v2014, %v2015
        %v2017 = vsel %vm308, %v2001, 0.0
        %v2018 = vsel %vm308, %v2003, 0.0
        %v2019 = vadd.f32 %v2017, %v2018
        %v2020 = vsel %vm308, %v2005, 0.0
        %v2021 = vadd.f32 %v2019, %v2020
        %v2022 = vsel %vm308, %v2007, 0.0
        %v2023 = vadd.f32 %v2021, %v2022
        %v2024 = vrot.slane %v2023, 4
        %v2025 = vadd.f32 %v2023, %v2024
        %v2026 = vrot.slane %v2025, 2
        %v2027 = vadd.f32 %v2025, %v2026
        %v2028 = vrot.slane %v2027, 1
        %v2029 = vadd.f32 %v2027, %v2028
        %v2030 = vmul.f32 %v2016, %v328
        %v2031 = vmul.f32 %v2029, %v328
        %v2032 = vsub.f32 %v2000, %v2030
        %v2033 = vsub.f32 %v2001, %v2031
        %v2034 = vsub.f32 %v2002, %v2030
        %v2035 = vsub.f32 %v2003, %v2031
        %v2036 = vsub.f32 %v2004, %v2030
        %v2037 = vsub.f32 %v2005, %v2031
        %v2038 = vsub.f32 %v2006, %v2030
        %v2039 = vsub.f32 %v2007, %v2031
        %v2040 = vmul.f32 %v2032, %v2032
        %v2041 = vmul.f32 %v2033, %v2033
        %v2042 = vmul.f32 %v2034, %v2034
        %v2043 = vmul.f32 %v2035, %v2035
        %v2044 = vmul.f32 %v2036, %v2036
        %v2045 = vmul.f32 %v2037, %v2037
        %v2046 = vmul.f32 %v2038, %v2038
        %v2047 = vmul.f32 %v2039, %v2039
        %v2048 = vadd.f32 %v2040, %v2042
        %v2049 = vadd.f32 %v2048, %v2044
        %v2050 = vadd.f32 %v2049, %v2046
        %v2051 = vrot.slane %v2050, 4
        %v2052 = vadd.f32 %v2050, %v2051
        %v2053 = vrot.slane %v2052, 2
        %v2054 = vadd.f32 %v2052, %v2053
        %v2055 = vrot.slane %v2054, 1
        %v2056 = vadd.f32 %v2054, %v2055
        %v2057 = vsel %vm308, %v2041, 0.0
        %v2058 = vsel %vm308, %v2043, 0.0
        %v2059 = vadd.f32 %v2057, %v2058
        %v2060 = vsel %vm308, %v2045, 0.0
        %v2061 = vadd.f32 %v2059, %v2060
        %v2062 = vsel %vm308, %v2047, 0.0
        %v2063 = vadd.f32 %v2061, %v2062
        %v2064 = vrot.slane %v2063, 4
        %v2065 = vadd.f32 %v2063, %v2064
        %v2066 = vrot.slane %v2065, 2
        %v2067 = vadd.f32 %v2065, %v2066
        %v2068 = vrot.slane %v2067, 1
        %v2069 = vadd.f32 %v2067, %v2068
        %v2070 = vmul.f32 %v2056, %v328
        %v2071 = vmul.f32 %v2069, %v328
        %v2072 = vadd.f32 %v2070, 1e-05
        %v2073 = vadd.f32 %v2071, 1e-05
        %v2074 = vrsqrt.pop %v2072
        %v2075 = vmul.f32 %v2074, %v2072
        %v2076 = vmul.f32 %v2075, %v2074
        %v2077 = vmul.f32 0.5, %v2076
        %v2078 = vsub.f32 1.5, %v2077
        %v2079 = vmul.f32 %v2074, %v2078
        %vm2080 = vweird.f32 %v2072
        %vm2081 = vweird.f32 %v2074
        %vm2082 = vmor %vm2080, %vm2081
        %v2083 = vsel %vm2082, %v2074, %v2079
        %v2084 = vrsqrt.pop %v2073
        %v2085 = vmul.f32 %v2084, %v2073
        %v2086 = vmul.f32 %v2085, %v2084
        %v2087 = vmul.f32 0.5, %v2086
        %v2088 = vsub.f32 1.5, %v2087
        %v2089 = vmul.f32 %v2084, %v2088
        %vm2090 = vweird.f32 %v2073
        %vm2091 = vweird.f32 %v2084
        %vm2092 = vmor %vm2090, %vm2091
        %v2093 = vsel %vm2092, %v2084, %v2089
        %v2094 = vmul.f32 %v2032, %v2083
        %v2095 = vmul.f32 %v2033, %v2093
        %v2096 = vmul.f32 %v2034, %v2083
        %v2097 = vmul.f32 %v2035, %v2093
        %v2098 = vmul.f32 %v2036, %v2083
        %v2099 = vmul.f32 %v2037, %v2093
        %v2100 = vmul.f32 %v2038, %v2083
        %v2101 = vmul.f32 %v2039, %v2093
        %v2102 = vpack.c.bf16 %v2096, %v2094
        %v2103 = vpack.c.bf16 %v2097, %v2095
        %v2104 = vpack.c.bf16 %v2100, %v2098
        %v2105 = vpack.c.bf16 %v2101, %v2099
        %2106 = vset.pattern.permute.xlu0 0
        %2107 = vperm.xlu0 %2106, %v279
        %v2108 = vpop.permute.xlu0 %2107
        %2110 = vset.pattern.permute.xlu0 0
        %2111 = vperm.xlu0 %2110, %v280
        %v2112 = vpop.permute.xlu0 %2111
        %2114 = vset.pattern.permute.xlu0 0
        %2115 = vperm.xlu0 %2114, %v281
        %v2116 = vpop.permute.xlu0 %2115
        %2118 = vset.pattern.permute.xlu0 0
        %2119 = vperm.xlu0 %2118, %v282
        %v2120 = vpop.permute.xlu0 %2119
        %2123 = vset.pattern.permute.xlu0 0
        %2124 = vperm.xlu0 %2123, %v283
        %v2125 = vpop.permute.xlu0 %2124
        %2128 = vset.pattern.permute.xlu0 0
        %2129 = vperm.xlu0 %2128, %v284
        %v2130 = vpop.permute.xlu0 %2129
        %2133 = vset.pattern.permute.xlu0 0
        %2134 = vperm.xlu0 %2133, %v285
        %v2135 = vpop.permute.xlu0 %2134
        %2138 = vset.pattern.permute.xlu0 0
        %2139 = vperm.xlu0 %2138, %v286
        %v2140 = vpop.permute.xlu0 %2139
        %2143 = vset.pattern.permute.xlu0 0
        %2144 = vperm.xlu0 %2143, %v287
        %v2145 = vpop.permute.xlu0 %2144
        %2148 = vset.pattern.permute.xlu0 0
        %2149 = vperm.xlu0 %2148, %v288
        %v2150 = vpop.permute.xlu0 %2149
        %2153 = vset.pattern.permute.xlu0 0
        %2154 = vperm.xlu0 %2153, %v289
        %v2155 = vpop.permute.xlu0 %2154
        %2158 = vset.pattern.permute.xlu0 0
        %2159 = vperm.xlu0 %2158, %v290
        %v2160 = vpop.permute.xlu0 %2159
        %v2174 = vunpack.c.l.b16 %v251
        %v2175 = vunpack.c.l.b16 %v252
        %v2176 = vunpack.c.l.b16 %v253
        %v2177 = vunpack.c.l.b16 %v254
        %v2178 = vunpack.c.l.b16 %v255
        %v2179 = vunpack.c.l.b16 %v256
        %v2180 = vunpack.c.l.b16 %v257
        %v2181 = vunpack.c.l.b16 %v258
        %v2182 = vunpack.c.l.b16 %v259
        %v2183 = vunpack.c.l.b16 %v260
        %v2184 = vunpack.c.l.b16 %v261
        %v2185 = vunpack.c.l.b16 %v262
        %v2186 = vpack.c.b16 %v2175, %v2174
        %v2187 = vpack.c.b16 %v2177, %v2176
        %v2188 = vpack.c.b16 %v2179, %v2178
        %v2189 = vpack.c.b16 %v2181, %v2180
        %v2190 = vpack.c.b16 %v2183, %v2182
        %v2191 = vpack.c.b16 %v2185, %v2184
        %v2193 = vsel %vm1098, %v2186, 0
        %v2196 = vsel %vm1098, %v2187, 0
        %v2199 = vsel %vm1098, %v2188, 0
        %v2202 = vsel %vm1098, %v2189, 0
        %v2205 = vsel %vm1098, %v2190, 0
        %v2208 = vsel %vm1098, %v2191, 0
        %2210 = vmatpush.bf16.msra.mxu0 0
        %2211 = vmatpush.bf16.msra.mxu0 0
        %2212 = vmatpush.bf16.msra.mxu0 0
        %2213 = vmatpush.bf16.msra.mxu0 0
        %2214 = vmatpush.bf16.msra.mxu0 0
        %2215 = vmatpush.bf16.msra.mxu0 0
        %2216 = vmatpush.bf16.msra.mxu0 %v2104
        %2217 = vmatpush.bf16.msra.mxu0 %v2102
        %2218 = vmatmul.bf16.gmra.mxu0 %v2193
        %v2219 = vpop.f32.mrf.mxu0
        %v2220 = vadd.f32 %v2108, %v2219
        %v2221 = vpop.f32.mrf.mxu0
        %v2222 = vadd.f32 %v2112, %v2221
        %2223 = vmatmul.bf16.gmra.mxu0 %v2196
        %v2224 = vpop.f32.mrf.mxu0
        %v2225 = vadd.f32 %v2116, %v2224
        %v2226 = vpop.f32.mrf.mxu0
        %v2227 = vadd.f32 %v2120, %v2226
        %2228 = vmatmul.bf16.gmra.mxu0 %v2199
        %v2229 = vpop.f32.mrf.mxu0
        %v2230 = vadd.f32 %v2125, %v2229
        %v2231 = vpop.f32.mrf.mxu0
        %v2232 = vadd.f32 %v2130, %v2231
        %2233 = vmatmul.bf16.gmra.mxu0 %v2202
        %v2234 = vpop.f32.mrf.mxu0
        %v2235 = vadd.f32 %v2135, %v2234
        %v2236 = vpop.f32.mrf.mxu0
        %v2237 = vadd.f32 %v2140, %v2236
        %2238 = vmatmul.bf16.gmra.mxu0 %v2205
        %v2239 = vpop.f32.mrf.mxu0
        %v2240 = vadd.f32 %v2145, %v2239
        %v2241 = vpop.f32.mrf.mxu0
        %v2242 = vadd.f32 %v2150, %v2241
        %2243 = vmatmul.bf16.gmra.mxu0 %v2208
        %v2244 = vpop.f32.mrf.mxu0
        %v2245 = vadd.f32 %v2155, %v2244
        %v2246 = vpop.f32.mrf.mxu0
        %v2247 = vadd.f32 %v2160, %v2246
        %2248 = vdwg.mxu0
        %2249 = vmatpush.bf16.msra.mxu0 0
        %2250 = vmatpush.bf16.msra.mxu0 0
        %2251 = vmatpush.bf16.msra.mxu0 0
        %2252 = vmatpush.bf16.msra.mxu0 0
        %2253 = vmatpush.bf16.msra.mxu0 0
        %2254 = vmatpush.bf16.msra.mxu0 0
        %2255 = vmatpush.bf16.msra.mxu0 %v2105
        %2256 = vmatpush.bf16.msra.mxu0 %v2103
        %2257 = vmatmul.bf16.gmra.mxu0 %v2193
        %v2258 = vpop.f32.mrf.mxu0
        %v2259 = vadd.f32 %v2108, %v2258
        %v2260 = vpop.f32.mrf.mxu0
        %v2261 = vadd.f32 %v2112, %v2260
        %2262 = vmatmul.bf16.gmra.mxu0 %v2196
        %v2263 = vpop.f32.mrf.mxu0
        %v2264 = vadd.f32 %v2116, %v2263
        %v2265 = vpop.f32.mrf.mxu0
        %v2266 = vadd.f32 %v2120, %v2265
        %2267 = vmatmul.bf16.gmra.mxu0 %v2199
        %v2268 = vpop.f32.mrf.mxu0
        %v2269 = vadd.f32 %v2125, %v2268
        %v2270 = vpop.f32.mrf.mxu0
        %v2271 = vadd.f32 %v2130, %v2270
        %2272 = vmatmul.bf16.gmra.mxu0 %v2202
        %v2273 = vpop.f32.mrf.mxu0
        %v2274 = vadd.f32 %v2135, %v2273
        %v2275 = vpop.f32.mrf.mxu0
        %v2276 = vadd.f32 %v2140, %v2275
        %2277 = vmatmul.bf16.gmra.mxu0 %v2205
        %v2278 = vpop.f32.mrf.mxu0
        %v2279 = vadd.f32 %v2145, %v2278
        %v2280 = vpop.f32.mrf.mxu0
        %v2281 = vadd.f32 %v2150, %v2280
        %2282 = vmatmul.bf16.gmra.mxu0 %v2208
        %v2283 = vpop.f32.mrf.mxu0
        %v2284 = vadd.f32 %v2155, %v2283
        %v2285 = vpop.f32.mrf.mxu0
        %v2286 = vadd.f32 %v2160, %v2285
        %2287 = vdwg.mxu0
        %v2288 = vpack.c.bf16 %v2259, %v2220
        %v2289 = vpack.c.bf16 %v2261, %v2222
        %v2290 = vpack.c.bf16 %v2264, %v2225
        %v2291 = vpack.c.bf16 %v2266, %v2227
        %v2292 = vpack.c.bf16 %v2269, %v2230
        %v2293 = vpack.c.bf16 %v2271, %v2232
        %v2294 = vpack.c.bf16 %v2274, %v2235
        %v2295 = vpack.c.bf16 %v2276, %v2237
        %v2296 = vpack.c.bf16 %v2279, %v2240
        %v2297 = vpack.c.bf16 %v2281, %v2242
        %v2298 = vpack.c.bf16 %v2284, %v2245
        %v2299 = vpack.c.bf16 %v2286, %v2247
        %v2301 = vunpack.c.l.b16 %v2288
        %v2302 = vunpack.c.h.b16 %v2288
        %v2303 = vpack.c.b16 %v2301, %v2301
        %v2304 = vpack.c.b16 %v2302, %v2302
        %2307 = vxpose.binary.xlu0.c.b16.start [1/16] %v2304, %v2303, 128
        %2308 = vxpose.binary.xlu0.c.b16.cont [2/16] 0, 0, 128
        %2309 = vxpose.binary.xlu0.c.b16.cont [3/16] 0, 0, 128
        %2310 = vxpose.binary.xlu0.c.b16.cont [4/16] 0, 0, 128
        %2311 = vxpose.binary.xlu0.c.b16.cont [5/16] 0, 0, 128
        %2312 = vxpose.binary.xlu0.c.b16.cont [6/16] 0, 0, 128
        %2313 = vxpose.binary.xlu0.c.b16.cont [7/16] 0, 0, 128
        %2314 = vxpose.binary.xlu0.c.b16.end [8/16] 0, 0, 128
        %v2315 = vpop.trf.xlu0
        %v2316 = vpop.trf.xlu0
        %v2317 = vpop.trf.xlu0
        %v2318 = vpop.trf.xlu0
        %v2319 = vpop.trf.xlu0
        %v2320 = vpop.trf.xlu0
        %v2321 = vpop.trf.xlu0
        %v2322 = vpop.trf.xlu0
        %v2323 = vpop.trf.xlu0
        %v2324 = vpop.trf.xlu0
        %v2325 = vpop.trf.xlu0
        %v2326 = vpop.trf.xlu0
        %v2327 = vpop.trf.xlu0
        %v2328 = vpop.trf.xlu0
        %v2329 = vpop.trf.xlu0
        %v2330 = vpop.trf.xlu0
        %v2332 = vunpack.c.l.b16 %v2292
        %v2333 = vunpack.c.h.b16 %v2292
        %v2334 = vpack.c.b16 %v2332, %v2332
        %v2335 = vpack.c.b16 %v2333, %v2333
        %vm2336 = vcmask 64512
        %v2338 = vsel %vm2336, %v2315, 0
        %v2341 = vsel %vm2336, %v2317, 0
        %v2344 = vsel %vm2336, %v2319, 0
        %v2347 = vsel %vm2336, %v2321, 0
        %v2350 = vsel %vm2336, %v2323, 0
        %v2353 = vsel %vm2336, %v2325, 0
        %v2356 = vsel %vm2336, %v2327, 0
        %v2359 = vsel %vm2336, %v2329, 0
        %v2362 = vsel %vm2336, %v2316, 0
        %v2365 = vsel %vm2336, %v2318, 0
        %vm2367 = vcmask 1043456
        %v2369 = vsel %vm2367, %v2334, 0
        %v2372 = vsel %vm2367, %v2335, 0
        %2374 = vmatpush.bf16.msra.mxu0 0
        %2375 = vmatpush.bf16.msra.mxu0 0
        %2376 = vmatpush.bf16.msra.mxu0 0
        %2377 = vmatpush.bf16.msra.mxu0 0
        %2378 = vmatpush.bf16.msra.mxu0 0
        %2379 = vmatpush.bf16.msra.mxu0 0
        %2380 = vmatpush.bf16.msra.mxu0 0
        %2381 = vmatpush.bf16.msra.mxu0 %v2369
        %2382 = vmatmul.bf16.gmra.mxu0 %v2338
        %v2383 = vpop.f32.mrf.mxu0
        %v2384 = vadd.f32 0.0, %v2383
        %v2385 = vpop.f32.mrf.mxu0
        %v2386 = vadd.f32 0.0, %v2385
        %2387 = vmatmul.bf16.gmra.mxu0 %v2341
        %v2388 = vpop.f32.mrf.mxu0
        %v2389 = vadd.f32 0.0, %v2388
        %v2390 = vpop.f32.mrf.mxu0
        %v2391 = vadd.f32 0.0, %v2390
        %2392 = vmatmul.bf16.gmra.mxu0 %v2344
        %v2393 = vpop.f32.mrf.mxu0
        %v2394 = vadd.f32 0.0, %v2393
        %v2395 = vpop.f32.mrf.mxu0
        %v2396 = vadd.f32 0.0, %v2395
        %2397 = vmatmul.bf16.gmra.mxu0 %v2347
        %v2398 = vpop.f32.mrf.mxu0
        %v2399 = vadd.f32 0.0, %v2398
        %v2400 = vpop.f32.mrf.mxu0
        %v2401 = vadd.f32 0.0, %v2400
        %2402 = vmatmul.bf16.gmra.mxu0 %v2350
        %v2403 = vpop.f32.mrf.mxu0
        %v2404 = vadd.f32 0.0, %v2403
        %v2405 = vpop.f32.mrf.mxu0
        %v2406 = vadd.f32 0.0, %v2405
        %2407 = vmatmul.bf16.gmra.mxu0 %v2353
        %v2408 = vpop.f32.mrf.mxu0
        %v2409 = vadd.f32 0.0, %v2408
        %v2410 = vpop.f32.mrf.mxu0
        %v2411 = vadd.f32 0.0, %v2410
        %2412 = vmatmul.bf16.gmra.mxu0 %v2356
        %v2413 = vpop.f32.mrf.mxu0
        %v2414 = vadd.f32 0.0, %v2413
        %v2415 = vpop.f32.mrf.mxu0
        %v2416 = vadd.f32 0.0, %v2415
        %2417 = vmatmul.bf16.gmra.mxu0 %v2359
        %v2418 = vpop.f32.mrf.mxu0
        %v2419 = vadd.f32 0.0, %v2418
        %v2420 = vpop.f32.mrf.mxu0
        %v2421 = vadd.f32 0.0, %v2420
        %2422 = vmatmul.bf16.gmra.mxu0 %v2362
        %v2423 = vpop.f32.mrf.mxu0
        %v2424 = vadd.f32 0.0, %v2423
        %v2425 = vpop.f32.mrf.mxu0
        %v2426 = vadd.f32 0.0, %v2425
        %2427 = vmatmul.bf16.gmra.mxu0 %v2365
        %v2428 = vpop.f32.mrf.mxu0
        %v2429 = vadd.f32 0.0, %v2428
        %v2430 = vpop.f32.mrf.mxu0
        %2431 = vdwg.mxu0
        %2432 = vmatpush.bf16.msra.mxu0 0
        %2433 = vmatpush.bf16.msra.mxu0 0
        %2434 = vmatpush.bf16.msra.mxu0 0
        %2435 = vmatpush.bf16.msra.mxu0 0
        %2436 = vmatpush.bf16.msra.mxu0 0
        %2437 = vmatpush.bf16.msra.mxu0 0
        %2438 = vmatpush.bf16.msra.mxu0 0
        %2439 = vmatpush.bf16.msra.mxu0 %v2372
        %2440 = vmatmul.bf16.gmra.mxu0 %v2338
        %v2441 = vpop.f32.mrf.mxu0
        %v2442 = vadd.f32 0.0, %v2441
        %v2443 = vpop.f32.mrf.mxu0
        %v2444 = vadd.f32 0.0, %v2443
        %2445 = vmatmul.bf16.gmra.mxu0 %v2341
        %v2446 = vpop.f32.mrf.mxu0
        %v2447 = vadd.f32 0.0, %v2446
        %v2448 = vpop.f32.mrf.mxu0
        %v2449 = vadd.f32 0.0, %v2448
        %2450 = vmatmul.bf16.gmra.mxu0 %v2344
        %v2451 = vpop.f32.mrf.mxu0
        %v2452 = vadd.f32 0.0, %v2451
        %v2453 = vpop.f32.mrf.mxu0
        %v2454 = vadd.f32 0.0, %v2453
        %2455 = vmatmul.bf16.gmra.mxu0 %v2347
        %v2456 = vpop.f32.mrf.mxu0
        %v2457 = vadd.f32 0.0, %v2456
        %v2458 = vpop.f32.mrf.mxu0
        %v2459 = vadd.f32 0.0, %v2458
        %2460 = vmatmul.bf16.gmra.mxu0 %v2350
        %v2461 = vpop.f32.mrf.mxu0
        %v2462 = vadd.f32 0.0, %v2461
        %v2463 = vpop.f32.mrf.mxu0
        %v2464 = vadd.f32 0.0, %v2463
        %2465 = vmatmul.bf16.gmra.mxu0 %v2353
        %v2466 = vpop.f32.mrf.mxu0
        %v2467 = vadd.f32 0.0, %v2466
        %v2468 = vpop.f32.mrf.mxu0
        %v2469 = vadd.f32 0.0, %v2468
        %2470 = vmatmul.bf16.gmra.mxu0 %v2356
        %v2471 = vpop.f32.mrf.mxu0
        %v2472 = vadd.f32 0.0, %v2471
        %v2473 = vpop.f32.mrf.mxu0
        %v2474 = vadd.f32 0.0, %v2473
        %2475 = vmatmul.bf16.gmra.mxu0 %v2359
        %v2476 = vpop.f32.mrf.mxu0
        %v2477 = vadd.f32 0.0, %v2476
        %v2478 = vpop.f32.mrf.mxu0
        %v2479 = vadd.f32 0.0, %v2478
        %2480 = vmatmul.bf16.gmra.mxu0 %v2362
        %v2481 = vpop.f32.mrf.mxu0
        %v2482 = vadd.f32 0.0, %v2481
        %v2483 = vpop.f32.mrf.mxu0
        %v2484 = vadd.f32 0.0, %v2483
        %2485 = vmatmul.bf16.gmra.mxu0 %v2365
        %v2486 = vpop.f32.mrf.mxu0
        %v2487 = vadd.f32 0.0, %v2486
        %v2488 = vpop.f32.mrf.mxu0
        %2489 = vdwg.mxu0
        %v2491 = vunpack.c.l.b16 %v2289
        %v2492 = vunpack.c.h.b16 %v2289
        %v2493 = vpack.c.b16 %v2491, %v2491
        %v2494 = vpack.c.b16 %v2492, %v2492
        %2497 = vxpose.binary.xlu0.c.b16.start [1/16] %v2494, %v2493, 128
        %2498 = vxpose.binary.xlu0.c.b16.cont [2/16] 0, 0, 128
        %2499 = vxpose.binary.xlu0.c.b16.cont [3/16] 0, 0, 128
        %2500 = vxpose.binary.xlu0.c.b16.cont [4/16] 0, 0, 128
        %2501 = vxpose.binary.xlu0.c.b16.cont [5/16] 0, 0, 128
        %2502 = vxpose.binary.xlu0.c.b16.cont [6/16] 0, 0, 128
        %2503 = vxpose.binary.xlu0.c.b16.cont [7/16] 0, 0, 128
        %2504 = vxpose.binary.xlu0.c.b16.end [8/16] 0, 0, 128
        %v2505 = vpop.trf.xlu0
        %v2506 = vpop.trf.xlu0
        %v2507 = vpop.trf.xlu0
        %v2508 = vpop.trf.xlu0
        %v2509 = vpop.trf.xlu0
        %v2510 = vpop.trf.xlu0
        %v2511 = vpop.trf.xlu0
        %v2512 = vpop.trf.xlu0
        %v2513 = vpop.trf.xlu0
        %v2514 = vpop.trf.xlu0
        %v2515 = vpop.trf.xlu0
        %v2516 = vpop.trf.xlu0
        %v2517 = vpop.trf.xlu0
        %v2518 = vpop.trf.xlu0
        %v2519 = vpop.trf.xlu0
        %v2520 = vpop.trf.xlu0
        %v2522 = vunpack.c.l.b16 %v2293
        %v2523 = vunpack.c.h.b16 %v2293
        %v2524 = vpack.c.b16 %v2522, %v2522
        %v2525 = vpack.c.b16 %v2523, %v2523
        %v2527 = vsel %vm2336, %v2505, 0
        %v2530 = vsel %vm2336, %v2507, 0
        %v2533 = vsel %vm2336, %v2509, 0
        %v2536 = vsel %vm2336, %v2511, 0
        %v2539 = vsel %vm2336, %v2513, 0
        %v2542 = vsel %vm2336, %v2515, 0
        %v2545 = vsel %vm2336, %v2517, 0
        %v2548 = vsel %vm2336, %v2519, 0
        %v2551 = vsel %vm2336, %v2506, 0
        %v2554 = vsel %vm2336, %v2508, 0
        %v2557 = vsel %vm2367, %v2524, 0
        %v2560 = vsel %vm2367, %v2525, 0
        %2562 = vmatpush.bf16.msra.mxu0 0
        %2563 = vmatpush.bf16.msra.mxu0 0
        %2564 = vmatpush.bf16.msra.mxu0 0
        %2565 = vmatpush.bf16.msra.mxu0 0
        %2566 = vmatpush.bf16.msra.mxu0 0
        %2567 = vmatpush.bf16.msra.mxu0 0
        %2568 = vmatpush.bf16.msra.mxu0 0
        %2569 = vmatpush.bf16.msra.mxu0 %v2557
        %2570 = vmatmul.bf16.gmra.mxu0 %v2527
        %v2571 = vpop.f32.mrf.mxu0
        %v2572 = vadd.f32 0.0, %v2571
        %v2573 = vpop.f32.mrf.mxu0
        %v2574 = vadd.f32 0.0, %v2573
        %2575 = vmatmul.bf16.gmra.mxu0 %v2530
        %v2576 = vpop.f32.mrf.mxu0
        %v2577 = vadd.f32 0.0, %v2576
        %v2578 = vpop.f32.mrf.mxu0
        %v2579 = vadd.f32 0.0, %v2578
        %2580 = vmatmul.bf16.gmra.mxu0 %v2533
        %v2581 = vpop.f32.mrf.mxu0
        %v2582 = vadd.f32 0.0, %v2581
        %v2583 = vpop.f32.mrf.mxu0
        %v2584 = vadd.f32 0.0, %v2583
        %2585 = vmatmul.bf16.gmra.mxu0 %v2536
        %v2586 = vpop.f32.mrf.mxu0
        %v2587 = vadd.f32 0.0, %v2586
        %v2588 = vpop.f32.mrf.mxu0
        %v2589 = vadd.f32 0.0, %v2588
        %2590 = vmatmul.bf16.gmra.mxu0 %v2539
        %v2591 = vpop.f32.mrf.mxu0
        %v2592 = vadd.f32 0.0, %v2591
        %v2593 = vpop.f32.mrf.mxu0
        %v2594 = vadd.f32 0.0, %v2593
        %2595 = vmatmul.bf16.gmra.mxu0 %v2542
        %v2596 = vpop.f32.mrf.mxu0
        %v2597 = vadd.f32 0.0, %v2596
        %v2598 = vpop.f32.mrf.mxu0
        %v2599 = vadd.f32 0.0, %v2598
        %2600 = vmatmul.bf16.gmra.mxu0 %v2545
        %v2601 = vpop.f32.mrf.mxu0
        %v2602 = vadd.f32 0.0, %v2601
        %v2603 = vpop.f32.mrf.mxu0
        %v2604 = vadd.f32 0.0, %v2603
        %2605 = vmatmul.bf16.gmra.mxu0 %v2548
        %v2606 = vpop.f32.mrf.mxu0
        %v2607 = vadd.f32 0.0, %v2606
        %v2608 = vpop.f32.mrf.mxu0
        %v2609 = vadd.f32 0.0, %v2608
        %2610 = vmatmul.bf16.gmra.mxu0 %v2551
        %v2611 = vpop.f32.mrf.mxu0
        %v2612 = vadd.f32 0.0, %v2611
        %v2613 = vpop.f32.mrf.mxu0
        %v2614 = vadd.f32 0.0, %v2613
        %2615 = vmatmul.bf16.gmra.mxu0 %v2554
        %v2616 = vpop.f32.mrf.mxu0
        %v2617 = vadd.f32 0.0, %v2616
        %v2618 = vpop.f32.mrf.mxu0
        %2619 = vdwg.mxu0
        %2620 = vmatpush.bf16.msra.mxu0 0
        %2621 = vmatpush.bf16.msra.mxu0 0
        %2622 = vmatpush.bf16.msra.mxu0 0
        %2623 = vmatpush.bf16.msra.mxu0 0
        %2624 = vmatpush.bf16.msra.mxu0 0
        %2625 = vmatpush.bf16.msra.mxu0 0
        %2626 = vmatpush.bf16.msra.mxu0 0
        %2627 = vmatpush.bf16.msra.mxu0 %v2560
        %2628 = vmatmul.bf16.gmra.mxu0 %v2527
        %v2629 = vpop.f32.mrf.mxu0
        %v2630 = vadd.f32 0.0, %v2629
        %v2631 = vpop.f32.mrf.mxu0
        %v2632 = vadd.f32 0.0, %v2631
        %2633 = vmatmul.bf16.gmra.mxu0 %v2530
        %v2634 = vpop.f32.mrf.mxu0
        %v2635 = vadd.f32 0.0, %v2634
        %v2636 = vpop.f32.mrf.mxu0
        %v2637 = vadd.f32 0.0, %v2636
        %2638 = vmatmul.bf16.gmra.mxu0 %v2533
        %v2639 = vpop.f32.mrf.mxu0
        %v2640 = vadd.f32 0.0, %v2639
        %v2641 = vpop.f32.mrf.mxu0
        %v2642 = vadd.f32 0.0, %v2641
        %2643 = vmatmul.bf16.gmra.mxu0 %v2536
        %v2644 = vpop.f32.mrf.mxu0
        %v2645 = vadd.f32 0.0, %v2644
        %v2646 = vpop.f32.mrf.mxu0
        %v2647 = vadd.f32 0.0, %v2646
        %2648 = vmatmul.bf16.gmra.mxu0 %v2539
        %v2649 = vpop.f32.mrf.mxu0
        %v2650 = vadd.f32 0.0, %v2649
        %v2651 = vpop.f32.mrf.mxu0
        %v2652 = vadd.f32 0.0, %v2651
        %2653 = vmatmul.bf16.gmra.mxu0 %v2542
        %v2654 = vpop.f32.mrf.mxu0
        %v2655 = vadd.f32 0.0, %v2654
        %v2656 = vpop.f32.mrf.mxu0
        %v2657 = vadd.f32 0.0, %v2656
        %2658 = vmatmul.bf16.gmra.mxu0 %v2545
        %v2659 = vpop.f32.mrf.mxu0
        %v2660 = vadd.f32 0.0, %v2659
        %v2661 = vpop.f32.mrf.mxu0
        %v2662 = vadd.f32 0.0, %v2661
        %2663 = vmatmul.bf16.gmra.mxu0 %v2548
        %v2664 = vpop.f32.mrf.mxu0
        %v2665 = vadd.f32 0.0, %v2664
        %v2666 = vpop.f32.mrf.mxu0
        %v2667 = vadd.f32 0.0, %v2666
        %2668 = vmatmul.bf16.gmra.mxu0 %v2551
        %v2669 = vpop.f32.mrf.mxu0
        %v2670 = vadd.f32 0.0, %v2669
        %v2671 = vpop.f32.mrf.mxu0
        %v2672 = vadd.f32 0.0, %v2671
        %2673 = vmatmul.bf16.gmra.mxu0 %v2554
        %v2674 = vpop.f32.mrf.mxu0
        %v2675 = vadd.f32 0.0, %v2674
        %v2676 = vpop.f32.mrf.mxu0
        %2677 = vdwg.mxu0
        %v2679 = vunpack.c.l.b16 %v2290
        %v2680 = vunpack.c.h.b16 %v2290
        %v2681 = vpack.c.b16 %v2679, %v2679
        %v2682 = vpack.c.b16 %v2680, %v2680
        %2685 = vxpose.binary.xlu0.c.b16.start [1/16] %v2682, %v2681, 128
        %2686 = vxpose.binary.xlu0.c.b16.cont [2/16] 0, 0, 128
        %2687 = vxpose.binary.xlu0.c.b16.cont [3/16] 0, 0, 128
        %2688 = vxpose.binary.xlu0.c.b16.cont [4/16] 0, 0, 128
        %2689 = vxpose.binary.xlu0.c.b16.cont [5/16] 0, 0, 128
        %2690 = vxpose.binary.xlu0.c.b16.cont [6/16] 0, 0, 128
        %2691 = vxpose.binary.xlu0.c.b16.cont [7/16] 0, 0, 128
        %2692 = vxpose.binary.xlu0.c.b16.end [8/16] 0, 0, 128
        %v2693 = vpop.trf.xlu0
        %v2694 = vpop.trf.xlu0
        %v2695 = vpop.trf.xlu0
        %v2696 = vpop.trf.xlu0
        %v2697 = vpop.trf.xlu0
        %v2698 = vpop.trf.xlu0
        %v2699 = vpop.trf.xlu0
        %v2700 = vpop.trf.xlu0
        %v2701 = vpop.trf.xlu0
        %v2702 = vpop.trf.xlu0
        %v2703 = vpop.trf.xlu0
        %v2704 = vpop.trf.xlu0
        %v2705 = vpop.trf.xlu0
        %v2706 = vpop.trf.xlu0
        %v2707 = vpop.trf.xlu0
        %v2708 = vpop.trf.xlu0
        %v2710 = vunpack.c.l.b16 %v2294
        %v2711 = vunpack.c.h.b16 %v2294
        %v2712 = vpack.c.b16 %v2710, %v2710
        %v2713 = vpack.c.b16 %v2711, %v2711
        %v2715 = vsel %vm2336, %v2693, 0
        %v2718 = vsel %vm2336, %v2695, 0
        %v2721 = vsel %vm2336, %v2697, 0
        %v2724 = vsel %vm2336, %v2699, 0
        %v2727 = vsel %vm2336, %v2701, 0
        %v2730 = vsel %vm2336, %v2703, 0
        %v2733 = vsel %vm2336, %v2705, 0
        %v2736 = vsel %vm2336, %v2707, 0
        %v2739 = vsel %vm2336, %v2694, 0
        %v2742 = vsel %vm2336, %v2696, 0
        %v2745 = vsel %vm2367, %v2712, 0
        %v2748 = vsel %vm2367, %v2713, 0
        %2750 = vmatpush.bf16.msra.mxu0 0
        %2751 = vmatpush.bf16.msra.mxu0 0
        %2752 = vmatpush.bf16.msra.mxu0 0
        %2753 = vmatpush.bf16.msra.mxu0 0
        %2754 = vmatpush.bf16.msra.mxu0 0
        %2755 = vmatpush.bf16.msra.mxu0 0
        %2756 = vmatpush.bf16.msra.mxu0 0
        %2757 = vmatpush.bf16.msra.mxu0 %v2745
        %2758 = vmatmul.bf16.gmra.mxu0 %v2715
        %v2759 = vpop.f32.mrf.mxu0
        %v2760 = vadd.f32 0.0, %v2759
        %v2761 = vpop.f32.mrf.mxu0
        %v2762 = vadd.f32 0.0, %v2761
        %2763 = vmatmul.bf16.gmra.mxu0 %v2718
        %v2764 = vpop.f32.mrf.mxu0
        %v2765 = vadd.f32 0.0, %v2764
        %v2766 = vpop.f32.mrf.mxu0
        %v2767 = vadd.f32 0.0, %v2766
        %2768 = vmatmul.bf16.gmra.mxu0 %v2721
        %v2769 = vpop.f32.mrf.mxu0
        %v2770 = vadd.f32 0.0, %v2769
        %v2771 = vpop.f32.mrf.mxu0
        %v2772 = vadd.f32 0.0, %v2771
        %2773 = vmatmul.bf16.gmra.mxu0 %v2724
        %v2774 = vpop.f32.mrf.mxu0
        %v2775 = vadd.f32 0.0, %v2774
        %v2776 = vpop.f32.mrf.mxu0
        %v2777 = vadd.f32 0.0, %v2776
        %2778 = vmatmul.bf16.gmra.mxu0 %v2727
        %v2779 = vpop.f32.mrf.mxu0
        %v2780 = vadd.f32 0.0, %v2779
        %v2781 = vpop.f32.mrf.mxu0
        %v2782 = vadd.f32 0.0, %v2781
        %2783 = vmatmul.bf16.gmra.mxu0 %v2730
        %v2784 = vpop.f32.mrf.mxu0
        %v2785 = vadd.f32 0.0, %v2784
        %v2786 = vpop.f32.mrf.mxu0
        %v2787 = vadd.f32 0.0, %v2786
        %2788 = vmatmul.bf16.gmra.mxu0 %v2733
        %v2789 = vpop.f32.mrf.mxu0
        %v2790 = vadd.f32 0.0, %v2789
        %v2791 = vpop.f32.mrf.mxu0
        %v2792 = vadd.f32 0.0, %v2791
        %2793 = vmatmul.bf16.gmra.mxu0 %v2736
        %v2794 = vpop.f32.mrf.mxu0
        %v2795 = vadd.f32 0.0, %v2794
        %v2796 = vpop.f32.mrf.mxu0
        %v2797 = vadd.f32 0.0, %v2796
        %2798 = vmatmul.bf16.gmra.mxu0 %v2739
        %v2799 = vpop.f32.mrf.mxu0
        %v2800 = vadd.f32 0.0, %v2799
        %v2801 = vpop.f32.mrf.mxu0
        %v2802 = vadd.f32 0.0, %v2801
        %2803 = vmatmul.bf16.gmra.mxu0 %v2742
        %v2804 = vpop.f32.mrf.mxu0
        %v2805 = vadd.f32 0.0, %v2804
        %v2806 = vpop.f32.mrf.mxu0
        %2807 = vdwg.mxu0
        %2808 = vmatpush.bf16.msra.mxu0 0
        %2809 = vmatpush.bf16.msra.mxu0 0
        %2810 = vmatpush.bf16.msra.mxu0 0
        %2811 = vmatpush.bf16.msra.mxu0 0
        %2812 = vmatpush.bf16.msra.mxu0 0
        %2813 = vmatpush.bf16.msra.mxu0 0
        %2814 = vmatpush.bf16.msra.mxu0 0
        %2815 = vmatpush.bf16.msra.mxu0 %v2748
        %2816 = vmatmul.bf16.gmra.mxu0 %v2715
        %v2817 = vpop.f32.mrf.mxu0
        %v2818 = vadd.f32 0.0, %v2817
        %v2819 = vpop.f32.mrf.mxu0
        %v2820 = vadd.f32 0.0, %v2819
        %2821 = vmatmul.bf16.gmra.mxu0 %v2718
        %v2822 = vpop.f32.mrf.mxu0
        %v2823 = vadd.f32 0.0, %v2822
        %v2824 = vpop.f32.mrf.mxu0
        %v2825 = vadd.f32 0.0, %v2824
        %2826 = vmatmul.bf16.gmra.mxu0 %v2721
        %v2827 = vpop.f32.mrf.mxu0
        %v2828 = vadd.f32 0.0, %v2827
        %v2829 = vpop.f32.mrf.mxu0
        %v2830 = vadd.f32 0.0, %v2829
        %2831 = vmatmul.bf16.gmra.mxu0 %v2724
        %v2832 = vpop.f32.mrf.mxu0
        %v2833 = vadd.f32 0.0, %v2832
        %v2834 = vpop.f32.mrf.mxu0
        %v2835 = vadd.f32 0.0, %v2834
        %2836 = vmatmul.bf16.gmra.mxu0 %v2727
        %v2837 = vpop.f32.mrf.mxu0
        %v2838 = vadd.f32 0.0, %v2837
        %v2839 = vpop.f32.mrf.mxu0
        %v2840 = vadd.f32 0.0, %v2839
        %2841 = vmatmul.bf16.gmra.mxu0 %v2730
        %v2842 = vpop.f32.mrf.mxu0
        %v2843 = vadd.f32 0.0, %v2842
        %v2844 = vpop.f32.mrf.mxu0
        %v2845 = vadd.f32 0.0, %v2844
        %2846 = vmatmul.bf16.gmra.mxu0 %v2733
        %v2847 = vpop.f32.mrf.mxu0
        %v2848 = vadd.f32 0.0, %v2847
        %v2849 = vpop.f32.mrf.mxu0
        %v2850 = vadd.f32 0.0, %v2849
        %2851 = vmatmul.bf16.gmra.mxu0 %v2736
        %v2852 = vpop.f32.mrf.mxu0
        %v2853 = vadd.f32 0.0, %v2852
        %v2854 = vpop.f32.mrf.mxu0
        %v2855 = vadd.f32 0.0, %v2854
        %2856 = vmatmul.bf16.gmra.mxu0 %v2739
        %v2857 = vpop.f32.mrf.mxu0
        %v2858 = vadd.f32 0.0, %v2857
        %v2859 = vpop.f32.mrf.mxu0
        %v2860 = vadd.f32 0.0, %v2859
        %2861 = vmatmul.bf16.gmra.mxu0 %v2742
        %v2862 = vpop.f32.mrf.mxu0
        %v2863 = vadd.f32 0.0, %v2862
        %v2864 = vpop.f32.mrf.mxu0
        %2865 = vdwg.mxu0
        %v2867 = vunpack.c.l.b16 %v2291
        %v2868 = vunpack.c.h.b16 %v2291
        %v2869 = vpack.c.b16 %v2867, %v2867
        %v2870 = vpack.c.b16 %v2868, %v2868
        %2873 = vxpose.binary.xlu0.c.b16.start [1/16] %v2870, %v2869, 128
        %2874 = vxpose.binary.xlu0.c.b16.cont [2/16] 0, 0, 128
        %2875 = vxpose.binary.xlu0.c.b16.cont [3/16] 0, 0, 128
        %2876 = vxpose.binary.xlu0.c.b16.cont [4/16] 0, 0, 128
        %2877 = vxpose.binary.xlu0.c.b16.cont [5/16] 0, 0, 128
        %2878 = vxpose.binary.xlu0.c.b16.cont [6/16] 0, 0, 128
        %2879 = vxpose.binary.xlu0.c.b16.cont [7/16] 0, 0, 128
        %2880 = vxpose.binary.xlu0.c.b16.end [8/16] 0, 0, 128
        %v2881 = vpop.trf.xlu0
        %v2882 = vpop.trf.xlu0
        %v2883 = vpop.trf.xlu0
        %v2884 = vpop.trf.xlu0
        %v2885 = vpop.trf.xlu0
        %v2886 = vpop.trf.xlu0
        %v2887 = vpop.trf.xlu0
        %v2888 = vpop.trf.xlu0
        %v2889 = vpop.trf.xlu0
        %v2890 = vpop.trf.xlu0
        %v2891 = vpop.trf.xlu0
        %v2892 = vpop.trf.xlu0
        %v2893 = vpop.trf.xlu0
        %v2894 = vpop.trf.xlu0
        %v2895 = vpop.trf.xlu0
        %v2896 = vpop.trf.xlu0
        %v2898 = vunpack.c.l.b16 %v2295
        %v2899 = vunpack.c.h.b16 %v2295
        %v2900 = vpack.c.b16 %v2898, %v2898
        %v2901 = vpack.c.b16 %v2899, %v2899
        %v2903 = vsel %vm2336, %v2881, 0
        %v2906 = vsel %vm2336, %v2883, 0
        %v2909 = vsel %vm2336, %v2885, 0
        %v2912 = vsel %vm2336, %v2887, 0
        %v2915 = vsel %vm2336, %v2889, 0
        %v2918 = vsel %vm2336, %v2891, 0
        %v2921 = vsel %vm2336, %v2893, 0
        %v2924 = vsel %vm2336, %v2895, 0
        %v2927 = vsel %vm2336, %v2882, 0
        %v2930 = vsel %vm2336, %v2884, 0
        %v2933 = vsel %vm2367, %v2900, 0
        %v2936 = vsel %vm2367, %v2901, 0
        %2938 = vmatpush.bf16.msra.mxu0 0
        %2939 = vmatpush.bf16.msra.mxu0 0
        %2940 = vmatpush.bf16.msra.mxu0 0
        %2941 = vmatpush.bf16.msra.mxu0 0
        %2942 = vmatpush.bf16.msra.mxu0 0
        %2943 = vmatpush.bf16.msra.mxu0 0
        %2944 = vmatpush.bf16.msra.mxu0 0
        %2945 = vmatpush.bf16.msra.mxu0 %v2933
        %2946 = vmatmul.bf16.gmra.mxu0 %v2903
        %v2947 = vpop.f32.mrf.mxu0
        %v2948 = vadd.f32 0.0, %v2947
        %v2949 = vpop.f32.mrf.mxu0
        %v2950 = vadd.f32 0.0, %v2949
        %2951 = vmatmul.bf16.gmra.mxu0 %v2906
        %v2952 = vpop.f32.mrf.mxu0
        %v2953 = vadd.f32 0.0, %v2952
        %v2954 = vpop.f32.mrf.mxu0
        %v2955 = vadd.f32 0.0, %v2954
        %2956 = vmatmul.bf16.gmra.mxu0 %v2909
        %v2957 = vpop.f32.mrf.mxu0
        %v2958 = vadd.f32 0.0, %v2957
        %v2959 = vpop.f32.mrf.mxu0
        %v2960 = vadd.f32 0.0, %v2959
        %2961 = vmatmul.bf16.gmra.mxu0 %v2912
        %v2962 = vpop.f32.mrf.mxu0
        %v2963 = vadd.f32 0.0, %v2962
        %v2964 = vpop.f32.mrf.mxu0
        %v2965 = vadd.f32 0.0, %v2964
        %2966 = vmatmul.bf16.gmra.mxu0 %v2915
        %v2967 = vpop.f32.mrf.mxu0
        %v2968 = vadd.f32 0.0, %v2967
        %v2969 = vpop.f32.mrf.mxu0
        %v2970 = vadd.f32 0.0, %v2969
        %2971 = vmatmul.bf16.gmra.mxu0 %v2918
        %v2972 = vpop.f32.mrf.mxu0
        %v2973 = vadd.f32 0.0, %v2972
        %v2974 = vpop.f32.mrf.mxu0
        %v2975 = vadd.f32 0.0, %v2974
        %2976 = vmatmul.bf16.gmra.mxu0 %v2921
        %v2977 = vpop.f32.mrf.mxu0
        %v2978 = vadd.f32 0.0, %v2977
        %v2979 = vpop.f32.mrf.mxu0
        %v2980 = vadd.f32 0.0, %v2979
        %2981 = vmatmul.bf16.gmra.mxu0 %v2924
        %v2982 = vpop.f32.mrf.mxu0
        %v2983 = vadd.f32 0.0, %v2982
        %v2984 = vpop.f32.mrf.mxu0
        %v2985 = vadd.f32 0.0, %v2984
        %2986 = vmatmul.bf16.gmra.mxu0 %v2927
        %v2987 = vpop.f32.mrf.mxu0
        %v2988 = vadd.f32 0.0, %v2987
        %v2989 = vpop.f32.mrf.mxu0
        %v2990 = vadd.f32 0.0, %v2989
        %2991 = vmatmul.bf16.gmra.mxu0 %v2930
        %v2992 = vpop.f32.mrf.mxu0
        %v2993 = vadd.f32 0.0, %v2992
        %v2994 = vpop.f32.mrf.mxu0
        %2995 = vdwg.mxu0
        %2996 = vmatpush.bf16.msra.mxu0 0
        %2997 = vmatpush.bf16.msra.mxu0 0
        %2998 = vmatpush.bf16.msra.mxu0 0
        %2999 = vmatpush.bf16.msra.mxu0 0
        %3000 = vmatpush.bf16.msra.mxu0 0
        %3001 = vmatpush.bf16.msra.mxu0 0
        %3002 = vmatpush.bf16.msra.mxu0 0
        %3003 = vmatpush.bf16.msra.mxu0 %v2936
        %3004 = vmatmul.bf16.gmra.mxu0 %v2903
        %v3005 = vpop.f32.mrf.mxu0
        %v3006 = vadd.f32 0.0, %v3005
        %v3007 = vpop.f32.mrf.mxu0
        %v3008 = vadd.f32 0.0, %v3007
        %3009 = vmatmul.bf16.gmra.mxu0 %v2906
        %v3010 = vpop.f32.mrf.mxu0
        %v3011 = vadd.f32 0.0, %v3010
        %v3012 = vpop.f32.mrf.mxu0
        %v3013 = vadd.f32 0.0, %v3012
        %3014 = vmatmul.bf16.gmra.mxu0 %v2909
        %v3015 = vpop.f32.mrf.mxu0
        %v3016 = vadd.f32 0.0, %v3015
        %v3017 = vpop.f32.mrf.mxu0
        %v3018 = vadd.f32 0.0, %v3017
        %3019 = vmatmul.bf16.gmra.mxu0 %v2912
        %v3020 = vpop.f32.mrf.mxu0
        %v3021 = vadd.f32 0.0, %v3020
        %v3022 = vpop.f32.mrf.mxu0
        %v3023 = vadd.f32 0.0, %v3022
        %3024 = vmatmul.bf16.gmra.mxu0 %v2915
        %v3025 = vpop.f32.mrf.mxu0
        %v3026 = vadd.f32 0.0, %v3025
        %v3027 = vpop.f32.mrf.mxu0
        %v3028 = vadd.f32 0.0, %v3027
        %3029 = vmatmul.bf16.gmra.mxu0 %v2918
        %v3030 = vpop.f32.mrf.mxu0
        %v3031 = vadd.f32 0.0, %v3030
        %v3032 = vpop.f32.mrf.mxu0
        %v3033 = vadd.f32 0.0, %v3032
        %3034 = vmatmul.bf16.gmra.mxu0 %v2921
        %v3035 = vpop.f32.mrf.mxu0
        %v3036 = vadd.f32 0.0, %v3035
        %v3037 = vpop.f32.mrf.mxu0
        %v3038 = vadd.f32 0.0, %v3037
        %3039 = vmatmul.bf16.gmra.mxu0 %v2924
        %v3040 = vpop.f32.mrf.mxu0
        %v3041 = vadd.f32 0.0, %v3040
        %v3042 = vpop.f32.mrf.mxu0
        %v3043 = vadd.f32 0.0, %v3042
        %3044 = vmatmul.bf16.gmra.mxu0 %v2927
        %v3045 = vpop.f32.mrf.mxu0
        %v3046 = vadd.f32 0.0, %v3045
        %v3047 = vpop.f32.mrf.mxu0
        %v3048 = vadd.f32 0.0, %v3047
        %3049 = vmatmul.bf16.gmra.mxu0 %v2930
        %v3050 = vpop.f32.mrf.mxu0
        %v3051 = vadd.f32 0.0, %v3050
        %v3052 = vpop.f32.mrf.mxu0
        %3053 = vdwg.mxu0
        %v3054 = vsel %vm308, %v2442, -inf
        %v3055 = vmax.f32 %v2384, %v3054
        %3056 = vmax.xlane.f32.xlu0 %v3055
        %v3057 = vpop.xlane.xlu0 %3056
        %v3058 = vsel %vm308, %v2444, -inf
        %v3059 = vmax.f32 %v2386, %v3058
        %3060 = vmax.xlane.f32.xlu0 %v3059
        %v3061 = vpop.xlane.xlu0 %3060
        %v3062 = vsel %vm308, %v2447, -inf
        %v3063 = vmax.f32 %v2389, %v3062
        %3064 = vmax.xlane.f32.xlu0 %v3063
        %v3065 = vpop.xlane.xlu0 %3064
        %v3066 = vsel %vm308, %v2449, -inf
        %v3067 = vmax.f32 %v2391, %v3066
        %3068 = vmax.xlane.f32.xlu0 %v3067
        %v3069 = vpop.xlane.xlu0 %3068
        %v3070 = vsel %vm308, %v2452, -inf
        %v3071 = vmax.f32 %v2394, %v3070
        %3072 = vmax.xlane.f32.xlu0 %v3071
        %v3073 = vpop.xlane.xlu0 %3072
        %v3074 = vsel %vm308, %v2454, -inf
        %v3075 = vmax.f32 %v2396, %v3074
        %3076 = vmax.xlane.f32.xlu0 %v3075
        %v3077 = vpop.xlane.xlu0 %3076
        %v3078 = vsel %vm308, %v2457, -inf
        %v3079 = vmax.f32 %v2399, %v3078
        %3080 = vmax.xlane.f32.xlu0 %v3079
        %v3081 = vpop.xlane.xlu0 %3080
        %v3082 = vsel %vm308, %v2459, -inf
        %v3083 = vmax.f32 %v2401, %v3082
        %3084 = vmax.xlane.f32.xlu0 %v3083
        %v3085 = vpop.xlane.xlu0 %3084
        %v3086 = vsel %vm308, %v2462, -inf
        %v3087 = vmax.f32 %v2404, %v3086
        %3088 = vmax.xlane.f32.xlu0 %v3087
        %v3089 = vpop.xlane.xlu0 %3088
        %v3090 = vsel %vm308, %v2464, -inf
        %v3091 = vmax.f32 %v2406, %v3090
        %3092 = vmax.xlane.f32.xlu0 %v3091
        %v3093 = vpop.xlane.xlu0 %3092
        %v3094 = vsel %vm308, %v2467, -inf
        %v3095 = vmax.f32 %v2409, %v3094
        %3096 = vmax.xlane.f32.xlu0 %v3095
        %v3097 = vpop.xlane.xlu0 %3096
        %v3098 = vsel %vm308, %v2469, -inf
        %v3099 = vmax.f32 %v2411, %v3098
        %3100 = vmax.xlane.f32.xlu0 %v3099
        %v3101 = vpop.xlane.xlu0 %3100
        %v3102 = vsel %vm308, %v2472, -inf
        %v3103 = vmax.f32 %v2414, %v3102
        %3104 = vmax.xlane.f32.xlu0 %v3103
        %v3105 = vpop.xlane.xlu0 %3104
        %v3106 = vsel %vm308, %v2474, -inf
        %v3107 = vmax.f32 %v2416, %v3106
        %3108 = vmax.xlane.f32.xlu0 %v3107
        %v3109 = vpop.xlane.xlu0 %3108
        %v3110 = vsel %vm308, %v2477, -inf
        %v3111 = vmax.f32 %v2419, %v3110
        %3112 = vmax.xlane.f32.xlu0 %v3111
        %v3113 = vpop.xlane.xlu0 %3112
        %v3114 = vsel %vm308, %v2479, -inf
        %v3115 = vmax.f32 %v2421, %v3114
        %3116 = vmax.xlane.f32.xlu0 %v3115
        %v3117 = vpop.xlane.xlu0 %3116
        %v3118 = vsel %vm308, %v2482, -inf
        %v3119 = vmax.f32 %v2424, %v3118
        %3120 = vmax.xlane.f32.xlu0 %v3119
        %v3121 = vpop.xlane.xlu0 %3120
        %v3122 = vsel %vm308, %v2484, -inf
        %v3123 = vmax.f32 %v2426, %v3122
        %3124 = vmax.xlane.f32.xlu0 %v3123
        %v3125 = vpop.xlane.xlu0 %3124
        %vm3126 = vcmask 1045504
        %v3127 = vsel %vm3126, %v2429, -inf
        %vm3128 = vcmask 177152
        %v3129 = vsel %vm3128, %v2487, -inf
        %v3130 = vmax.f32 %v3127, %v3129
        %3131 = vmax.xlane.f32.xlu0 %v3130
        %v3132 = vpop.xlane.xlu0 %3131
        %v3133 = vsel %vm308, %v2630, -inf
        %v3134 = vmax.f32 %v2572, %v3133
        %3135 = vmax.xlane.f32.xlu0 %v3134
        %v3136 = vpop.xlane.xlu0 %3135
        %v3137 = vsel %vm308, %v2632, -inf
        %v3138 = vmax.f32 %v2574, %v3137
        %3139 = vmax.xlane.f32.xlu0 %v3138
        %v3140 = vpop.xlane.xlu0 %3139
        %v3141 = vsel %vm308, %v2635, -inf
        %v3142 = vmax.f32 %v2577, %v3141
        %3143 = vmax.xlane.f32.xlu0 %v3142
        %v3144 = vpop.xlane.xlu0 %3143
        %v3145 = vsel %vm308, %v2637, -inf
        %v3146 = vmax.f32 %v2579, %v3145
        %3147 = vmax.xlane.f32.xlu0 %v3146
        %v3148 = vpop.xlane.xlu0 %3147
        %v3149 = vsel %vm308, %v2640, -inf
        %v3150 = vmax.f32 %v2582, %v3149
        %3151 = vmax.xlane.f32.xlu0 %v3150
        %v3152 = vpop.xlane.xlu0 %3151
        %v3153 = vsel %vm308, %v2642, -inf
        %v3154 = vmax.f32 %v2584, %v3153
        %3155 = vmax.xlane.f32.xlu0 %v3154
        %v3156 = vpop.xlane.xlu0 %3155
        %v3157 = vsel %vm308, %v2645, -inf
        %v3158 = vmax.f32 %v2587, %v3157
        %3159 = vmax.xlane.f32.xlu0 %v3158
        %v3160 = vpop.xlane.xlu0 %3159
        %v3161 = vsel %vm308, %v2647, -inf
        %v3162 = vmax.f32 %v2589, %v3161
        %3163 = vmax.xlane.f32.xlu0 %v3162
        %v3164 = vpop.xlane.xlu0 %3163
        %v3165 = vsel %vm308, %v2650, -inf
        %v3166 = vmax.f32 %v2592, %v3165
        %3167 = vmax.xlane.f32.xlu0 %v3166
        %v3168 = vpop.xlane.xlu0 %3167
        %v3169 = vsel %vm308, %v2652, -inf
        %v3170 = vmax.f32 %v2594, %v3169
        %3171 = vmax.xlane.f32.xlu0 %v3170
        %v3172 = vpop.xlane.xlu0 %3171
        %v3173 = vsel %vm308, %v2655, -inf
        %v3174 = vmax.f32 %v2597, %v3173
        %3175 = vmax.xlane.f32.xlu0 %v3174
        %v3176 = vpop.xlane.xlu0 %3175
        %v3177 = vsel %vm308, %v2657, -inf
        %v3178 = vmax.f32 %v2599, %v3177
        %3179 = vmax.xlane.f32.xlu0 %v3178
        %v3180 = vpop.xlane.xlu0 %3179
        %v3181 = vsel %vm308, %v2660, -inf
        %v3182 = vmax.f32 %v2602, %v3181
        %3183 = vmax.xlane.f32.xlu0 %v3182
        %v3184 = vpop.xlane.xlu0 %3183
        %v3185 = vsel %vm308, %v2662, -inf
        %v3186 = vmax.f32 %v2604, %v3185
        %3187 = vmax.xlane.f32.xlu0 %v3186
        %v3188 = vpop.xlane.xlu0 %3187
        %v3189 = vsel %vm308, %v2665, -inf
        %v3190 = vmax.f32 %v2607, %v3189
        %3191 = vmax.xlane.f32.xlu0 %v3190
        %v3192 = vpop.xlane.xlu0 %3191
        %v3193 = vsel %vm308, %v2667, -inf
        %v3194 = vmax.f32 %v2609, %v3193
        %3195 = vmax.xlane.f32.xlu0 %v3194
        %v3196 = vpop.xlane.xlu0 %3195
        %v3197 = vsel %vm308, %v2670, -inf
        %v3198 = vmax.f32 %v2612, %v3197
        %3199 = vmax.xlane.f32.xlu0 %v3198
        %v3200 = vpop.xlane.xlu0 %3199
        %v3201 = vsel %vm308, %v2672, -inf
        %v3202 = vmax.f32 %v2614, %v3201
        %3203 = vmax.xlane.f32.xlu0 %v3202
        %v3204 = vpop.xlane.xlu0 %3203
        %v3205 = vsel %vm3126, %v2617, -inf
        %v3206 = vsel %vm3128, %v2675, -inf
        %v3207 = vmax.f32 %v3205, %v3206
        %3208 = vmax.xlane.f32.xlu0 %v3207
        %v3209 = vpop.xlane.xlu0 %3208
        %v3210 = vsel %vm308, %v2818, -inf
        %v3211 = vmax.f32 %v2760, %v3210
        %3212 = vmax.xlane.f32.xlu0 %v3211
        %v3213 = vpop.xlane.xlu0 %3212
        %v3214 = vsel %vm308, %v2820, -inf
        %v3215 = vmax.f32 %v2762, %v3214
        %3216 = vmax.xlane.f32.xlu0 %v3215
        %v3217 = vpop.xlane.xlu0 %3216
        %v3218 = vsel %vm308, %v2823, -inf
        %v3219 = vmax.f32 %v2765, %v3218
        %3220 = vmax.xlane.f32.xlu0 %v3219
        %v3221 = vpop.xlane.xlu0 %3220
        %v3222 = vsel %vm308, %v2825, -inf
        %v3223 = vmax.f32 %v2767, %v3222
        %3224 = vmax.xlane.f32.xlu0 %v3223
        %v3225 = vpop.xlane.xlu0 %3224
        %v3226 = vsel %vm308, %v2828, -inf
        %v3227 = vmax.f32 %v2770, %v3226
        %3228 = vmax.xlane.f32.xlu0 %v3227
        %v3229 = vpop.xlane.xlu0 %3228
        %v3230 = vsel %vm308, %v2830, -inf
        %v3231 = vmax.f32 %v2772, %v3230
        %3232 = vmax.xlane.f32.xlu0 %v3231
        %v3233 = vpop.xlane.xlu0 %3232
        %v3234 = vsel %vm308, %v2833, -inf
        %v3235 = vmax.f32 %v2775, %v3234
        %3236 = vmax.xlane.f32.xlu0 %v3235
        %v3237 = vpop.xlane.xlu0 %3236
        %v3238 = vsel %vm308, %v2835, -inf
        %v3239 = vmax.f32 %v2777, %v3238
        %3240 = vmax.xlane.f32.xlu0 %v3239
        %v3241 = vpop.xlane.xlu0 %3240
        %v3242 = vsel %vm308, %v2838, -inf
        %v3243 = vmax.f32 %v2780, %v3242
        %3244 = vmax.xlane.f32.xlu0 %v3243
        %v3245 = vpop.xlane.xlu0 %3244
        %v3246 = vsel %vm308, %v2840, -inf
        %v3247 = vmax.f32 %v2782, %v3246
        %3248 = vmax.xlane.f32.xlu0 %v3247
        %v3249 = vpop.xlane.xlu0 %3248
        %v3250 = vsel %vm308, %v2843, -inf
        %v3251 = vmax.f32 %v2785, %v3250
        %3252 = vmax.xlane.f32.xlu0 %v3251
        %v3253 = vpop.xlane.xlu0 %3252
        %v3254 = vsel %vm308, %v2845, -inf
        %v3255 = vmax.f32 %v2787, %v3254
        %3256 = vmax.xlane.f32.xlu0 %v3255
        %v3257 = vpop.xlane.xlu0 %3256
        %v3258 = vsel %vm308, %v2848, -inf
        %v3259 = vmax.f32 %v2790, %v3258
        %3260 = vmax.xlane.f32.xlu0 %v3259
        %v3261 = vpop.xlane.xlu0 %3260
        %v3262 = vsel %vm308, %v2850, -inf
        %v3263 = vmax.f32 %v2792, %v3262
        %3264 = vmax.xlane.f32.xlu0 %v3263
        %v3265 = vpop.xlane.xlu0 %3264
        %v3266 = vsel %vm308, %v2853, -inf
        %v3267 = vmax.f32 %v2795, %v3266
        %3268 = vmax.xlane.f32.xlu0 %v3267
        %v3269 = vpop.xlane.xlu0 %3268
        %v3270 = vsel %vm308, %v2855, -inf
        %v3271 = vmax.f32 %v2797, %v3270
        %3272 = vmax.xlane.f32.xlu0 %v3271
        %v3273 = vpop.xlane.xlu0 %3272
        %v3274 = vsel %vm308, %v2858, -inf
        %v3275 = vmax.f32 %v2800, %v3274
        %3276 = vmax.xlane.f32.xlu0 %v3275
        %v3277 = vpop.xlane.xlu0 %3276
        %v3278 = vsel %vm308, %v2860, -inf
        %v3279 = vmax.f32 %v2802, %v3278
        %3280 = vmax.xlane.f32.xlu0 %v3279
        %v3281 = vpop.xlane.xlu0 %3280
        %v3282 = vsel %vm3126, %v2805, -inf
        %v3283 = vsel %vm3128, %v2863, -inf
        %v3284 = vmax.f32 %v3282, %v3283
        %3285 = vmax.xlane.f32.xlu0 %v3284
        %v3286 = vpop.xlane.xlu0 %3285
        %v3287 = vsel %vm308, %v3006, -inf
        %v3288 = vmax.f32 %v2948, %v3287
        %3289 = vmax.xlane.f32.xlu0 %v3288
        %v3290 = vpop.xlane.xlu0 %3289
        %v3291 = vsel %vm308, %v3008, -inf
        %v3292 = vmax.f32 %v2950, %v3291
        %3293 = vmax.xlane.f32.xlu0 %v3292
        %v3294 = vpop.xlane.xlu0 %3293
        %v3295 = vsel %vm308, %v3011, -inf
        %v3296 = vmax.f32 %v2953, %v3295
        %3297 = vmax.xlane.f32.xlu0 %v3296
        %v3298 = vpop.xlane.xlu0 %3297
        %v3299 = vsel %vm308, %v3013, -inf
        %v3300 = vmax.f32 %v2955, %v3299
        %3301 = vmax.xlane.f32.xlu0 %v3300
        %v3302 = vpop.xlane.xlu0 %3301
        %v3303 = vsel %vm308, %v3016, -inf
        %v3304 = vmax.f32 %v2958, %v3303
        %3305 = vmax.xlane.f32.xlu0 %v3304
        %v3306 = vpop.xlane.xlu0 %3305
        %v3307 = vsel %vm308, %v3018, -inf
        %v3308 = vmax.f32 %v2960, %v3307
        %3309 = vmax.xlane.f32.xlu0 %v3308
        %v3310 = vpop.xlane.xlu0 %3309
        %v3311 = vsel %vm308, %v3021, -inf
        %v3312 = vmax.f32 %v2963, %v3311
        %3313 = vmax.xlane.f32.xlu0 %v3312
        %v3314 = vpop.xlane.xlu0 %3313
        %v3315 = vsel %vm308, %v3023, -inf
        %v3316 = vmax.f32 %v2965, %v3315
        %3317 = vmax.xlane.f32.xlu0 %v3316
        %v3318 = vpop.xlane.xlu0 %3317
        %v3319 = vsel %vm308, %v3026, -inf
        %v3320 = vmax.f32 %v2968, %v3319
        %3321 = vmax.xlane.f32.xlu0 %v3320
        %v3322 = vpop.xlane.xlu0 %3321
        %v3323 = vsel %vm308, %v3028, -inf
        %v3324 = vmax.f32 %v2970, %v3323
        %3325 = vmax.xlane.f32.xlu0 %v3324
        %v3326 = vpop.xlane.xlu0 %3325
        %v3327 = vsel %vm308, %v3031, -inf
        %v3328 = vmax.f32 %v2973, %v3327
        %3329 = vmax.xlane.f32.xlu0 %v3328
        %v3330 = vpop.xlane.xlu0 %3329
        %v3331 = vsel %vm308, %v3033, -inf
        %v3332 = vmax.f32 %v2975, %v3331
        %3333 = vmax.xlane.f32.xlu0 %v3332
        %v3334 = vpop.xlane.xlu0 %3333
        %v3335 = vsel %vm308, %v3036, -inf
        %v3336 = vmax.f32 %v2978, %v3335
        %3337 = vmax.xlane.f32.xlu0 %v3336
        %v3338 = vpop.xlane.xlu0 %3337
        %v3339 = vsel %vm308, %v3038, -inf
        %v3340 = vmax.f32 %v2980, %v3339
        %3341 = vmax.xlane.f32.xlu0 %v3340
        %v3342 = vpop.xlane.xlu0 %3341
        %v3343 = vsel %vm308, %v3041, -inf
        %v3344 = vmax.f32 %v2983, %v3343
        %3345 = vmax.xlane.f32.xlu0 %v3344
        %v3346 = vpop.xlane.xlu0 %3345
        %v3347 = vsel %vm308, %v3043, -inf
        %v3348 = vmax.f32 %v2985, %v3347
        %3349 = vmax.xlane.f32.xlu0 %v3348
        %v3350 = vpop.xlane.xlu0 %3349
        %v3351 = vsel %vm308, %v3046, -inf
        %v3352 = vmax.f32 %v2988, %v3351
        %3353 = vmax.xlane.f32.xlu0 %v3352
        %v3354 = vpop.xlane.xlu0 %3353
        %v3355 = vsel %vm308, %v3048, -inf
        %v3356 = vmax.f32 %v2990, %v3355
        %3357 = vmax.xlane.f32.xlu0 %v3356
        %v3358 = vpop.xlane.xlu0 %3357
        %v3359 = vsel %vm3126, %v2993, -inf
        %v3360 = vsel %vm3128, %v3051, -inf
        %v3361 = vmax.f32 %v3359, %v3360
        %3362 = vmax.xlane.f32.xlu0 %v3361
        %v3363 = vpop.xlane.xlu0 %3362
        %v3364 = vsub.f32 %v2384, %v3057
        %v3365 = vsub.f32 %v2442, %v3057
        %v3366 = vsub.f32 %v2386, %v3061
        %v3367 = vsub.f32 %v2444, %v3061
        %v3368 = vsub.f32 %v2389, %v3065
        %v3369 = vsub.f32 %v2447, %v3065
        %v3370 = vsub.f32 %v2391, %v3069
        %v3371 = vsub.f32 %v2449, %v3069
        %v3372 = vsub.f32 %v2394, %v3073
        %v3373 = vsub.f32 %v2452, %v3073
        %v3374 = vsub.f32 %v2396, %v3077
        %v3375 = vsub.f32 %v2454, %v3077
        %v3376 = vsub.f32 %v2399, %v3081
        %v3377 = vsub.f32 %v2457, %v3081
        %v3378 = vsub.f32 %v2401, %v3085
        %v3379 = vsub.f32 %v2459, %v3085
        %v3380 = vsub.f32 %v2404, %v3089
        %v3381 = vsub.f32 %v2462, %v3089
        %v3382 = vsub.f32 %v2406, %v3093
        %v3383 = vsub.f32 %v2464, %v3093
        %v3384 = vsub.f32 %v2409, %v3097
        %v3385 = vsub.f32 %v2467, %v3097
        %v3386 = vsub.f32 %v2411, %v3101
        %v3387 = vsub.f32 %v2469, %v3101
        %v3388 = vsub.f32 %v2414, %v3105
        %v3389 = vsub.f32 %v2472, %v3105
        %v3390 = vsub.f32 %v2416, %v3109
        %v3391 = vsub.f32 %v2474, %v3109
        %v3392 = vsub.f32 %v2419, %v3113
        %v3393 = vsub.f32 %v2477, %v3113
        %v3394 = vsub.f32 %v2421, %v3117
        %v3395 = vsub.f32 %v2479, %v3117
        %v3396 = vsub.f32 %v2424, %v3121
        %v3397 = vsub.f32 %v2482, %v3121
        %v3398 = vsub.f32 %v2426, %v3125
        %v3399 = vsub.f32 %v2484, %v3125
        %v3400 = vsub.f32 %v2429, %v3132
        %v3401 = vsub.f32 %v2487, %v3132
        %v3402 = vsub.f32 %v2572, %v3136
        %v3403 = vsub.f32 %v2630, %v3136
        %v3404 = vsub.f32 %v2574, %v3140
        %v3405 = vsub.f32 %v2632, %v3140
        %v3406 = vsub.f32 %v2577, %v3144
        %v3407 = vsub.f32 %v2635, %v3144
        %v3408 = vsub.f32 %v2579, %v3148
        %v3409 = vsub.f32 %v2637, %v3148
        %v3410 = vsub.f32 %v2582, %v3152
        %v3411 = vsub.f32 %v2640, %v3152
        %v3412 = vsub.f32 %v2584, %v3156
        %v3413 = vsub.f32 %v2642, %v3156
        %v3414 = vsub.f32 %v2587, %v3160
        %v3415 = vsub.f32 %v2645, %v3160
        %v3416 = vsub.f32 %v2589, %v3164
        %v3417 = vsub.f32 %v2647, %v3164
        %v3418 = vsub.f32 %v2592, %v3168
        %v3419 = vsub.f32 %v2650, %v3168
        %v3420 = vsub.f32 %v2594, %v3172
        %v3421 = vsub.f32 %v2652, %v3172
        %v3422 = vsub.f32 %v2597, %v3176
        %v3423 = vsub.f32 %v2655, %v3176
        %v3424 = vsub.f32 %v2599, %v3180
        %v3425 = vsub.f32 %v2657, %v3180
        %v3426 = vsub.f32 %v2602, %v3184
        %v3427 = vsub.f32 %v2660, %v3184
        %v3428 = vsub.f32 %v2604, %v3188
        %v3429 = vsub.f32 %v2662, %v3188
        %v3430 = vsub.f32 %v2607, %v3192
        %v3431 = vsub.f32 %v2665, %v3192
        %v3432 = vsub.f32 %v2609, %v3196
        %v3433 = vsub.f32 %v2667, %v3196
        %v3434 = vsub.f32 %v2612, %v3200
        %v3435 = vsub.f32 %v2670, %v3200
        %v3436 = vsub.f32 %v2614, %v3204
        %v3437 = vsub.f32 %v2672, %v3204
        %v3438 = vsub.f32 %v2617, %v3209
        %v3439 = vsub.f32 %v2675, %v3209
        %v3440 = vsub.f32 %v2760, %v3213
        %v3441 = vsub.f32 %v2818, %v3213
        %v3442 = vsub.f32 %v2762, %v3217
        %v3443 = vsub.f32 %v2820, %v3217
        %v3444 = vsub.f32 %v2765, %v3221
        %v3445 = vsub.f32 %v2823, %v3221
        %v3446 = vsub.f32 %v2767, %v3225
        %v3447 = vsub.f32 %v2825, %v3225
        %v3448 = vsub.f32 %v2770, %v3229
        %v3449 = vsub.f32 %v2828, %v3229
        %v3450 = vsub.f32 %v2772, %v3233
        %v3451 = vsub.f32 %v2830, %v3233
        %v3452 = vsub.f32 %v2775, %v3237
        %v3453 = vsub.f32 %v2833, %v3237
        %v3454 = vsub.f32 %v2777, %v3241
        %v3455 = vsub.f32 %v2835, %v3241
        %v3456 = vsub.f32 %v2780, %v3245
        %v3457 = vsub.f32 %v2838, %v3245
        %v3458 = vsub.f32 %v2782, %v3249
        %v3459 = vsub.f32 %v2840, %v3249
        %v3460 = vsub.f32 %v2785, %v3253
        %v3461 = vsub.f32 %v2843, %v3253
        %v3462 = vsub.f32 %v2787, %v3257
        %v3463 = vsub.f32 %v2845, %v3257
        %v3464 = vsub.f32 %v2790, %v3261
        %v3465 = vsub.f32 %v2848, %v3261
        %v3466 = vsub.f32 %v2792, %v3265
        %v3467 = vsub.f32 %v2850, %v3265
        %v3468 = vsub.f32 %v2795, %v3269
        %v3469 = vsub.f32 %v2853, %v3269
        %v3470 = vsub.f32 %v2797, %v3273
        %v3471 = vsub.f32 %v2855, %v3273
        %v3472 = vsub.f32 %v2800, %v3277
        %v3473 = vsub.f32 %v2858, %v3277
        %v3474 = vsub.f32 %v2802, %v3281
        %v3475 = vsub.f32 %v2860, %v3281
        %v3476 = vsub.f32 %v2805, %v3286
        %v3477 = vsub.f32 %v2863, %v3286
        %v3478 = vsub.f32 %v2948, %v3290
        %v3479 = vsub.f32 %v3006, %v3290
        %v3480 = vsub.f32 %v2950, %v3294
        %v3481 = vsub.f32 %v3008, %v3294
        %v3482 = vsub.f32 %v2953, %v3298
        %v3483 = vsub.f32 %v3011, %v3298
        %v3484 = vsub.f32 %v2955, %v3302
        %v3485 = vsub.f32 %v3013, %v3302
        %v3486 = vsub.f32 %v2958, %v3306
        %v3487 = vsub.f32 %v3016, %v3306
        %v3488 = vsub.f32 %v2960, %v3310
        %v3489 = vsub.f32 %v3018, %v3310
        %v3490 = vsub.f32 %v2963, %v3314
        %v3491 = vsub.f32 %v3021, %v3314
        %v3492 = vsub.f32 %v2965, %v3318
        %v3493 = vsub.f32 %v3023, %v3318
        %v3494 = vsub.f32 %v2968, %v3322
        %v3495 = vsub.f32 %v3026, %v3322
        %v3496 = vsub.f32 %v2970, %v3326
        %v3497 = vsub.f32 %v3028, %v3326
        %v3498 = vsub.f32 %v2973, %v3330
        %v3499 = vsub.f32 %v3031, %v3330
        %v3500 = vsub.f32 %v2975, %v3334
        %v3501 = vsub.f32 %v3033, %v3334
        %v3502 = vsub.f32 %v2978, %v3338
        %v3503 = vsub.f32 %v3036, %v3338
        %v3504 = vsub.f32 %v2980, %v3342
        %v3505 = vsub.f32 %v3038, %v3342
        %v3506 = vsub.f32 %v2983, %v3346
        %v3507 = vsub.f32 %v3041, %v3346
        %v3508 = vsub.f32 %v2985, %v3350
        %v3509 = vsub.f32 %v3043, %v3350
        %v3510 = vsub.f32 %v2988, %v3354
        %v3511 = vsub.f32 %v3046, %v3354
        %v3512 = vsub.f32 %v2990, %v3358
        %v3513 = vsub.f32 %v3048, %v3358
        %v3514 = vsub.f32 %v2993, %v3363
        %v3515 = vsub.f32 %v3051, %v3363
        %v3516 = vmul.f32 %v3364, 1.442695
        %v3517 = vpow.pop %v3516
        %v3518 = vmul.f32 %v3365, 1.442695
        %v3519 = vpow.pop %v3518
        %v3520 = vmul.f32 %v3366, 1.442695
        %v3521 = vpow.pop %v3520
        %v3522 = vmul.f32 %v3367, 1.442695
        %v3523 = vpow.pop %v3522
        %v3524 = vmul.f32 %v3368, 1.442695
        %v3525 = vpow.pop %v3524
        %v3526 = vmul.f32 %v3369, 1.442695
        %v3527 = vpow.pop %v3526
        %v3528 = vmul.f32 %v3370, 1.442695
        %v3529 = vpow.pop %v3528
        %v3530 = vmul.f32 %v3371, 1.442695
        %v3531 = vpow.pop %v3530
        %v3532 = vmul.f32 %v3372, 1.442695
        %v3533 = vpow.pop %v3532
        %v3534 = vmul.f32 %v3373, 1.442695
        %v3535 = vpow.pop %v3534
        %v3536 = vmul.f32 %v3374, 1.442695
        %v3537 = vpow.pop %v3536
        %v3538 = vmul.f32 %v3375, 1.442695
        %v3539 = vpow.pop %v3538
        %v3540 = vmul.f32 %v3376, 1.442695
        %v3541 = vpow.pop %v3540
        %v3542 = vmul.f32 %v3377, 1.442695
        %v3543 = vpow.pop %v3542
        %v3544 = vmul.f32 %v3378, 1.442695
        %v3545 = vpow.pop %v3544
        %v3546 = vmul.f32 %v3379, 1.442695
        %v3547 = vpow.pop %v3546
        %v3548 = vmul.f32 %v3380, 1.442695
        %v3549 = vpow.pop %v3548
        %v3550 = vmul.f32 %v3381, 1.442695
        %v3551 = vpow.pop %v3550
        %v3552 = vmul.f32 %v3382, 1.442695
        %v3553 = vpow.pop %v3552
        %v3554 = vmul.f32 %v3383, 1.442695
        %v3555 = vpow.pop %v3554
        %v3556 = vmul.f32 %v3384, 1.442695
        %v3557 = vpow.pop %v3556
        %v3558 = vmul.f32 %v3385, 1.442695
        %v3559 = vpow.pop %v3558
        %v3560 = vmul.f32 %v3386, 1.442695
        %v3561 = vpow.pop %v3560
        %v3562 = vmul.f32 %v3387, 1.442695
        %v3563 = vpow.pop %v3562
        %v3564 = vmul.f32 %v3388, 1.442695
        %v3565 = vpow.pop %v3564
        %v3566 = vmul.f32 %v3389, 1.442695
        %v3567 = vpow.pop %v3566
        %v3568 = vmul.f32 %v3390, 1.442695
        %v3569 = vpow.pop %v3568
        %v3570 = vmul.f32 %v3391, 1.442695
        %v3571 = vpow.pop %v3570
        %v3572 = vmul.f32 %v3392, 1.442695
        %v3573 = vpow.pop %v3572
        %v3574 = vmul.f32 %v3393, 1.442695
        %v3575 = vpow.pop %v3574
        %v3576 = vmul.f32 %v3394, 1.442695
        %v3577 = vpow.pop %v3576
        %v3578 = vmul.f32 %v3395, 1.442695
        %v3579 = vpow.pop %v3578
        %v3580 = vmul.f32 %v3396, 1.442695
        %v3581 = vpow.pop %v3580
        %v3582 = vmul.f32 %v3397, 1.442695
        %v3583 = vpow.pop %v3582
        %v3584 = vmul.f32 %v3398, 1.442695
        %v3585 = vpow.pop %v3584
        %v3586 = vmul.f32 %v3399, 1.442695
        %v3587 = vpow.pop %v3586
        %v3588 = vmul.f32 %v3400, 1.442695
        %v3589 = vpow.pop %v3588
        %v3590 = vmul.f32 %v3401, 1.442695
        %v3591 = vpow.pop %v3590
        %v3592 = vmul.f32 %v3402, 1.442695
        %v3593 = vpow.pop %v3592
        %v3594 = vmul.f32 %v3403, 1.442695
        %v3595 = vpow.pop %v3594
        %v3596 = vmul.f32 %v3404, 1.442695
        %v3597 = vpow.pop %v3596
        %v3598 = vmul.f32 %v3405, 1.442695
        %v3599 = vpow.pop %v3598
        %v3600 = vmul.f32 %v3406, 1.442695
        %v3601 = vpow.pop %v3600
        %v3602 = vmul.f32 %v3407, 1.442695
        %v3603 = vpow.pop %v3602
        %v3604 = vmul.f32 %v3408, 1.442695
        %v3605 = vpow.pop %v3604
        %v3606 = vmul.f32 %v3409, 1.442695
        %v3607 = vpow.pop %v3606
        %v3608 = vmul.f32 %v3410, 1.442695
        %v3609 = vpow.pop %v3608
        %v3610 = vmul.f32 %v3411, 1.442695
        %v3611 = vpow.pop %v3610
        %v3612 = vmul.f32 %v3412, 1.442695
        %v3613 = vpow.pop %v3612
        %v3614 = vmul.f32 %v3413, 1.442695
        %v3615 = vpow.pop %v3614
        %v3616 = vmul.f32 %v3414, 1.442695
        %v3617 = vpow.pop %v3616
        %v3618 = vmul.f32 %v3415, 1.442695
        %v3619 = vpow.pop %v3618
        %v3620 = vmul.f32 %v3416, 1.442695
        %v3621 = vpow.pop %v3620
        %v3622 = vmul.f32 %v3417, 1.442695
        %v3623 = vpow.pop %v3622
        %v3624 = vmul.f32 %v3418, 1.442695
        %v3625 = vpow.pop %v3624
        %v3626 = vmul.f32 %v3419, 1.442695
        %v3627 = vpow.pop %v3626
        %v3628 = vmul.f32 %v3420, 1.442695
        %v3629 = vpow.pop %v3628
        %v3630 = vmul.f32 %v3421, 1.442695
        %v3631 = vpow.pop %v3630
        %v3632 = vmul.f32 %v3422, 1.442695
        %v3633 = vpow.pop %v3632
        %v3634 = vmul.f32 %v3423, 1.442695
        %v3635 = vpow.pop %v3634
        %v3636 = vmul.f32 %v3424, 1.442695
        %v3637 = vpow.pop %v3636
        %v3638 = vmul.f32 %v3425, 1.442695
        %v3639 = vpow.pop %v3638
        %v3640 = vmul.f32 %v3426, 1.442695
        %v3641 = vpow.pop %v3640
        %v3642 = vmul.f32 %v3427, 1.442695
        %v3643 = vpow.pop %v3642
        %v3644 = vmul.f32 %v3428, 1.442695
        %v3645 = vpow.pop %v3644
        %v3646 = vmul.f32 %v3429, 1.442695
        %v3647 = vpow.pop %v3646
        %v3648 = vmul.f32 %v3430, 1.442695
        %v3649 = vpow.pop %v3648
        %v3650 = vmul.f32 %v3431, 1.442695
        %v3651 = vpow.pop %v3650
        %v3652 = vmul.f32 %v3432, 1.442695
        %v3653 = vpow.pop %v3652
        %v3654 = vmul.f32 %v3433, 1.442695
        %v3655 = vpow.pop %v3654
        %v3656 = vmul.f32 %v3434, 1.442695
        %v3657 = vpow.pop %v3656
        %v3658 = vmul.f32 %v3435, 1.442695
        %v3659 = vpow.pop %v3658
        %v3660 = vmul.f32 %v3436, 1.442695
        %v3661 = vpow.pop %v3660
        %v3662 = vmul.f32 %v3437, 1.442695
        %v3663 = vpow.pop %v3662
        %v3664 = vmul.f32 %v3438, 1.442695
        %v3665 = vpow.pop %v3664
        %v3666 = vmul.f32 %v3439, 1.442695
        %v3667 = vpow.pop %v3666
        %v3668 = vmul.f32 %v3440, 1.442695
        %v3669 = vpow.pop %v3668
        %v3670 = vmul.f32 %v3441, 1.442695
        %v3671 = vpow.pop %v3670
        %v3672 = vmul.f32 %v3442, 1.442695
        %v3673 = vpow.pop %v3672
        %v3674 = vmul.f32 %v3443, 1.442695
        %v3675 = vpow.pop %v3674
        %v3676 = vmul.f32 %v3444, 1.442695
        %v3677 = vpow.pop %v3676
        %v3678 = vmul.f32 %v3445, 1.442695
        %v3679 = vpow.pop %v3678
        %v3680 = vmul.f32 %v3446, 1.442695
        %v3681 = vpow.pop %v3680
        %v3682 = vmul.f32 %v3447, 1.442695
        %v3683 = vpow.pop %v3682
        %v3684 = vmul.f32 %v3448, 1.442695
        %v3685 = vpow.pop %v3684
        %v3686 = vmul.f32 %v3449, 1.442695
        %v3687 = vpow.pop %v3686
        %v3688 = vmul.f32 %v3450, 1.442695
        %v3689 = vpow.pop %v3688
        %v3690 = vmul.f32 %v3451, 1.442695
        %v3691 = vpow.pop %v3690
        %v3692 = vmul.f32 %v3452, 1.442695
        %v3693 = vpow.pop %v3692
        %v3694 = vmul.f32 %v3453, 1.442695
        %v3695 = vpow.pop %v3694
        %v3696 = vmul.f32 %v3454, 1.442695
        %v3697 = vpow.pop %v3696
        %v3698 = vmul.f32 %v3455, 1.442695
        %v3699 = vpow.pop %v3698
        %v3700 = vmul.f32 %v3456, 1.442695
        %v3701 = vpow.pop %v3700
        %v3702 = vmul.f32 %v3457, 1.442695
        %v3703 = vpow.pop %v3702
        %v3704 = vmul.f32 %v3458, 1.442695
        %v3705 = vpow.pop %v3704
        %v3706 = vmul.f32 %v3459, 1.442695
        %v3707 = vpow.pop %v3706
        %v3708 = vmul.f32 %v3460, 1.442695
        %v3709 = vpow.pop %v3708
        %v3710 = vmul.f32 %v3461, 1.442695
        %v3711 = vpow.pop %v3710
        %v3712 = vmul.f32 %v3462, 1.442695
        %v3713 = vpow.pop %v3712
        %v3714 = vmul.f32 %v3463, 1.442695
        %v3715 = vpow.pop %v3714
        %v3716 = vmul.f32 %v3464, 1.442695
        %v3717 = vpow.pop %v3716
        %v3718 = vmul.f32 %v3465, 1.442695
        %v3719 = vpow.pop %v3718
        %v3720 = vmul.f32 %v3466, 1.442695
        %v3721 = vpow.pop %v3720
        %v3722 = vmul.f32 %v3467, 1.442695
        %v3723 = vpow.pop %v3722
        %v3724 = vmul.f32 %v3468, 1.442695
        %v3725 = vpow.pop %v3724
        %v3726 = vmul.f32 %v3469, 1.442695
        %v3727 = vpow.pop %v3726
        %v3728 = vmul.f32 %v3470, 1.442695
        %v3729 = vpow.pop %v3728
        %v3730 = vmul.f32 %v3471, 1.442695
        %v3731 = vpow.pop %v3730
        %v3732 = vmul.f32 %v3472, 1.442695
        %v3733 = vpow.pop %v3732
        %v3734 = vmul.f32 %v3473, 1.442695
        %v3735 = vpow.pop %v3734
        %v3736 = vmul.f32 %v3474, 1.442695
        %v3737 = vpow.pop %v3736
        %v3738 = vmul.f32 %v3475, 1.442695
        %v3739 = vpow.pop %v3738
        %v3740 = vmul.f32 %v3476, 1.442695
        %v3741 = vpow.pop %v3740
        %v3742 = vmul.f32 %v3477, 1.442695
        %v3743 = vpow.pop %v3742
        %v3744 = vmul.f32 %v3478, 1.442695
        %v3745 = vpow.pop %v3744
        %v3746 = vmul.f32 %v3479, 1.442695
        %v3747 = vpow.pop %v3746
        %v3748 = vmul.f32 %v3480, 1.442695
        %v3749 = vpow.pop %v3748
        %v3750 = vmul.f32 %v3481, 1.442695
        %v3751 = vpow.pop %v3750
        %v3752 = vmul.f32 %v3482, 1.442695
        %v3753 = vpow.pop %v3752
        %v3754 = vmul.f32 %v3483, 1.442695
        %v3755 = vpow.pop %v3754
        %v3756 = vmul.f32 %v3484, 1.442695
        %v3757 = vpow.pop %v3756
        %v3758 = vmul.f32 %v3485, 1.442695
        %v3759 = vpow.pop %v3758
        %v3760 = vmul.f32 %v3486, 1.442695
        %v3761 = vpow.pop %v3760
        %v3762 = vmul.f32 %v3487, 1.442695
        %v3763 = vpow.pop %v3762
        %v3764 = vmul.f32 %v3488, 1.442695
        %v3765 = vpow.pop %v3764
        %v3766 = vmul.f32 %v3489, 1.442695
        %v3767 = vpow.pop %v3766
        %v3768 = vmul.f32 %v3490, 1.442695
        %v3769 = vpow.pop %v3768
        %v3770 = vmul.f32 %v3491, 1.442695
        %v3771 = vpow.pop %v3770
        %v3772 = vmul.f32 %v3492, 1.442695
        %v3773 = vpow.pop %v3772
        %v3774 = vmul.f32 %v3493, 1.442695
        %v3775 = vpow.pop %v3774
        %v3776 = vmul.f32 %v3494, 1.442695
        %v3777 = vpow.pop %v3776
        %v3778 = vmul.f32 %v3495, 1.442695
        %v3779 = vpow.pop %v3778
        %v3780 = vmul.f32 %v3496, 1.442695
        %v3781 = vpow.pop %v3780
        %v3782 = vmul.f32 %v3497, 1.442695
        %v3783 = vpow.pop %v3782
        %v3784 = vmul.f32 %v3498, 1.442695
        %v3785 = vpow.pop %v3784
        %v3786 = vmul.f32 %v3499, 1.442695
        %v3787 = vpow.pop %v3786
        %v3788 = vmul.f32 %v3500, 1.442695
        %v3789 = vpow.pop %v3788
        %v3790 = vmul.f32 %v3501, 1.442695
        %v3791 = vpow.pop %v3790
        %v3792 = vmul.f32 %v3502, 1.442695
        %v3793 = vpow.pop %v3792
        %v3794 = vmul.f32 %v3503, 1.442695
        %v3795 = vpow.pop %v3794
        %v3796 = vmul.f32 %v3504, 1.442695
        %v3797 = vpow.pop %v3796
        %v3798 = vmul.f32 %v3505, 1.442695
        %v3799 = vpow.pop %v3798
        %v3800 = vmul.f32 %v3506, 1.442695
        %v3801 = vpow.pop %v3800
        %v3802 = vmul.f32 %v3507, 1.442695
        %v3803 = vpow.pop %v3802
        %v3804 = vmul.f32 %v3508, 1.442695
        %v3805 = vpow.pop %v3804
        %v3806 = vmul.f32 %v3509, 1.442695
        %v3807 = vpow.pop %v3806
        %v3808 = vmul.f32 %v3510, 1.442695
        %v3809 = vpow.pop %v3808
        %v3810 = vmul.f32 %v3511, 1.442695
        %v3811 = vpow.pop %v3810
        %v3812 = vmul.f32 %v3512, 1.442695
        %v3813 = vpow.pop %v3812
        %v3814 = vmul.f32 %v3513, 1.442695
        %v3815 = vpow.pop %v3814
        %v3816 = vmul.f32 %v3514, 1.442695
        %v3817 = vpow.pop %v3816
        %v3818 = vmul.f32 %v3515, 1.442695
        %v3819 = vpow.pop %v3818
        %v3820 = vsel %vm308, %v3519, 0.0
        %v3821 = vadd.f32 %v3517, %v3820
        %3822 = vadd.xlane.f32.xlu0 %v3821
        %v3823 = vpop.xlane.xlu0 %3822
        %v3824 = vsel %vm308, %v3523, 0.0
        %v3825 = vadd.f32 %v3521, %v3824
        %3826 = vadd.xlane.f32.xlu0 %v3825
        %v3827 = vpop.xlane.xlu0 %3826
        %v3828 = vsel %vm308, %v3527, 0.0
        %v3829 = vadd.f32 %v3525, %v3828
        %3830 = vadd.xlane.f32.xlu0 %v3829
        %v3831 = vpop.xlane.xlu0 %3830
        %v3832 = vsel %vm308, %v3531, 0.0
        %v3833 = vadd.f32 %v3529, %v3832
        %3834 = vadd.xlane.f32.xlu0 %v3833
        %v3835 = vpop.xlane.xlu0 %3834
        %v3836 = vsel %vm308, %v3535, 0.0
        %v3837 = vadd.f32 %v3533, %v3836
        %3838 = vadd.xlane.f32.xlu0 %v3837
        %v3839 = vpop.xlane.xlu0 %3838
        %v3840 = vsel %vm308, %v3539, 0.0
        %v3841 = vadd.f32 %v3537, %v3840
        %3842 = vadd.xlane.f32.xlu0 %v3841
        %v3843 = vpop.xlane.xlu0 %3842
        %v3844 = vsel %vm308, %v3543, 0.0
        %v3845 = vadd.f32 %v3541, %v3844
        %3846 = vadd.xlane.f32.xlu0 %v3845
        %v3847 = vpop.xlane.xlu0 %3846
        %v3848 = vsel %vm308, %v3547, 0.0
        %v3849 = vadd.f32 %v3545, %v3848
        %3850 = vadd.xlane.f32.xlu0 %v3849
        %v3851 = vpop.xlane.xlu0 %3850
        %v3852 = vsel %vm308, %v3551, 0.0
        %v3853 = vadd.f32 %v3549, %v3852
        %3854 = vadd.xlane.f32.xlu0 %v3853
        %v3855 = vpop.xlane.xlu0 %3854
        %v3856 = vsel %vm308, %v3555, 0.0
        %v3857 = vadd.f32 %v3553, %v3856
        %3858 = vadd.xlane.f32.xlu0 %v3857
        %v3859 = vpop.xlane.xlu0 %3858
        %v3860 = vsel %vm308, %v3559, 0.0
        %v3861 = vadd.f32 %v3557, %v3860
        %3862 = vadd.xlane.f32.xlu0 %v3861
        %v3863 = vpop.xlane.xlu0 %3862
        %v3864 = vsel %vm308, %v3563, 0.0
        %v3865 = vadd.f32 %v3561, %v3864
        %3866 = vadd.xlane.f32.xlu0 %v3865
        %v3867 = vpop.xlane.xlu0 %3866
        %v3868 = vsel %vm308, %v3567, 0.0
        %v3869 = vadd.f32 %v3565, %v3868
        %3870 = vadd.xlane.f32.xlu0 %v3869
        %v3871 = vpop.xlane.xlu0 %3870
        %v3872 = vsel %vm308, %v3571, 0.0
        %v3873 = vadd.f32 %v3569, %v3872
        %3874 = vadd.xlane.f32.xlu0 %v3873
        %v3875 = vpop.xlane.xlu0 %3874
        %v3876 = vsel %vm308, %v3575, 0.0
        %v3877 = vadd.f32 %v3573, %v3876
        %3878 = vadd.xlane.f32.xlu0 %v3877
        %v3879 = vpop.xlane.xlu0 %3878
        %v3880 = vsel %vm308, %v3579, 0.0
        %v3881 = vadd.f32 %v3577, %v3880
        %3882 = vadd.xlane.f32.xlu0 %v3881
        %v3883 = vpop.xlane.xlu0 %3882
        %v3884 = vsel %vm308, %v3583, 0.0
        %v3885 = vadd.f32 %v3581, %v3884
        %3886 = vadd.xlane.f32.xlu0 %v3885
        %v3887 = vpop.xlane.xlu0 %3886
        %v3888 = vsel %vm308, %v3587, 0.0
        %v3889 = vadd.f32 %v3585, %v3888
        %3890 = vadd.xlane.f32.xlu0 %v3889
        %v3891 = vpop.xlane.xlu0 %3890
        %v3892 = vsel %vm3126, %v3589, 0.0
        %v3893 = vsel %vm3128, %v3591, 0.0
        %v3894 = vadd.f32 %v3892, %v3893
        %3895 = vadd.xlane.f32.xlu0 %v3894
        %v3896 = vpop.xlane.xlu0 %3895
        %v3897 = vsel %vm308, %v3595, 0.0
        %v3898 = vadd.f32 %v3593, %v3897
        %3899 = vadd.xlane.f32.xlu0 %v3898
        %v3900 = vpop.xlane.xlu0 %3899
        %v3901 = vsel %vm308, %v3599, 0.0
        %v3902 = vadd.f32 %v3597, %v3901
        %3903 = vadd.xlane.f32.xlu0 %v3902
        %v3904 = vpop.xlane.xlu0 %3903
        %v3905 = vsel %vm308, %v3603, 0.0
        %v3906 = vadd.f32 %v3601, %v3905
        %3907 = vadd.xlane.f32.xlu0 %v3906
        %v3908 = vpop.xlane.xlu0 %3907
        %v3909 = vsel %vm308, %v3607, 0.0
        %v3910 = vadd.f32 %v3605, %v3909
        %3911 = vadd.xlane.f32.xlu0 %v3910
        %v3912 = vpop.xlane.xlu0 %3911
        %v3913 = vsel %vm308, %v3611, 0.0
        %v3914 = vadd.f32 %v3609, %v3913
        %3915 = vadd.xlane.f32.xlu0 %v3914
        %v3916 = vpop.xlane.xlu0 %3915
        %v3917 = vsel %vm308, %v3615, 0.0
        %v3918 = vadd.f32 %v3613, %v3917
        %3919 = vadd.xlane.f32.xlu0 %v3918
        %v3920 = vpop.xlane.xlu0 %3919
        %v3921 = vsel %vm308, %v3619, 0.0
        %v3922 = vadd.f32 %v3617, %v3921
        %3923 = vadd.xlane.f32.xlu0 %v3922
        %v3924 = vpop.xlane.xlu0 %3923
        %v3925 = vsel %vm308, %v3623, 0.0
        %v3926 = vadd.f32 %v3621, %v3925
        %3927 = vadd.xlane.f32.xlu0 %v3926
        %v3928 = vpop.xlane.xlu0 %3927
        %v3929 = vsel %vm308, %v3627, 0.0
        %v3930 = vadd.f32 %v3625, %v3929
        %3931 = vadd.xlane.f32.xlu0 %v3930
        %v3932 = vpop.xlane.xlu0 %3931
        %v3933 = vsel %vm308, %v3631, 0.0
        %v3934 = vadd.f32 %v3629, %v3933
        %3935 = vadd.xlane.f32.xlu0 %v3934
        %v3936 = vpop.xlane.xlu0 %3935
        %v3937 = vsel %vm308, %v3635, 0.0
        %v3938 = vadd.f32 %v3633, %v3937
        %3939 = vadd.xlane.f32.xlu0 %v3938
        %v3940 = vpop.xlane.xlu0 %3939
        %v3941 = vsel %vm308, %v3639, 0.0
        %v3942 = vadd.f32 %v3637, %v3941
        %3943 = vadd.xlane.f32.xlu0 %v3942
        %v3944 = vpop.xlane.xlu0 %3943
        %v3945 = vsel %vm308, %v3643, 0.0
        %v3946 = vadd.f32 %v3641, %v3945
        %3947 = vadd.xlane.f32.xlu0 %v3946
        %v3948 = vpop.xlane.xlu0 %3947
        %v3949 = vsel %vm308, %v3647, 0.0
        %v3950 = vadd.f32 %v3645, %v3949
        %3951 = vadd.xlane.f32.xlu0 %v3950
        %v3952 = vpop.xlane.xlu0 %3951
        %v3953 = vsel %vm308, %v3651, 0.0
        %v3954 = vadd.f32 %v3649, %v3953
        %3955 = vadd.xlane.f32.xlu0 %v3954
        %v3956 = vpop.xlane.xlu0 %3955
        %v3957 = vsel %vm308, %v3655, 0.0
        %v3958 = vadd.f32 %v3653, %v3957
        %3959 = vadd.xlane.f32.xlu0 %v3958
        %v3960 = vpop.xlane.xlu0 %3959
        %v3961 = vsel %vm308, %v3659, 0.0
        %v3962 = vadd.f32 %v3657, %v3961
        %3963 = vadd.xlane.f32.xlu0 %v3962
        %v3964 = vpop.xlane.xlu0 %3963
        %v3965 = vsel %vm308, %v3663, 0.0
        %v3966 = vadd.f32 %v3661, %v3965
        %3967 = vadd.xlane.f32.xlu0 %v3966
        %v3968 = vpop.xlane.xlu0 %3967
        %v3969 = vsel %vm3126, %v3665, 0.0
        %v3970 = vsel %vm3128, %v3667, 0.0
        %v3971 = vadd.f32 %v3969, %v3970
        %3972 = vadd.xlane.f32.xlu0 %v3971
        %v3973 = vpop.xlane.xlu0 %3972
        %v3974 = vsel %vm308, %v3671, 0.0
        %v3975 = vadd.f32 %v3669, %v3974
        %3976 = vadd.xlane.f32.xlu0 %v3975
        %v3977 = vpop.xlane.xlu0 %3976
        %v3978 = vsel %vm308, %v3675, 0.0
        %v3979 = vadd.f32 %v3673, %v3978
        %3980 = vadd.xlane.f32.xlu0 %v3979
        %v3981 = vpop.xlane.xlu0 %3980
        %v3982 = vsel %vm308, %v3679, 0.0
        %v3983 = vadd.f32 %v3677, %v3982
        %3984 = vadd.xlane.f32.xlu0 %v3983
        %v3985 = vpop.xlane.xlu0 %3984
        %v3986 = vsel %vm308, %v3683, 0.0
        %v3987 = vadd.f32 %v3681, %v3986
        %3988 = vadd.xlane.f32.xlu0 %v3987
        %v3989 = vpop.xlane.xlu0 %3988
        %v3990 = vsel %vm308, %v3687, 0.0
        %v3991 = vadd.f32 %v3685, %v3990
        %3992 = vadd.xlane.f32.xlu0 %v3991
        %v3993 = vpop.xlane.xlu0 %3992
        %v3994 = vsel %vm308, %v3691, 0.0
        %v3995 = vadd.f32 %v3689, %v3994
        %3996 = vadd.xlane.f32.xlu0 %v3995
        %v3997 = vpop.xlane.xlu0 %3996
        %v3998 = vsel %vm308, %v3695, 0.0
        %v3999 = vadd.f32 %v3693, %v3998
        %4000 = vadd.xlane.f32.xlu0 %v3999
        %v4001 = vpop.xlane.xlu0 %4000
        %v4002 = vsel %vm308, %v3699, 0.0
        %v4003 = vadd.f32 %v3697, %v4002
        %4004 = vadd.xlane.f32.xlu0 %v4003
        %v4005 = vpop.xlane.xlu0 %4004
        %v4006 = vsel %vm308, %v3703, 0.0
        %v4007 = vadd.f32 %v3701, %v4006
        %4008 = vadd.xlane.f32.xlu0 %v4007
        %v4009 = vpop.xlane.xlu0 %4008
        %v4010 = vsel %vm308, %v3707, 0.0
        %v4011 = vadd.f32 %v3705, %v4010
        %4012 = vadd.xlane.f32.xlu0 %v4011
        %v4013 = vpop.xlane.xlu0 %4012
        %v4014 = vsel %vm308, %v3711, 0.0
        %v4015 = vadd.f32 %v3709, %v4014
        %4016 = vadd.xlane.f32.xlu0 %v4015
        %v4017 = vpop.xlane.xlu0 %4016
        %v4018 = vsel %vm308, %v3715, 0.0
        %v4019 = vadd.f32 %v3713, %v4018
        %4020 = vadd.xlane.f32.xlu0 %v4019
        %v4021 = vpop.xlane.xlu0 %4020
        %v4022 = vsel %vm308, %v3719, 0.0
        %v4023 = vadd.f32 %v3717, %v4022
        %4024 = vadd.xlane.f32.xlu0 %v4023
        %v4025 = vpop.xlane.xlu0 %4024
        %v4026 = vsel %vm308, %v3723, 0.0
        %v4027 = vadd.f32 %v3721, %v4026
        %4028 = vadd.xlane.f32.xlu0 %v4027
        %v4029 = vpop.xlane.xlu0 %4028
        %v4030 = vsel %vm308, %v3727, 0.0
        %v4031 = vadd.f32 %v3725, %v4030
        %4032 = vadd.xlane.f32.xlu0 %v4031
        %v4033 = vpop.xlane.xlu0 %4032
        %v4034 = vsel %vm308, %v3731, 0.0
        %v4035 = vadd.f32 %v3729, %v4034
        %4036 = vadd.xlane.f32.xlu0 %v4035
        %v4037 = vpop.xlane.xlu0 %4036
        %v4038 = vsel %vm308, %v3735, 0.0
        %v4039 = vadd.f32 %v3733, %v4038
        %4040 = vadd.xlane.f32.xlu0 %v4039
        %v4041 = vpop.xlane.xlu0 %4040
        %v4042 = vsel %vm308, %v3739, 0.0
        %v4043 = vadd.f32 %v3737, %v4042
        %4044 = vadd.xlane.f32.xlu0 %v4043
        %v4045 = vpop.xlane.xlu0 %4044
        %v4046 = vsel %vm3126, %v3741, 0.0
        %v4047 = vsel %vm3128, %v3743, 0.0
        %v4048 = vadd.f32 %v4046, %v4047
        %4049 = vadd.xlane.f32.xlu0 %v4048
        %v4050 = vpop.xlane.xlu0 %4049
        %v4051 = vsel %vm308, %v3747, 0.0
        %v4052 = vadd.f32 %v3745, %v4051
        %4053 = vadd.xlane.f32.xlu0 %v4052
        %v4054 = vpop.xlane.xlu0 %4053
        %v4055 = vsel %vm308, %v3751, 0.0
        %v4056 = vadd.f32 %v3749, %v4055
        %4057 = vadd.xlane.f32.xlu0 %v4056
        %v4058 = vpop.xlane.xlu0 %4057
        %v4059 = vsel %vm308, %v3755, 0.0
        %v4060 = vadd.f32 %v3753, %v4059
        %4061 = vadd.xlane.f32.xlu0 %v4060
        %v4062 = vpop.xlane.xlu0 %4061
        %v4063 = vsel %vm308, %v3759, 0.0
        %v4064 = vadd.f32 %v3757, %v4063
        %4065 = vadd.xlane.f32.xlu0 %v4064
        %v4066 = vpop.xlane.xlu0 %4065
        %v4067 = vsel %vm308, %v3763, 0.0
        %v4068 = vadd.f32 %v3761, %v4067
        %4069 = vadd.xlane.f32.xlu0 %v4068
        %v4070 = vpop.xlane.xlu0 %4069
        %v4071 = vsel %vm308, %v3767, 0.0
        %v4072 = vadd.f32 %v3765, %v4071
        %4073 = vadd.xlane.f32.xlu0 %v4072
        %v4074 = vpop.xlane.xlu0 %4073
        %v4075 = vsel %vm308, %v3771, 0.0
        %v4076 = vadd.f32 %v3769, %v4075
        %4077 = vadd.xlane.f32.xlu0 %v4076
        %v4078 = vpop.xlane.xlu0 %4077
        %v4079 = vsel %vm308, %v3775, 0.0
        %v4080 = vadd.f32 %v3773, %v4079
        %4081 = vadd.xlane.f32.xlu0 %v4080
        %v4082 = vpop.xlane.xlu0 %4081
        %v4083 = vsel %vm308, %v3779, 0.0
        %v4084 = vadd.f32 %v3777, %v4083
        %4085 = vadd.xlane.f32.xlu0 %v4084
        %v4086 = vpop.xlane.xlu0 %4085
        %v4087 = vsel %vm308, %v3783, 0.0
        %v4088 = vadd.f32 %v3781, %v4087
        %4089 = vadd.xlane.f32.xlu0 %v4088
        %v4090 = vpop.xlane.xlu0 %4089
        %v4091 = vsel %vm308, %v3787, 0.0
        %v4092 = vadd.f32 %v3785, %v4091
        %4093 = vadd.xlane.f32.xlu0 %v4092
        %v4094 = vpop.xlane.xlu0 %4093
        %v4095 = vsel %vm308, %v3791, 0.0
        %v4096 = vadd.f32 %v3789, %v4095
        %4097 = vadd.xlane.f32.xlu0 %v4096
        %v4098 = vpop.xlane.xlu0 %4097
        %v4099 = vsel %vm308, %v3795, 0.0
        %v4100 = vadd.f32 %v3793, %v4099
        %4101 = vadd.xlane.f32.xlu0 %v4100
        %v4102 = vpop.xlane.xlu0 %4101
        %v4103 = vsel %vm308, %v3799, 0.0
        %v4104 = vadd.f32 %v3797, %v4103
        %4105 = vadd.xlane.f32.xlu0 %v4104
        %v4106 = vpop.xlane.xlu0 %4105
        %v4107 = vsel %vm308, %v3803, 0.0
        %v4108 = vadd.f32 %v3801, %v4107
        %4109 = vadd.xlane.f32.xlu0 %v4108
        %v4110 = vpop.xlane.xlu0 %4109
        %v4111 = vsel %vm308, %v3807, 0.0
        %v4112 = vadd.f32 %v3805, %v4111
        %4113 = vadd.xlane.f32.xlu0 %v4112
        %v4114 = vpop.xlane.xlu0 %4113
        %v4115 = vsel %vm308, %v3811, 0.0
        %v4116 = vadd.f32 %v3809, %v4115
        %4117 = vadd.xlane.f32.xlu0 %v4116
        %v4118 = vpop.xlane.xlu0 %4117
        %v4119 = vsel %vm308, %v3815, 0.0
        %v4120 = vadd.f32 %v3813, %v4119
        %4121 = vadd.xlane.f32.xlu0 %v4120
        %v4122 = vpop.xlane.xlu0 %4121
        %v4123 = vsel %vm3126, %v3817, 0.0
        %v4124 = vsel %vm3128, %v3819, 0.0
        %v4125 = vadd.f32 %v4123, %v4124
        %4126 = vadd.xlane.f32.xlu0 %v4125
        %v4127 = vpop.xlane.xlu0 %4126
        %v4128 = vrcp.pop %v3823
        %v4129 = vrcp.pop %v3827
        %v4130 = vrcp.pop %v3831
        %v4131 = vrcp.pop %v3835
        %v4132 = vrcp.pop %v3839
        %v4133 = vrcp.pop %v3843
        %v4134 = vrcp.pop %v3847
        %v4135 = vrcp.pop %v3851
        %v4136 = vrcp.pop %v3855
        %v4137 = vrcp.pop %v3859
        %v4138 = vrcp.pop %v3863
        %v4139 = vrcp.pop %v3867
        %v4140 = vrcp.pop %v3871
        %v4141 = vrcp.pop %v3875
        %v4142 = vrcp.pop %v3879
        %v4143 = vrcp.pop %v3883
        %v4144 = vrcp.pop %v3887
        %v4145 = vrcp.pop %v3891
        %v4146 = vrcp.pop %v3896
        %v4147 = vrcp.pop %v3900
        %v4148 = vrcp.pop %v3904
        %v4149 = vrcp.pop %v3908
        %v4150 = vrcp.pop %v3912
        %v4151 = vrcp.pop %v3916
        %v4152 = vrcp.pop %v3920
        %v4153 = vrcp.pop %v3924
        %v4154 = vrcp.pop %v3928
        %v4155 = vrcp.pop %v3932
        %v4156 = vrcp.pop %v3936
        %v4157 = vrcp.pop %v3940
        %v4158 = vrcp.pop %v3944
        %v4159 = vrcp.pop %v3948
        %v4160 = vrcp.pop %v3952
        %v4161 = vrcp.pop %v3956
        %v4162 = vrcp.pop %v3960
        %v4163 = vrcp.pop %v3964
        %v4164 = vrcp.pop %v3968
        %v4165 = vrcp.pop %v3973
        %v4166 = vrcp.pop %v3977
        %v4167 = vrcp.pop %v3981
        %v4168 = vrcp.pop %v3985
        %v4169 = vrcp.pop %v3989
        %v4170 = vrcp.pop %v3993
        %v4171 = vrcp.pop %v3997
        %v4172 = vrcp.pop %v4001
        %v4173 = vrcp.pop %v4005
        %v4174 = vrcp.pop %v4009
        %v4175 = vrcp.pop %v4013
        %v4176 = vrcp.pop %v4017
        %v4177 = vrcp.pop %v4021
        %v4178 = vrcp.pop %v4025
        %v4179 = vrcp.pop %v4029
        %v4180 = vrcp.pop %v4033
        %v4181 = vrcp.pop %v4037
        %v4182 = vrcp.pop %v4041
        %v4183 = vrcp.pop %v4045
        %v4184 = vrcp.pop %v4050
        %v4185 = vrcp.pop %v4054
        %v4186 = vrcp.pop %v4058
        %v4187 = vrcp.pop %v4062
        %v4188 = vrcp.pop %v4066
        %v4189 = vrcp.pop %v4070
        %v4190 = vrcp.pop %v4074
        %v4191 = vrcp.pop %v4078
        %v4192 = vrcp.pop %v4082
        %v4193 = vrcp.pop %v4086
        %v4194 = vrcp.pop %v4090
        %v4195 = vrcp.pop %v4094
        %v4196 = vrcp.pop %v4098
        %v4197 = vrcp.pop %v4102
        %v4198 = vrcp.pop %v4106
        %v4199 = vrcp.pop %v4110
        %v4200 = vrcp.pop %v4114
        %v4201 = vrcp.pop %v4118
        %v4202 = vrcp.pop %v4122
        %v4203 = vrcp.pop %v4127
        %v4204 = vmul.f32 %v3517, %v4128
        %v4205 = vmul.f32 %v3519, %v4128
        %v4206 = vmul.f32 %v3521, %v4129
        %v4207 = vmul.f32 %v3523, %v4129
        %v4208 = vmul.f32 %v3525, %v4130
        %v4209 = vmul.f32 %v3527, %v4130
        %v4210 = vmul.f32 %v3529, %v4131
        %v4211 = vmul.f32 %v3531, %v4131
        %v4212 = vmul.f32 %v3533, %v4132
        %v4213 = vmul.f32 %v3535, %v4132
        %v4214 = vmul.f32 %v3537, %v4133
        %v4215 = vmul.f32 %v3539, %v4133
        %v4216 = vmul.f32 %v3541, %v4134
        %v4217 = vmul.f32 %v3543, %v4134
        %v4218 = vmul.f32 %v3545, %v4135
        %v4219 = vmul.f32 %v3547, %v4135
        %v4220 = vmul.f32 %v3549, %v4136
        %v4221 = vmul.f32 %v3551, %v4136
        %v4222 = vmul.f32 %v3553, %v4137
        %v4223 = vmul.f32 %v3555, %v4137
        %v4224 = vmul.f32 %v3557, %v4138
        %v4225 = vmul.f32 %v3559, %v4138
        %v4226 = vmul.f32 %v3561, %v4139
        %v4227 = vmul.f32 %v3563, %v4139
        %v4228 = vmul.f32 %v3565, %v4140
        %v4229 = vmul.f32 %v3567, %v4140
        %v4230 = vmul.f32 %v3569, %v4141
        %v4231 = vmul.f32 %v3571, %v4141
        %v4232 = vmul.f32 %v3573, %v4142
        %v4233 = vmul.f32 %v3575, %v4142
        %v4234 = vmul.f32 %v3577, %v4143
        %v4235 = vmul.f32 %v3579, %v4143
        %v4236 = vmul.f32 %v3581, %v4144
        %v4237 = vmul.f32 %v3583, %v4144
        %v4238 = vmul.f32 %v3585, %v4145
        %v4239 = vmul.f32 %v3587, %v4145
        %v4240 = vmul.f32 %v3589, %v4146
        %v4241 = vmul.f32 %v3591, %v4146
        %v4242 = vmul.f32 %v3593, %v4147
        %v4243 = vmul.f32 %v3595, %v4147
        %v4244 = vmul.f32 %v3597, %v4148
        %v4245 = vmul.f32 %v3599, %v4148
        %v4246 = vmul.f32 %v3601, %v4149
        %v4247 = vmul.f32 %v3603, %v4149
        %v4248 = vmul.f32 %v3605, %v4150
        %v4249 = vmul.f32 %v3607, %v4150
        %v4250 = vmul.f32 %v3609, %v4151
        %v4251 = vmul.f32 %v3611, %v4151
        %v4252 = vmul.f32 %v3613, %v4152
        %v4253 = vmul.f32 %v3615, %v4152
        %v4254 = vmul.f32 %v3617, %v4153
        %v4255 = vmul.f32 %v3619, %v4153
        %v4256 = vmul.f32 %v3621, %v4154
        %v4257 = vmul.f32 %v3623, %v4154
        %v4258 = vmul.f32 %v3625, %v4155
        %v4259 = vmul.f32 %v3627, %v4155
        %v4260 = vmul.f32 %v3629, %v4156
        %v4261 = vmul.f32 %v3631, %v4156
        %v4262 = vmul.f32 %v3633, %v4157
        %v4263 = vmul.f32 %v3635, %v4157
        %v4264 = vmul.f32 %v3637, %v4158
        %v4265 = vmul.f32 %v3639, %v4158
        %v4266 = vmul.f32 %v3641, %v4159
        %v4267 = vmul.f32 %v3643, %v4159
        %v4268 = vmul.f32 %v3645, %v4160
        %v4269 = vmul.f32 %v3647, %v4160
        %v4270 = vmul.f32 %v3649, %v4161
        %v4271 = vmul.f32 %v3651, %v4161
        %v4272 = vmul.f32 %v3653, %v4162
        %v4273 = vmul.f32 %v3655, %v4162
        %v4274 = vmul.f32 %v3657, %v4163
        %v4275 = vmul.f32 %v3659, %v4163
        %v4276 = vmul.f32 %v3661, %v4164
        %v4277 = vmul.f32 %v3663, %v4164
        %v4278 = vmul.f32 %v3665, %v4165
        %v4279 = vmul.f32 %v3667, %v4165
        %v4280 = vmul.f32 %v3669, %v4166
        %v4281 = vmul.f32 %v3671, %v4166
        %v4282 = vmul.f32 %v3673, %v4167
        %v4283 = vmul.f32 %v3675, %v4167
        %v4284 = vmul.f32 %v3677, %v4168
        %v4285 = vmul.f32 %v3679, %v4168
        %v4286 = vmul.f32 %v3681, %v4169
        %v4287 = vmul.f32 %v3683, %v4169
        %v4288 = vmul.f32 %v3685, %v4170
        %v4289 = vmul.f32 %v3687, %v4170
        %v4290 = vmul.f32 %v3689, %v4171
        %v4291 = vmul.f32 %v3691, %v4171
        %v4292 = vmul.f32 %v3693, %v4172
        %v4293 = vmul.f32 %v3695, %v4172
        %v4294 = vmul.f32 %v3697, %v4173
        %v4295 = vmul.f32 %v3699, %v4173
        %v4296 = vmul.f32 %v3701, %v4174
        %v4297 = vmul.f32 %v3703, %v4174
        %v4298 = vmul.f32 %v3705, %v4175
        %v4299 = vmul.f32 %v3707, %v4175
        %v4300 = vmul.f32 %v3709, %v4176
        %v4301 = vmul.f32 %v3711, %v4176
        %v4302 = vmul.f32 %v3713, %v4177
        %v4303 = vmul.f32 %v3715, %v4177
        %v4304 = vmul.f32 %v3717, %v4178
        %v4305 = vmul.f32 %v3719, %v4178
        %v4306 = vmul.f32 %v3721, %v4179
        %v4307 = vmul.f32 %v3723, %v4179
        %v4308 = vmul.f32 %v3725, %v4180
        %v4309 = vmul.f32 %v3727, %v4180
        %v4310 = vmul.f32 %v3729, %v4181
        %v4311 = vmul.f32 %v3731, %v4181
        %v4312 = vmul.f32 %v3733, %v4182
        %v4313 = vmul.f32 %v3735, %v4182
        %v4314 = vmul.f32 %v3737, %v4183
        %v4315 = vmul.f32 %v3739, %v4183
        %v4316 = vmul.f32 %v3741, %v4184
        %v4317 = vmul.f32 %v3743, %v4184
        %v4318 = vmul.f32 %v3745, %v4185
        %v4319 = vmul.f32 %v3747, %v4185
        %v4320 = vmul.f32 %v3749, %v4186
        %v4321 = vmul.f32 %v3751, %v4186
        %v4322 = vmul.f32 %v3753, %v4187
        %v4323 = vmul.f32 %v3755, %v4187
        %v4324 = vmul.f32 %v3757, %v4188
        %v4325 = vmul.f32 %v3759, %v4188
        %v4326 = vmul.f32 %v3761, %v4189
        %v4327 = vmul.f32 %v3763, %v4189
        %v4328 = vmul.f32 %v3765, %v4190
        %v4329 = vmul.f32 %v3767, %v4190
        %v4330 = vmul.f32 %v3769, %v4191
        %v4331 = vmul.f32 %v3771, %v4191
        %v4332 = vmul.f32 %v3773, %v4192
        %v4333 = vmul.f32 %v3775, %v4192
        %v4334 = vmul.f32 %v3777, %v4193
        %v4335 = vmul.f32 %v3779, %v4193
        %v4336 = vmul.f32 %v3781, %v4194
        %v4337 = vmul.f32 %v3783, %v4194
        %v4338 = vmul.f32 %v3785, %v4195
        %v4339 = vmul.f32 %v3787, %v4195
        %v4340 = vmul.f32 %v3789, %v4196
        %v4341 = vmul.f32 %v3791, %v4196
        %v4342 = vmul.f32 %v3793, %v4197
        %v4343 = vmul.f32 %v3795, %v4197
        %v4344 = vmul.f32 %v3797, %v4198
        %v4345 = vmul.f32 %v3799, %v4198
        %v4346 = vmul.f32 %v3801, %v4199
        %v4347 = vmul.f32 %v3803, %v4199
        %v4348 = vmul.f32 %v3805, %v4200
        %v4349 = vmul.f32 %v3807, %v4200
        %v4350 = vmul.f32 %v3809, %v4201
        %v4351 = vmul.f32 %v3811, %v4201
        %v4352 = vmul.f32 %v3813, %v4202
        %v4353 = vmul.f32 %v3815, %v4202
        %v4354 = vmul.f32 %v3817, %v4203
        %v4355 = vmul.f32 %v3819, %v4203
        %v4356 = vpack.c.bf16 %v4205, %v4204
        %v4357 = vpack.c.bf16 %v4207, %v4206
        %v4358 = vpack.c.bf16 %v4209, %v4208
        %v4359 = vpack.c.bf16 %v4211, %v4210
        %v4360 = vpack.c.bf16 %v4213, %v4212
        %v4361 = vpack.c.bf16 %v4215, %v4214
        %v4362 = vpack.c.bf16 %v4217, %v4216
        %v4363 = vpack.c.bf16 %v4219, %v4218
        %v4364 = vpack.c.bf16 %v4221, %v4220
        %v4365 = vpack.c.bf16 %v4223, %v4222
        %v4366 = vpack.c.bf16 %v4225, %v4224
        %v4367 = vpack.c.bf16 %v4227, %v4226
        %v4368 = vpack.c.bf16 %v4229, %v4228
        %v4369 = vpack.c.bf16 %v4231, %v4230
        %v4370 = vpack.c.bf16 %v4233, %v4232
        %v4371 = vpack.c.bf16 %v4235, %v4234
        %v4372 = vpack.c.bf16 %v4237, %v4236
        %v4373 = vpack.c.bf16 %v4239, %v4238
        %v4374 = vpack.c.bf16 %v4241, %v4240
        %v4375 = vpack.c.bf16 %v4243, %v4242
        %v4376 = vpack.c.bf16 %v4245, %v4244
        %v4377 = vpack.c.bf16 %v4247, %v4246
        %v4378 = vpack.c.bf16 %v4249, %v4248
        %v4379 = vpack.c.bf16 %v4251, %v4250
        %v4380 = vpack.c.bf16 %v4253, %v4252
        %v4381 = vpack.c.bf16 %v4255, %v4254
        %v4382 = vpack.c.bf16 %v4257, %v4256
        %v4383 = vpack.c.bf16 %v4259, %v4258
        %v4384 = vpack.c.bf16 %v4261, %v4260
        %v4385 = vpack.c.bf16 %v4263, %v4262
        %v4386 = vpack.c.bf16 %v4265, %v4264
        %v4387 = vpack.c.bf16 %v4267, %v4266
        %v4388 = vpack.c.bf16 %v4269, %v4268
        %v4389 = vpack.c.bf16 %v4271, %v4270
        %v4390 = vpack.c.bf16 %v4273, %v4272
        %v4391 = vpack.c.bf16 %v4275, %v4274
        %v4392 = vpack.c.bf16 %v4277, %v4276
        %v4393 = vpack.c.bf16 %v4279, %v4278
        %v4394 = vpack.c.bf16 %v4281, %v4280
        %v4395 = vpack.c.bf16 %v4283, %v4282
        %v4396 = vpack.c.bf16 %v4285, %v4284
        %v4397 = vpack.c.bf16 %v4287, %v4286
        %v4398 = vpack.c.bf16 %v4289, %v4288
        %v4399 = vpack.c.bf16 %v4291, %v4290
        %v4400 = vpack.c.bf16 %v4293, %v4292
        %v4401 = vpack.c.bf16 %v4295, %v4294
        %v4402 = vpack.c.bf16 %v4297, %v4296
        %v4403 = vpack.c.bf16 %v4299, %v4298
        %v4404 = vpack.c.bf16 %v4301, %v4300
        %v4405 = vpack.c.bf16 %v4303, %v4302
        %v4406 = vpack.c.bf16 %v4305, %v4304
        %v4407 = vpack.c.bf16 %v4307, %v4306
        %v4408 = vpack.c.bf16 %v4309, %v4308
        %v4409 = vpack.c.bf16 %v4311, %v4310
        %v4410 = vpack.c.bf16 %v4313, %v4312
        %v4411 = vpack.c.bf16 %v4315, %v4314
        %v4412 = vpack.c.bf16 %v4317, %v4316
        %v4413 = vpack.c.bf16 %v4319, %v4318
        %v4414 = vpack.c.bf16 %v4321, %v4320
        %v4415 = vpack.c.bf16 %v4323, %v4322
        %v4416 = vpack.c.bf16 %v4325, %v4324
        %v4417 = vpack.c.bf16 %v4327, %v4326
        %v4418 = vpack.c.bf16 %v4329, %v4328
        %v4419 = vpack.c.bf16 %v4331, %v4330
        %v4420 = vpack.c.bf16 %v4333, %v4332
        %v4421 = vpack.c.bf16 %v4335, %v4334
        %v4422 = vpack.c.bf16 %v4337, %v4336
        %v4423 = vpack.c.bf16 %v4339, %v4338
        %v4424 = vpack.c.bf16 %v4341, %v4340
        %v4425 = vpack.c.bf16 %v4343, %v4342
        %v4426 = vpack.c.bf16 %v4345, %v4344
        %v4427 = vpack.c.bf16 %v4347, %v4346
        %v4428 = vpack.c.bf16 %v4349, %v4348
        %v4429 = vpack.c.bf16 %v4351, %v4350
        %v4430 = vpack.c.bf16 %v4353, %v4352
        %v4431 = vpack.c.bf16 %v4355, %v4354
        %v4433 = vunpack.c.l.b16 %v2296
        %v4434 = vunpack.c.h.b16 %v2296
        %v4435 = vpack.c.b16 %v4433, %v4433
        %v4436 = vpack.c.b16 %v4434, %v4434
        %v4457 = vunpack.c.l.b16 %v4356
        %v4458 = vunpack.c.h.b16 %v4356
        %v4459 = vunpack.c.l.b16 %v4357
        %v4460 = vunpack.c.h.b16 %v4357
        %v4461 = vunpack.c.l.b16 %v4358
        %v4462 = vunpack.c.h.b16 %v4358
        %v4463 = vunpack.c.l.b16 %v4359
        %v4464 = vunpack.c.h.b16 %v4359
        %v4465 = vunpack.c.l.b16 %v4360
        %v4466 = vunpack.c.h.b16 %v4360
        %v4467 = vunpack.c.l.b16 %v4361
        %v4468 = vunpack.c.h.b16 %v4361
        %v4469 = vunpack.c.l.b16 %v4362
        %v4470 = vunpack.c.h.b16 %v4362
        %v4471 = vunpack.c.l.b16 %v4363
        %v4472 = vunpack.c.h.b16 %v4363
        %v4473 = vunpack.c.l.b16 %v4364
        %v4474 = vunpack.c.h.b16 %v4364
        %v4475 = vunpack.c.l.b16 %v4365
        %v4476 = vunpack.c.h.b16 %v4365
        %v4477 = vunpack.c.l.b16 %v4366
        %v4478 = vunpack.c.h.b16 %v4366
        %v4479 = vunpack.c.l.b16 %v4367
        %v4480 = vunpack.c.h.b16 %v4367
        %v4481 = vunpack.c.l.b16 %v4368
        %v4482 = vunpack.c.h.b16 %v4368
        %v4483 = vunpack.c.l.b16 %v4369
        %v4484 = vunpack.c.h.b16 %v4369
        %v4485 = vunpack.c.l.b16 %v4370
        %v4486 = vunpack.c.h.b16 %v4370
        %v4487 = vunpack.c.l.b16 %v4371
        %v4488 = vunpack.c.h.b16 %v4371
        %v4489 = vunpack.c.l.b16 %v4372
        %v4490 = vunpack.c.h.b16 %v4372
        %v4491 = vunpack.c.l.b16 %v4373
        %v4492 = vunpack.c.h.b16 %v4373
        %v4493 = vunpack.c.l.b16 %v4374
        %v4494 = vunpack.c.h.b16 %v4374
        %v4495 = vpack.c.b16 %v4459, %v4457
        %v4496 = vpack.c.b16 %v4460, %v4458
        %v4497 = vpack.c.b16 %v4463, %v4461
        %v4498 = vpack.c.b16 %v4464, %v4462
        %v4499 = vpack.c.b16 %v4467, %v4465
        %v4500 = vpack.c.b16 %v4468, %v4466
        %v4501 = vpack.c.b16 %v4471, %v4469
        %v4502 = vpack.c.b16 %v4472, %v4470
        %v4503 = vpack.c.b16 %v4475, %v4473
        %v4504 = vpack.c.b16 %v4476, %v4474
        %v4505 = vpack.c.b16 %v4479, %v4477
        %v4506 = vpack.c.b16 %v4480, %v4478
        %v4507 = vpack.c.b16 %v4483, %v4481
        %v4508 = vpack.c.b16 %v4484, %v4482
        %v4509 = vpack.c.b16 %v4487, %v4485
        %v4510 = vpack.c.b16 %v4488, %v4486
        %v4511 = vpack.c.b16 %v4491, %v4489
        %v4512 = vpack.c.b16 %v4492, %v4490
        %v4513 = vpack.c.b16 %v4493, %v4493
        %v4514 = vpack.c.b16 %v4494, %v4494
        %v4526 = vsel %vm308, %v4436, 0
        %v4529 = vsel %vm308, %v4496, 0
        %v4532 = vsel %vm308, %v4498, 0
        %v4535 = vsel %vm308, %v4500, 0
        %v4538 = vsel %vm308, %v4502, 0
        %v4541 = vsel %vm308, %v4504, 0
        %v4544 = vsel %vm308, %v4506, 0
        %v4547 = vsel %vm308, %v4508, 0
        %v4550 = vsel %vm308, %v4510, 0
        %v4553 = vsel %vm308, %v4512, 0
        %v4556 = vsel %vm308, %v4514, 0
        %4558 = vmatpush.bf16.xpose.msra.mxu0 %v4509
        %4559 = vmatpush.bf16.xpose.msra.mxu0 %v4507
        %4560 = vmatpush.bf16.xpose.msra.mxu0 %v4505
        %4561 = vmatpush.bf16.xpose.msra.mxu0 %v4503
        %4562 = vmatpush.bf16.xpose.msra.mxu0 %v4501
        %4563 = vmatpush.bf16.xpose.msra.mxu0 %v4499
        %4564 = vmatpush.bf16.xpose.msra.mxu0 %v4497
        %4565 = vmatpush.bf16.xpose.msra.mxu0 %v4495
        %4566 = vmatmul.bf16.gmra.mxu0 %v4435
        %v4567 = vpop.f32.mrf.mxu0
        %v4568 = vadd.f32 0.0, %v4567
        %v4569 = vpop.f32.mrf.mxu0
        %4570 = vdwg.mxu0
        %4571 = vmatpush.bf16.xpose.msra.mxu0 %v4550
        %4572 = vmatpush.bf16.xpose.msra.mxu0 %v4547
        %4573 = vmatpush.bf16.xpose.msra.mxu0 %v4544
        %4574 = vmatpush.bf16.xpose.msra.mxu0 %v4541
        %4575 = vmatpush.bf16.xpose.msra.mxu0 %v4538
        %4576 = vmatpush.bf16.xpose.msra.mxu0 %v4535
        %4577 = vmatpush.bf16.xpose.msra.mxu0 %v4532
        %4578 = vmatpush.bf16.xpose.msra.mxu0 %v4529
        %4579 = vmatmul.bf16.gmra.mxu0 %v4526
        %v4580 = vpop.f32.mrf.mxu0
        %v4581 = vadd.f32 %v4568, %v4580
        %v4582 = vpop.f32.mrf.mxu0
        %4583 = vdwg.mxu0
        %4584 = vmatpush.bf16.xpose.msra.mxu0 0
        %4585 = vmatpush.bf16.xpose.msra.mxu0 0
        %4586 = vmatpush.bf16.xpose.msra.mxu0 0
        %4587 = vmatpush.bf16.xpose.msra.mxu0 0
        %4588 = vmatpush.bf16.xpose.msra.mxu0 0
        %4589 = vmatpush.bf16.xpose.msra.mxu0 0
        %4590 = vmatpush.bf16.xpose.msra.mxu0 %v4513
        %4591 = vmatpush.bf16.xpose.msra.mxu0 %v4511
        %4592 = vmatmul.bf16.gmra.mxu0 %v4435
        %v4593 = vpop.f32.mrf.mxu0
        %v4594 = vadd.f32 0.0, %v4593
        %v4595 = vpop.f32.mrf.mxu0
        %4596 = vdwg.mxu0
        %4597 = vmatpush.bf16.xpose.msra.mxu0 0
        %4598 = vmatpush.bf16.xpose.msra.mxu0 0
        %4599 = vmatpush.bf16.xpose.msra.mxu0 0
        %4600 = vmatpush.bf16.xpose.msra.mxu0 0
        %4601 = vmatpush.bf16.xpose.msra.mxu0 0
        %4602 = vmatpush.bf16.xpose.msra.mxu0 0
        %4603 = vmatpush.bf16.xpose.msra.mxu0 %v4556
        %4604 = vmatpush.bf16.xpose.msra.mxu0 %v4553
        %4605 = vmatmul.bf16.gmra.mxu0 %v4526
        %v4606 = vpop.f32.mrf.mxu0
        %v4607 = vadd.f32 %v4594, %v4606
        %v4608 = vpop.f32.mrf.mxu0
        %4609 = vdwg.mxu0
        %v4611 = vunpack.c.l.b16 %v2297
        %v4612 = vunpack.c.h.b16 %v2297
        %v4613 = vpack.c.b16 %v4611, %v4611
        %v4614 = vpack.c.b16 %v4612, %v4612
        %v4635 = vunpack.c.l.b16 %v4375
        %v4636 = vunpack.c.h.b16 %v4375
        %v4637 = vunpack.c.l.b16 %v4376
        %v4638 = vunpack.c.h.b16 %v4376
        %v4639 = vunpack.c.l.b16 %v4377
        %v4640 = vunpack.c.h.b16 %v4377
        %v4641 = vunpack.c.l.b16 %v4378
        %v4642 = vunpack.c.h.b16 %v4378
        %v4643 = vunpack.c.l.b16 %v4379
        %v4644 = vunpack.c.h.b16 %v4379
        %v4645 = vunpack.c.l.b16 %v4380
        %v4646 = vunpack.c.h.b16 %v4380
        %v4647 = vunpack.c.l.b16 %v4381
        %v4648 = vunpack.c.h.b16 %v4381
        %v4649 = vunpack.c.l.b16 %v4382
        %v4650 = vunpack.c.h.b16 %v4382
        %v4651 = vunpack.c.l.b16 %v4383
        %v4652 = vunpack.c.h.b16 %v4383
        %v4653 = vunpack.c.l.b16 %v4384
        %v4654 = vunpack.c.h.b16 %v4384
        %v4655 = vunpack.c.l.b16 %v4385
        %v4656 = vunpack.c.h.b16 %v4385
        %v4657 = vunpack.c.l.b16 %v4386
        %v4658 = vunpack.c.h.b16 %v4386
        %v4659 = vunpack.c.l.b16 %v4387
        %v4660 = vunpack.c.h.b16 %v4387
        %v4661 = vunpack.c.l.b16 %v4388
        %v4662 = vunpack.c.h.b16 %v4388
        %v4663 = vunpack.c.l.b16 %v4389
        %v4664 = vunpack.c.h.b16 %v4389
        %v4665 = vunpack.c.l.b16 %v4390
        %v4666 = vunpack.c.h.b16 %v4390
        %v4667 = vunpack.c.l.b16 %v4391
        %v4668 = vunpack.c.h.b16 %v4391
        %v4669 = vunpack.c.l.b16 %v4392
        %v4670 = vunpack.c.h.b16 %v4392
        %v4671 = vunpack.c.l.b16 %v4393
        %v4672 = vunpack.c.h.b16 %v4393
        %v4673 = vpack.c.b16 %v4637, %v4635
        %v4674 = vpack.c.b16 %v4638, %v4636
        %v4675 = vpack.c.b16 %v4641, %v4639
        %v4676 = vpack.c.b16 %v4642, %v4640
        %v4677 = vpack.c.b16 %v4645, %v4643
        %v4678 = vpack.c.b16 %v4646, %v4644
        %v4679 = vpack.c.b16 %v4649, %v4647
        %v4680 = vpack.c.b16 %v4650, %v4648
        %v4681 = vpack.c.b16 %v4653, %v4651
        %v4682 = vpack.c.b16 %v4654, %v4652
        %v4683 = vpack.c.b16 %v4657, %v4655
        %v4684 = vpack.c.b16 %v4658, %v4656
        %v4685 = vpack.c.b16 %v4661, %v4659
        %v4686 = vpack.c.b16 %v4662, %v4660
        %v4687 = vpack.c.b16 %v4665, %v4663
        %v4688 = vpack.c.b16 %v4666, %v4664
        %v4689 = vpack.c.b16 %v4669, %v4667
        %v4690 = vpack.c.b16 %v4670, %v4668
        %v4691 = vpack.c.b16 %v4671, %v4671
        %v4692 = vpack.c.b16 %v4672, %v4672
        %v4704 = vsel %vm308, %v4614, 0
        %v4707 = vsel %vm308, %v4674, 0
        %v4710 = vsel %vm308, %v4676, 0
        %v4713 = vsel %vm308, %v4678, 0
        %v4716 = vsel %vm308, %v4680, 0
        %v4719 = vsel %vm308, %v4682, 0
        %v4722 = vsel %vm308, %v4684, 0
        %v4725 = vsel %vm308, %v4686, 0
        %v4728 = vsel %vm308, %v4688, 0
        %v4731 = vsel %vm308, %v4690, 0
        %v4734 = vsel %vm308, %v4692, 0
        %4736 = vmatpush.bf16.xpose.msra.mxu0 %v4687
        %4737 = vmatpush.bf16.xpose.msra.mxu0 %v4685
        %4738 = vmatpush.bf16.xpose.msra.mxu0 %v4683
        %4739 = vmatpush.bf16.xpose.msra.mxu0 %v4681
        %4740 = vmatpush.bf16.xpose.msra.mxu0 %v4679
        %4741 = vmatpush.bf16.xpose.msra.mxu0 %v4677
        %4742 = vmatpush.bf16.xpose.msra.mxu0 %v4675
        %4743 = vmatpush.bf16.xpose.msra.mxu0 %v4673
        %4744 = vmatmul.bf16.gmra.mxu0 %v4613
        %v4745 = vpop.f32.mrf.mxu0
        %v4746 = vadd.f32 0.0, %v4745
        %v4747 = vpop.f32.mrf.mxu0
        %4748 = vdwg.mxu0
        %4749 = vmatpush.bf16.xpose.msra.mxu0 %v4728
        %4750 = vmatpush.bf16.xpose.msra.mxu0 %v4725
        %4751 = vmatpush.bf16.xpose.msra.mxu0 %v4722
        %4752 = vmatpush.bf16.xpose.msra.mxu0 %v4719
        %4753 = vmatpush.bf16.xpose.msra.mxu0 %v4716
        %4754 = vmatpush.bf16.xpose.msra.mxu0 %v4713
        %4755 = vmatpush.bf16.xpose.msra.mxu0 %v4710
        %4756 = vmatpush.bf16.xpose.msra.mxu0 %v4707
        %4757 = vmatmul.bf16.gmra.mxu0 %v4704
        %v4758 = vpop.f32.mrf.mxu0
        %v4759 = vadd.f32 %v4746, %v4758
        %v4760 = vpop.f32.mrf.mxu0
        %4761 = vdwg.mxu0
        %4762 = vmatpush.bf16.xpose.msra.mxu0 0
        %4763 = vmatpush.bf16.xpose.msra.mxu0 0
        %4764 = vmatpush.bf16.xpose.msra.mxu0 0
        %4765 = vmatpush.bf16.xpose.msra.mxu0 0
        %4766 = vmatpush.bf16.xpose.msra.mxu0 0
        %4767 = vmatpush.bf16.xpose.msra.mxu0 0
        %4768 = vmatpush.bf16.xpose.msra.mxu0 %v4691
        %4769 = vmatpush.bf16.xpose.msra.mxu0 %v4689
        %4770 = vmatmul.bf16.gmra.mxu0 %v4613
        %v4771 = vpop.f32.mrf.mxu0
        %v4772 = vadd.f32 0.0, %v4771
        %v4773 = vpop.f32.mrf.mxu0
        %4774 = vdwg.mxu0
        %4775 = vmatpush.bf16.xpose.msra.mxu0 0
        %4776 = vmatpush.bf16.xpose.msra.mxu0 0
        %4777 = vmatpush.bf16.xpose.msra.mxu0 0
        %4778 = vmatpush.bf16.xpose.msra.mxu0 0
        %4779 = vmatpush.bf16.xpose.msra.mxu0 0
        %4780 = vmatpush.bf16.xpose.msra.mxu0 0
        %4781 = vmatpush.bf16.xpose.msra.mxu0 %v4734
        %4782 = vmatpush.bf16.xpose.msra.mxu0 %v4731
        %4783 = vmatmul.bf16.gmra.mxu0 %v4704
        %v4784 = vpop.f32.mrf.mxu0
        %v4785 = vadd.f32 %v4772, %v4784
        %v4786 = vpop.f32.mrf.mxu0
        %4787 = vdwg.mxu0
        %v4789 = vunpack.c.l.b16 %v2298
        %v4790 = vunpack.c.h.b16 %v2298
        %v4791 = vpack.c.b16 %v4789, %v4789
        %v4792 = vpack.c.b16 %v4790, %v4790
        %v4813 = vunpack.c.l.b16 %v4394
        %v4814 = vunpack.c.h.b16 %v4394
        %v4815 = vunpack.c.l.b16 %v4395
        %v4816 = vunpack.c.h.b16 %v4395
        %v4817 = vunpack.c.l.b16 %v4396
        %v4818 = vunpack.c.h.b16 %v4396
        %v4819 = vunpack.c.l.b16 %v4397
        %v4820 = vunpack.c.h.b16 %v4397
        %v4821 = vunpack.c.l.b16 %v4398
        %v4822 = vunpack.c.h.b16 %v4398
        %v4823 = vunpack.c.l.b16 %v4399
        %v4824 = vunpack.c.h.b16 %v4399
        %v4825 = vunpack.c.l.b16 %v4400
        %v4826 = vunpack.c.h.b16 %v4400
        %v4827 = vunpack.c.l.b16 %v4401
        %v4828 = vunpack.c.h.b16 %v4401
        %v4829 = vunpack.c.l.b16 %v4402
        %v4830 = vunpack.c.h.b16 %v4402
        %v4831 = vunpack.c.l.b16 %v4403
        %v4832 = vunpack.c.h.b16 %v4403
        %v4833 = vunpack.c.l.b16 %v4404
        %v4834 = vunpack.c.h.b16 %v4404
        %v4835 = vunpack.c.l.b16 %v4405
        %v4836 = vunpack.c.h.b16 %v4405
        %v4837 = vunpack.c.l.b16 %v4406
        %v4838 = vunpack.c.h.b16 %v4406
        %v4839 = vunpack.c.l.b16 %v4407
        %v4840 = vunpack.c.h.b16 %v4407
        %v4841 = vunpack.c.l.b16 %v4408
        %v4842 = vunpack.c.h.b16 %v4408
        %v4843 = vunpack.c.l.b16 %v4409
        %v4844 = vunpack.c.h.b16 %v4409
        %v4845 = vunpack.c.l.b16 %v4410
        %v4846 = vunpack.c.h.b16 %v4410
        %v4847 = vunpack.c.l.b16 %v4411
        %v4848 = vunpack.c.h.b16 %v4411
        %v4849 = vunpack.c.l.b16 %v4412
        %v4850 = vunpack.c.h.b16 %v4412
        %v4851 = vpack.c.b16 %v4815, %v4813
        %v4852 = vpack.c.b16 %v4816, %v4814
        %v4853 = vpack.c.b16 %v4819, %v4817
        %v4854 = vpack.c.b16 %v4820, %v4818
        %v4855 = vpack.c.b16 %v4823, %v4821
        %v4856 = vpack.c.b16 %v4824, %v4822
        %v4857 = vpack.c.b16 %v4827, %v4825
        %v4858 = vpack.c.b16 %v4828, %v4826
        %v4859 = vpack.c.b16 %v4831, %v4829
        %v4860 = vpack.c.b16 %v4832, %v4830
        %v4861 = vpack.c.b16 %v4835, %v4833
        %v4862 = vpack.c.b16 %v4836, %v4834
        %v4863 = vpack.c.b16 %v4839, %v4837
        %v4864 = vpack.c.b16 %v4840, %v4838
        %v4865 = vpack.c.b16 %v4843, %v4841
        %v4866 = vpack.c.b16 %v4844, %v4842
        %v4867 = vpack.c.b16 %v4847, %v4845
        %v4868 = vpack.c.b16 %v4848, %v4846
        %v4869 = vpack.c.b16 %v4849, %v4849
        %v4870 = vpack.c.b16 %v4850, %v4850
        %v4882 = vsel %vm308, %v4792, 0
        %v4885 = vsel %vm308, %v4852, 0
        %v4888 = vsel %vm308, %v4854, 0
        %v4891 = vsel %vm308, %v4856, 0
        %v4894 = vsel %vm308, %v4858, 0
        %v4897 = vsel %vm308, %v4860, 0
        %v4900 = vsel %vm308, %v4862, 0
        %v4903 = vsel %vm308, %v4864, 0
        %v4906 = vsel %vm308, %v4866, 0
        %v4909 = vsel %vm308, %v4868, 0
        %v4912 = vsel %vm308, %v4870, 0
        %4914 = vmatpush.bf16.xpose.msra.mxu0 %v4865
        %4915 = vmatpush.bf16.xpose.msra.mxu0 %v4863
        %4916 = vmatpush.bf16.xpose.msra.mxu0 %v4861
        %4917 = vmatpush.bf16.xpose.msra.mxu0 %v4859
        %4918 = vmatpush.bf16.xpose.msra.mxu0 %v4857
        %4919 = vmatpush.bf16.xpose.msra.mxu0 %v4855
        %4920 = vmatpush.bf16.xpose.msra.mxu0 %v4853
        %4921 = vmatpush.bf16.xpose.msra.mxu0 %v4851
        %4922 = vmatmul.bf16.gmra.mxu0 %v4791
        %v4923 = vpop.f32.mrf.mxu0
        %v4924 = vadd.f32 0.0, %v4923
        %v4925 = vpop.f32.mrf.mxu0
        %4926 = vdwg.mxu0
        %4927 = vmatpush.bf16.xpose.msra.mxu0 %v4906
        %4928 = vmatpush.bf16.xpose.msra.mxu0 %v4903
        %4929 = vmatpush.bf16.xpose.msra.mxu0 %v4900
        %4930 = vmatpush.bf16.xpose.msra.mxu0 %v4897
        %4931 = vmatpush.bf16.xpose.msra.mxu0 %v4894
        %4932 = vmatpush.bf16.xpose.msra.mxu0 %v4891
        %4933 = vmatpush.bf16.xpose.msra.mxu0 %v4888
        %4934 = vmatpush.bf16.xpose.msra.mxu0 %v4885
        %4935 = vmatmul.bf16.gmra.mxu0 %v4882
        %v4936 = vpop.f32.mrf.mxu0
        %v4937 = vadd.f32 %v4924, %v4936
        %v4938 = vpop.f32.mrf.mxu0
        %4939 = vdwg.mxu0
        %4940 = vmatpush.bf16.xpose.msra.mxu0 0
        %4941 = vmatpush.bf16.xpose.msra.mxu0 0
        %4942 = vmatpush.bf16.xpose.msra.mxu0 0
        %4943 = vmatpush.bf16.xpose.msra.mxu0 0
        %4944 = vmatpush.bf16.xpose.msra.mxu0 0
        %4945 = vmatpush.bf16.xpose.msra.mxu0 0
        %4946 = vmatpush.bf16.xpose.msra.mxu0 %v4869
        %4947 = vmatpush.bf16.xpose.msra.mxu0 %v4867
        %4948 = vmatmul.bf16.gmra.mxu0 %v4791
        %v4949 = vpop.f32.mrf.mxu0
        %v4950 = vadd.f32 0.0, %v4949
        %v4951 = vpop.f32.mrf.mxu0
        %4952 = vdwg.mxu0
        %4953 = vmatpush.bf16.xpose.msra.mxu0 0
        %4954 = vmatpush.bf16.xpose.msra.mxu0 0
        %4955 = vmatpush.bf16.xpose.msra.mxu0 0
        %4956 = vmatpush.bf16.xpose.msra.mxu0 0
        %4957 = vmatpush.bf16.xpose.msra.mxu0 0
        %4958 = vmatpush.bf16.xpose.msra.mxu0 0
        %4959 = vmatpush.bf16.xpose.msra.mxu0 %v4912
        %4960 = vmatpush.bf16.xpose.msra.mxu0 %v4909
        %4961 = vmatmul.bf16.gmra.mxu0 %v4882
        %v4962 = vpop.f32.mrf.mxu0
        %v4963 = vadd.f32 %v4950, %v4962
        %v4964 = vpop.f32.mrf.mxu0
        %4965 = vdwg.mxu0
        %v4967 = vunpack.c.l.b16 %v2299
        %v4968 = vunpack.c.h.b16 %v2299
        %v4969 = vpack.c.b16 %v4967, %v4967
        %v4970 = vpack.c.b16 %v4968, %v4968
        %v4991 = vunpack.c.l.b16 %v4413
        %v4992 = vunpack.c.h.b16 %v4413
        %v4993 = vunpack.c.l.b16 %v4414
        %v4994 = vunpack.c.h.b16 %v4414
        %v4995 = vunpack.c.l.b16 %v4415
        %v4996 = vunpack.c.h.b16 %v4415
        %v4997 = vunpack.c.l.b16 %v4416
        %v4998 = vunpack.c.h.b16 %v4416
        %v4999 = vunpack.c.l.b16 %v4417
        %v5000 = vunpack.c.h.b16 %v4417
        %v5001 = vunpack.c.l.b16 %v4418
        %v5002 = vunpack.c.h.b16 %v4418
        %v5003 = vunpack.c.l.b16 %v4419
        %v5004 = vunpack.c.h.b16 %v4419
        %v5005 = vunpack.c.l.b16 %v4420
        %v5006 = vunpack.c.h.b16 %v4420
        %v5007 = vunpack.c.l.b16 %v4421
        %v5008 = vunpack.c.h.b16 %v4421
        %v5009 = vunpack.c.l.b16 %v4422
        %v5010 = vunpack.c.h.b16 %v4422
        %v5011 = vunpack.c.l.b16 %v4423
        %v5012 = vunpack.c.h.b16 %v4423
        %v5013 = vunpack.c.l.b16 %v4424
        %v5014 = vunpack.c.h.b16 %v4424
        %v5015 = vunpack.c.l.b16 %v4425
        %v5016 = vunpack.c.h.b16 %v4425
        %v5017 = vunpack.c.l.b16 %v4426
        %v5018 = vunpack.c.h.b16 %v4426
        %v5019 = vunpack.c.l.b16 %v4427
        %v5020 = vunpack.c.h.b16 %v4427
        %v5021 = vunpack.c.l.b16 %v4428
        %v5022 = vunpack.c.h.b16 %v4428
        %v5023 = vunpack.c.l.b16 %v4429
        %v5024 = vunpack.c.h.b16 %v4429
        %v5025 = vunpack.c.l.b16 %v4430
        %v5026 = vunpack.c.h.b16 %v4430
        %v5027 = vunpack.c.l.b16 %v4431
        %v5028 = vunpack.c.h.b16 %v4431
        %v5029 = vpack.c.b16 %v4993, %v4991
        %v5030 = vpack.c.b16 %v4994, %v4992
        %v5031 = vpack.c.b16 %v4997, %v4995
        %v5032 = vpack.c.b16 %v4998, %v4996
        %v5033 = vpack.c.b16 %v5001, %v4999
        %v5034 = vpack.c.b16 %v5002, %v5000
        %v5035 = vpack.c.b16 %v5005, %v5003
        %v5036 = vpack.c.b16 %v5006, %v5004
        %v5037 = vpack.c.b16 %v5009, %v5007
        %v5038 = vpack.c.b16 %v5010, %v5008
        %v5039 = vpack.c.b16 %v5013, %v5011
        %v5040 = vpack.c.b16 %v5014, %v5012
        %v5041 = vpack.c.b16 %v5017, %v5015
        %v5042 = vpack.c.b16 %v5018, %v5016
        %v5043 = vpack.c.b16 %v5021, %v5019
        %v5044 = vpack.c.b16 %v5022, %v5020
        %v5045 = vpack.c.b16 %v5025, %v5023
        %v5046 = vpack.c.b16 %v5026, %v5024
        %v5047 = vpack.c.b16 %v5027, %v5027
        %v5048 = vpack.c.b16 %v5028, %v5028
        %v5060 = vsel %vm308, %v4970, 0
        %v5063 = vsel %vm308, %v5030, 0
        %v5066 = vsel %vm308, %v5032, 0
        %v5069 = vsel %vm308, %v5034, 0
        %v5072 = vsel %vm308, %v5036, 0
        %v5075 = vsel %vm308, %v5038, 0
        %v5078 = vsel %vm308, %v5040, 0
        %v5081 = vsel %vm308, %v5042, 0
        %v5084 = vsel %vm308, %v5044, 0
        %v5087 = vsel %vm308, %v5046, 0
        %v5090 = vsel %vm308, %v5048, 0
        %5092 = vmatpush.bf16.xpose.msra.mxu0 %v5043
        %5093 = vmatpush.bf16.xpose.msra.mxu0 %v5041
        %5094 = vmatpush.bf16.xpose.msra.mxu0 %v5039
        %5095 = vmatpush.bf16.xpose.msra.mxu0 %v5037
        %5096 = vmatpush.bf16.xpose.msra.mxu0 %v5035
        %5097 = vmatpush.bf16.xpose.msra.mxu0 %v5033
        %5098 = vmatpush.bf16.xpose.msra.mxu0 %v5031
        %5099 = vmatpush.bf16.xpose.msra.mxu0 %v5029
        %5100 = vmatmul.bf16.gmra.mxu0 %v4969
        %v5101 = vpop.f32.mrf.mxu0
        %v5102 = vadd.f32 0.0, %v5101
        %v5103 = vpop.f32.mrf.mxu0
        %5104 = vdwg.mxu0
        %5105 = vmatpush.bf16.xpose.msra.mxu0 %v5084
        %5106 = vmatpush.bf16.xpose.msra.mxu0 %v5081
        %5107 = vmatpush.bf16.xpose.msra.mxu0 %v5078
        %5108 = vmatpush.bf16.xpose.msra.mxu0 %v5075
        %5109 = vmatpush.bf16.xpose.msra.mxu0 %v5072
        %5110 = vmatpush.bf16.xpose.msra.mxu0 %v5069
        %5111 = vmatpush.bf16.xpose.msra.mxu0 %v5066
        %5112 = vmatpush.bf16.xpose.msra.mxu0 %v5063
        %5113 = vmatmul.bf16.gmra.mxu0 %v5060
        %v5114 = vpop.f32.mrf.mxu0
        %v5115 = vadd.f32 %v5102, %v5114
        %v5116 = vpop.f32.mrf.mxu0
        %5117 = vdwg.mxu0
        %5118 = vmatpush.bf16.xpose.msra.mxu0 0
        %5119 = vmatpush.bf16.xpose.msra.mxu0 0
        %5120 = vmatpush.bf16.xpose.msra.mxu0 0
        %5121 = vmatpush.bf16.xpose.msra.mxu0 0
        %5122 = vmatpush.bf16.xpose.msra.mxu0 0
        %5123 = vmatpush.bf16.xpose.msra.mxu0 0
        %5124 = vmatpush.bf16.xpose.msra.mxu0 %v5047
        %5125 = vmatpush.bf16.xpose.msra.mxu0 %v5045
        %5126 = vmatmul.bf16.gmra.mxu0 %v4969
        %v5127 = vpop.f32.mrf.mxu0
        %v5128 = vadd.f32 0.0, %v5127
        %v5129 = vpop.f32.mrf.mxu0
        %5130 = vdwg.mxu0
        %5131 = vmatpush.bf16.xpose.msra.mxu0 0
        %5132 = vmatpush.bf16.xpose.msra.mxu0 0
        %5133 = vmatpush.bf16.xpose.msra.mxu0 0
        %5134 = vmatpush.bf16.xpose.msra.mxu0 0
        %5135 = vmatpush.bf16.xpose.msra.mxu0 0
        %5136 = vmatpush.bf16.xpose.msra.mxu0 0
        %5137 = vmatpush.bf16.xpose.msra.mxu0 %v5090
        %5138 = vmatpush.bf16.xpose.msra.mxu0 %v5087
        %5139 = vmatmul.bf16.gmra.mxu0 %v5060
        %v5140 = vpop.f32.mrf.mxu0
        %v5141 = vadd.f32 %v5128, %v5140
        %v5142 = vpop.f32.mrf.mxu0
        %5143 = vdwg.mxu0
        %v5144 = vpack.c.bf16 %v4759, %v4581
        %v5145 = vpack.c.bf16 %v4785, %v4607
        %v5146 = vpack.c.bf16 %v5115, %v4937
        %v5147 = vpack.c.bf16 %v5141, %v4963
        %v5152 = vunpack.c.l.b16 %v263
        %v5153 = vunpack.c.l.b16 %v264
        %v5154 = vunpack.c.l.b16 %v265
        %v5155 = vunpack.c.l.b16 %v266
        %v5156 = vpack.c.b16 %v5153, %v5152
        %v5157 = vpack.c.b16 %v5155, %v5154
        %v5159 = vsel %vm1098, %v5156, 0
        %v5162 = vsel %vm1098, %v5157, 0
        %5164 = vmatpush.bf16.msra.mxu0 0
        %5165 = vmatpush.bf16.msra.mxu0 0
        %5166 = vmatpush.bf16.msra.mxu0 0
        %5167 = vmatpush.bf16.msra.mxu0 0
        %5168 = vmatpush.bf16.msra.mxu0 0
        %5169 = vmatpush.bf16.msra.mxu0 0
        %5170 = vmatpush.bf16.msra.mxu0 %v5146
        %5171 = vmatpush.bf16.msra.mxu0 %v5144
        %5172 = vmatmul.bf16.gmra.mxu0 %v5159
        %v5173 = vpop.f32.mrf.mxu0
        %v5174 = vadd.f32 0.0, %v5173
        %v5175 = vpop.f32.mrf.mxu0
        %v5176 = vadd.f32 0.0, %v5175
        %5177 = vmatmul.bf16.gmra.mxu0 %v5162
        %v5178 = vpop.f32.mrf.mxu0
        %v5179 = vadd.f32 0.0, %v5178
        %v5180 = vpop.f32.mrf.mxu0
        %v5181 = vadd.f32 0.0, %v5180
        %5182 = vdwg.mxu0
        %5183 = vmatpush.bf16.msra.mxu0 0
        %5184 = vmatpush.bf16.msra.mxu0 0
        %5185 = vmatpush.bf16.msra.mxu0 0
        %5186 = vmatpush.bf16.msra.mxu0 0
        %5187 = vmatpush.bf16.msra.mxu0 0
        %5188 = vmatpush.bf16.msra.mxu0 0
        %5189 = vmatpush.bf16.msra.mxu0 %v5147
        %5190 = vmatpush.bf16.msra.mxu0 %v5145
        %5191 = vmatmul.bf16.gmra.mxu0 %v5159
        %v5192 = vpop.f32.mrf.mxu0
        %v5193 = vadd.f32 0.0, %v5192
        %v5194 = vpop.f32.mrf.mxu0
        %v5195 = vadd.f32 0.0, %v5194
        %5196 = vmatmul.bf16.gmra.mxu0 %v5162
        %v5197 = vpop.f32.mrf.mxu0
        %v5198 = vadd.f32 0.0, %v5197
        %v5199 = vpop.f32.mrf.mxu0
        %v5200 = vadd.f32 0.0, %v5199
        %5201 = vdwg.mxu0
        %v5202 = vadd.f32 %v2000, %v5174
        %v5203 = vadd.f32 %v2001, %v5193
        %v5204 = vadd.f32 %v2002, %v5176
        %v5205 = vadd.f32 %v2003, %v5195
        %v5206 = vadd.f32 %v2004, %v5179
        %v5207 = vadd.f32 %v2005, %v5198
        %v5208 = vadd.f32 %v2006, %v5181
        %v5209 = vadd.f32 %v2007, %v5200
        %5210 = vset.pattern.permute.xlu0 1
        %5211 = vperm.xlu0 %5210, %v279
        %v5212 = vpop.permute.xlu0 %5211
        %5214 = vset.pattern.permute.xlu0 1
        %5215 = vperm.xlu0 %5214, %v280
        %v5216 = vpop.permute.xlu0 %5215
        %5218 = vset.pattern.permute.xlu0 1
        %5219 = vperm.xlu0 %5218, %v281
        %v5220 = vpop.permute.xlu0 %5219
        %5222 = vset.pattern.permute.xlu0 1
        %5223 = vperm.xlu0 %5222, %v282
        %v5224 = vpop.permute.xlu0 %5223
        %v5226 = vadd.f32 %v5202, %v5212
        %v5227 = vadd.f32 %v5203, %v5212
        %v5228 = vadd.f32 %v5204, %v5216
        %v5229 = vadd.f32 %v5205, %v5216
        %v5230 = vadd.f32 %v5206, %v5220
        %v5231 = vadd.f32 %v5207, %v5220
        %v5232 = vadd.f32 %v5208, %v5224
        %v5233 = vadd.f32 %v5209, %v5224
        %v5234 = vadd.f32 %v5226, %v5228
        %v5235 = vadd.f32 %v5234, %v5230
        %v5236 = vadd.f32 %v5235, %v5232
        %v5237 = vrot.slane %v5236, 4
        %v5238 = vadd.f32 %v5236, %v5237
        %v5239 = vrot.slane %v5238, 2
        %v5240 = vadd.f32 %v5238, %v5239
        %v5241 = vrot.slane %v5240, 1
        %v5242 = vadd.f32 %v5240, %v5241
        %v5243 = vsel %vm308, %v5227, 0.0
        %v5244 = vsel %vm308, %v5229, 0.0
        %v5245 = vadd.f32 %v5243, %v5244
        %v5246 = vsel %vm308, %v5231, 0.0
        %v5247 = vadd.f32 %v5245, %v5246
        %v5248 = vsel %vm308, %v5233, 0.0
        %v5249 = vadd.f32 %v5247, %v5248
        %v5250 = vrot.slane %v5249, 4
        %v5251 = vadd.f32 %v5249, %v5250
        %v5252 = vrot.slane %v5251, 2
        %v5253 = vadd.f32 %v5251, %v5252
        %v5254 = vrot.slane %v5253, 1
        %v5255 = vadd.f32 %v5253, %v5254
        %v5256 = vmul.f32 %v5242, %v328
        %v5257 = vmul.f32 %v5255, %v328
        %v5258 = vsub.f32 %v5226, %v5256
        %v5259 = vsub.f32 %v5227, %v5257
        %v5260 = vsub.f32 %v5228, %v5256
        %v5261 = vsub.f32 %v5229, %v5257
        %v5262 = vsub.f32 %v5230, %v5256
        %v5263 = vsub.f32 %v5231, %v5257
        %v5264 = vsub.f32 %v5232, %v5256
        %v5265 = vsub.f32 %v5233, %v5257
        %v5266 = vmul.f32 %v5258, %v5258
        %v5267 = vmul.f32 %v5259, %v5259
        %v5268 = vmul.f32 %v5260, %v5260
        %v5269 = vmul.f32 %v5261, %v5261
        %v5270 = vmul.f32 %v5262, %v5262
        %v5271 = vmul.f32 %v5263, %v5263
        %v5272 = vmul.f32 %v5264, %v5264
        %v5273 = vmul.f32 %v5265, %v5265
        %v5274 = vadd.f32 %v5266, %v5268
        %v5275 = vadd.f32 %v5274, %v5270
        %v5276 = vadd.f32 %v5275, %v5272
        %v5277 = vrot.slane %v5276, 4
        %v5278 = vadd.f32 %v5276, %v5277
        %v5279 = vrot.slane %v5278, 2
        %v5280 = vadd.f32 %v5278, %v5279
        %v5281 = vrot.slane %v5280, 1
        %v5282 = vadd.f32 %v5280, %v5281
        %v5283 = vsel %vm308, %v5267, 0.0
        %v5284 = vsel %vm308, %v5269, 0.0
        %v5285 = vadd.f32 %v5283, %v5284
        %v5286 = vsel %vm308, %v5271, 0.0
        %v5287 = vadd.f32 %v5285, %v5286
        %v5288 = vsel %vm308, %v5273, 0.0
        %v5289 = vadd.f32 %v5287, %v5288
        %v5290 = vrot.slane %v5289, 4
        %v5291 = vadd.f32 %v5289, %v5290
        %v5292 = vrot.slane %v5291, 2
        %v5293 = vadd.f32 %v5291, %v5292
        %v5294 = vrot.slane %v5293, 1
        %v5295 = vadd.f32 %v5293, %v5294
        %v5296 = vmul.f32 %v5282, %v328
        %v5297 = vmul.f32 %v5295, %v328
        %v5298 = vadd.f32 %v5296, 1e-05
        %v5299 = vadd.f32 %v5297, 1e-05
        %v5300 = vrsqrt.pop %v5298
        %v5301 = vmul.f32 %v5300, %v5298
        %v5302 = vmul.f32 %v5301, %v5300
        %v5303 = vmul.f32 0.5, %v5302
        %v5304 = vsub.f32 1.5, %v5303
        %v5305 = vmul.f32 %v5300, %v5304
        %vm5306 = vweird.f32 %v5298
        %vm5307 = vweird.f32 %v5300
        %vm5308 = vmor %vm5306, %vm5307
        %v5309 = vsel %vm5308, %v5300, %v5305
        %v5310 = vrsqrt.pop %v5299
        %v5311 = vmul.f32 %v5310, %v5299
        %v5312 = vmul.f32 %v5311, %v5310
        %v5313 = vmul.f32 0.5, %v5312
        %v5314 = vsub.f32 1.5, %v5313
        %v5315 = vmul.f32 %v5310, %v5314
        %vm5316 = vweird.f32 %v5299
        %vm5317 = vweird.f32 %v5310
        %vm5318 = vmor %vm5316, %vm5317
        %v5319 = vsel %vm5318, %v5310, %v5315
        %v5320 = vmul.f32 %v5258, %v5309
        %v5321 = vmul.f32 %v5259, %v5319
        %v5322 = vmul.f32 %v5260, %v5309
        %v5323 = vmul.f32 %v5261, %v5319
        %v5324 = vmul.f32 %v5262, %v5309
        %v5325 = vmul.f32 %v5263, %v5319
        %v5326 = vmul.f32 %v5264, %v5309
        %v5327 = vmul.f32 %v5265, %v5319
        %v5328 = vpack.c.bf16 %v5322, %v5320
        %v5329 = vpack.c.bf16 %v5323, %v5321
        %v5330 = vpack.c.bf16 %v5326, %v5324
        %v5331 = vpack.c.bf16 %v5327, %v5325
        %5332 = vset.pattern.permute.xlu0 2
        %5333 = vperm.xlu0 %5332, %v279
        %v5334 = vpop.permute.xlu0 %5333
        %5336 = vset.pattern.permute.xlu0 2
        %5337 = vperm.xlu0 %5336, %v280
        %v5338 = vpop.permute.xlu0 %5337
        %5340 = vset.pattern.permute.xlu0 2
        %5341 = vperm.xlu0 %5340, %v281
        %v5342 = vpop.permute.xlu0 %5341
        %5344 = vset.pattern.permute.xlu0 2
        %5345 = vperm.xlu0 %5344, %v282
        %v5346 = vpop.permute.xlu0 %5345
        %5348 = vset.pattern.permute.xlu0 2
        %5349 = vperm.xlu0 %5348, %v283
        %v5350 = vpop.permute.xlu0 %5349
        %5352 = vset.pattern.permute.xlu0 2
        %5353 = vperm.xlu0 %5352, %v284
        %v5354 = vpop.permute.xlu0 %5353
        %5356 = vset.pattern.permute.xlu0 2
        %5357 = vperm.xlu0 %5356, %v285
        %v5358 = vpop.permute.xlu0 %5357
        %5360 = vset.pattern.permute.xlu0 2
        %5361 = vperm.xlu0 %5360, %v286
        %v5362 = vpop.permute.xlu0 %5361
        %v5372 = vunpack.c.l.b16 %v267
        %v5373 = vunpack.c.l.b16 %v268
        %v5374 = vunpack.c.l.b16 %v269
        %v5375 = vunpack.c.l.b16 %v270
        %v5376 = vunpack.c.l.b16 %v271
        %v5377 = vunpack.c.l.b16 %v272
        %v5378 = vunpack.c.l.b16 %v273
        %v5379 = vunpack.c.l.b16 %v274
        %v5380 = vpack.c.b16 %v5373, %v5372
        %v5381 = vpack.c.b16 %v5375, %v5374
        %v5382 = vpack.c.b16 %v5377, %v5376
        %v5383 = vpack.c.b16 %v5379, %v5378
        %v5385 = vsel %vm1098, %v5380, 0
        %v5388 = vsel %vm1098, %v5381, 0
        %v5391 = vsel %vm1098, %v5382, 0
        %v5394 = vsel %vm1098, %v5383, 0
        %5396 = vmatpush.bf16.msra.mxu0 0
        %5397 = vmatpush.bf16.msra.mxu0 0
        %5398 = vmatpush.bf16.msra.mxu0 0
        %5399 = vmatpush.bf16.msra.mxu0 0
        %5400 = vmatpush.bf16.msra.mxu0 0
        %5401 = vmatpush.bf16.msra.mxu0 0
        %5402 = vmatpush.bf16.msra.mxu0 %v5330
        %5403 = vmatpush.bf16.msra.mxu0 %v5328
        %5404 = vmatmul.bf16.gmra.mxu0 %v5385
        %v5405 = vpop.f32.mrf.mxu0
        %v5406 = vadd.f32 %v5334, %v5405
        %v5407 = vpop.f32.mrf.mxu0
        %v5408 = vadd.f32 %v5338, %v5407
        %5409 = vmatmul.bf16.gmra.mxu0 %v5388
        %v5410 = vpop.f32.mrf.mxu0
        %v5411 = vadd.f32 %v5342, %v5410
        %v5412 = vpop.f32.mrf.mxu0
        %v5413 = vadd.f32 %v5346, %v5412
        %5414 = vmatmul.bf16.gmra.mxu0 %v5391
        %v5415 = vpop.f32.mrf.mxu0
        %v5416 = vadd.f32 %v5350, %v5415
        %v5417 = vpop.f32.mrf.mxu0
        %v5418 = vadd.f32 %v5354, %v5417
        %5419 = vmatmul.bf16.gmra.mxu0 %v5394
        %v5420 = vpop.f32.mrf.mxu0
        %v5421 = vadd.f32 %v5358, %v5420
        %v5422 = vpop.f32.mrf.mxu0
        %v5423 = vadd.f32 %v5362, %v5422
        %5424 = vdwg.mxu0
        %5425 = vmatpush.bf16.msra.mxu0 0
        %5426 = vmatpush.bf16.msra.mxu0 0
        %5427 = vmatpush.bf16.msra.mxu0 0
        %5428 = vmatpush.bf16.msra.mxu0 0
        %5429 = vmatpush.bf16.msra.mxu0 0
        %5430 = vmatpush.bf16.msra.mxu0 0
        %5431 = vmatpush.bf16.msra.mxu0 %v5331
        %5432 = vmatpush.bf16.msra.mxu0 %v5329
        %5433 = vmatmul.bf16.gmra.mxu0 %v5385
        %v5434 = vpop.f32.mrf.mxu0
        %v5435 = vadd.f32 %v5334, %v5434
        %v5436 = vpop.f32.mrf.mxu0
        %v5437 = vadd.f32 %v5338, %v5436
        %5438 = vmatmul.bf16.gmra.mxu0 %v5388
        %v5439 = vpop.f32.mrf.mxu0
        %v5440 = vadd.f32 %v5342, %v5439
        %v5441 = vpop.f32.mrf.mxu0
        %v5442 = vadd.f32 %v5346, %v5441
        %5443 = vmatmul.bf16.gmra.mxu0 %v5391
        %v5444 = vpop.f32.mrf.mxu0
        %v5445 = vadd.f32 %v5350, %v5444
        %v5446 = vpop.f32.mrf.mxu0
        %v5447 = vadd.f32 %v5354, %v5446
        %5448 = vmatmul.bf16.gmra.mxu0 %v5394
        %v5449 = vpop.f32.mrf.mxu0
        %v5450 = vadd.f32 %v5358, %v5449
        %v5451 = vpop.f32.mrf.mxu0
        %v5452 = vadd.f32 %v5362, %v5451
        %5453 = vdwg.mxu0
        %v5454 = vmax.f32 %v5406, 0.0
        %v5455 = vmax.f32 %v5435, 0.0
        %v5456 = vmax.f32 %v5408, 0.0
        %v5457 = vmax.f32 %v5437, 0.0
        %v5458 = vmax.f32 %v5411, 0.0
        %v5459 = vmax.f32 %v5440, 0.0
        %v5460 = vmax.f32 %v5413, 0.0
        %v5461 = vmax.f32 %v5442, 0.0
        %v5462 = vmax.f32 %v5416, 0.0
        %v5463 = vmax.f32 %v5445, 0.0
        %v5464 = vmax.f32 %v5418, 0.0
        %v5465 = vmax.f32 %v5447, 0.0
        %v5466 = vmax.f32 %v5421, 0.0
        %v5467 = vmax.f32 %v5450, 0.0
        %v5468 = vmax.f32 %v5423, 0.0
        %v5469 = vmax.f32 %v5452, 0.0
        %v5470 = vpack.c.bf16 %v5456, %v5454
        %v5471 = vpack.c.bf16 %v5457, %v5455
        %v5472 = vpack.c.bf16 %v5460, %v5458
        %v5473 = vpack.c.bf16 %v5461, %v5459
        %v5474 = vpack.c.bf16 %v5464, %v5462
        %v5475 = vpack.c.bf16 %v5465, %v5463
        %v5476 = vpack.c.bf16 %v5468, %v5466
        %v5477 = vpack.c.bf16 %v5469, %v5467
        %v5482 = vunpack.c.l.b16 %v275
        %v5483 = vunpack.c.l.b16 %v276
        %v5484 = vunpack.c.l.b16 %v277
        %v5485 = vunpack.c.l.b16 %v278
        %v5486 = vpack.c.b16 %v5483, %v5482
        %v5487 = vpack.c.b16 %v5485, %v5484
        %v5489 = vsel %vm1771, %v5486, 0
        %v5492 = vsel %vm1771, %v5487, 0
        %5494 = vmatpush.bf16.msra.mxu0 0
        %5495 = vmatpush.bf16.msra.mxu0 0
        %5496 = vmatpush.bf16.msra.mxu0 0
        %5497 = vmatpush.bf16.msra.mxu0 0
        %5498 = vmatpush.bf16.msra.mxu0 %v5476
        %5499 = vmatpush.bf16.msra.mxu0 %v5474
        %5500 = vmatpush.bf16.msra.mxu0 %v5472
        %5501 = vmatpush.bf16.msra.mxu0 %v5470
        %5502 = vmatmul.bf16.gmra.mxu0 %v5489
        %v5503 = vpop.f32.mrf.mxu0
        %v5504 = vadd.f32 0.0, %v5503
        %v5505 = vpop.f32.mrf.mxu0
        %v5506 = vadd.f32 0.0, %v5505
        %5507 = vmatmul.bf16.gmra.mxu0 %v5492
        %v5508 = vpop.f32.mrf.mxu0
        %v5509 = vadd.f32 0.0, %v5508
        %v5510 = vpop.f32.mrf.mxu0
        %v5511 = vadd.f32 0.0, %v5510
        %5512 = vdwg.mxu0
        %5513 = vmatpush.bf16.msra.mxu0 0
        %5514 = vmatpush.bf16.msra.mxu0 0
        %5515 = vmatpush.bf16.msra.mxu0 0
        %5516 = vmatpush.bf16.msra.mxu0 0
        %5517 = vmatpush.bf16.msra.mxu0 %v5477
        %5518 = vmatpush.bf16.msra.mxu0 %v5475
        %5519 = vmatpush.bf16.msra.mxu0 %v5473
        %5520 = vmatpush.bf16.msra.mxu0 %v5471
        %5521 = vmatmul.bf16.gmra.mxu0 %v5489
        %v5522 = vpop.f32.mrf.mxu0
        %v5523 = vadd.f32 0.0, %v5522
        %v5524 = vpop.f32.mrf.mxu0
        %v5525 = vadd.f32 0.0, %v5524
        %5526 = vmatmul.bf16.gmra.mxu0 %v5492
        %v5527 = vpop.f32.mrf.mxu0
        %v5528 = vadd.f32 0.0, %v5527
        %v5529 = vpop.f32.mrf.mxu0
        %v5530 = vadd.f32 0.0, %v5529
        %5531 = vdwg.mxu0
        %v5532 = vadd.f32 %v5226, %v5504
        %v5533 = vadd.f32 %v5227, %v5523
        %v5534 = vadd.f32 %v5228, %v5506
        %v5535 = vadd.f32 %v5229, %v5525
        %v5536 = vadd.f32 %v5230, %v5509
        %v5537 = vadd.f32 %v5231, %v5528
        %v5538 = vadd.f32 %v5232, %v5511
        %v5539 = vadd.f32 %v5233, %v5530
        %5540 = vset.pattern.permute.xlu0 3
        %5541 = vperm.xlu0 %5540, %v279
        %v5542 = vpop.permute.xlu0 %5541
        %5544 = vset.pattern.permute.xlu0 3
        %5545 = vperm.xlu0 %5544, %v280
        %v5546 = vpop.permute.xlu0 %5545
        %5548 = vset.pattern.permute.xlu0 3
        %5549 = vperm.xlu0 %5548, %v281
        %v5550 = vpop.permute.xlu0 %5549
        %5552 = vset.pattern.permute.xlu0 3
        %5553 = vperm.xlu0 %5552, %v282
        %v5554 = vpop.permute.xlu0 %5553
        %v5556 = vadd.f32 %v5532, %v5542
        %v5557 = vadd.f32 %v5533, %v5542
        %v5558 = vadd.f32 %v5534, %v5546
        %v5559 = vadd.f32 %v5535, %v5546
        %v5560 = vadd.f32 %v5536, %v5550
        %v5561 = vadd.f32 %v5537, %v5550
        %v5562 = vadd.f32 %v5538, %v5554
        %v5563 = vadd.f32 %v5539, %v5554
        %5564 = vst [vmem:[%s244] sm:$0xff] %v5556
        %5565 = vst.msk [vmem:[%s244 + $0x8] sm:$0xff] %vm308, %v5557
        %5566 = vst [vmem:[%s244 + $0x10] sm:$0xff] %v5558
        %5567 = vst.msk [vmem:[%s244 + $0x18] sm:$0xff] %vm308, %v5559
        %5568 = vst [vmem:[%s244 + $0x20] sm:$0xff] %v5560
        %5569 = vst.msk [vmem:[%s244 + $0x28] sm:$0xff] %vm308, %v5561
        %5570 = vst [vmem:[%s244 + $0x30] sm:$0xff] %v5562
        %5571 = vst.msk [vmem:[%s244 + $0x38] sm:$0xff] %vm308, %v5563
        %s5572 = sand.u32 %s159, 1
        %s5573 = scalar_lea.sflag [#allocation3], %s5572
        %s5574 = sand.u32 %s159, 1
        %s5575 = smul.addr %s5574, 64
        %s5576 = scalar_lea.vmem [#allocation2], %s5575
        // Predicated region
        $region45: #{music_encoder.1} parent=43 // pred_check
          %p5577 = pneg %p169
        $region46: #{music_encoder.1} parent=43 // pred_check_branch
          %5579 = sbr.rel (%p5577) target = $region48
        $region47: #{music_encoder.1} parent=43 // pred_region
          %5581 = vsyncadd %s5573, 0
          %s5582 = smul.addr %s20, 8
          %s5583 = smul.addr %s5582, 8
          %s5584 = scalar_lea.hbm %s6, %s5583
          %s5585 = sshll.u32 %s5576, 4
          %s5586 = int_to_ptr.vmem [resolvable:$true] %s5585
          %s5587 = sshll.u32 %s5584, 4
          %s5588 = int_to_ptr.hbm [resolvable:$true] %s5587
          %5593 = dma.vmem_to_hbm [thread:$0]  %s5586, 1024, %s5588, %s5573, 256, 256, 16
        $region48: #{music_encoder.1} parent=43 // pred_fallthru
          _
      $region44: #{music_encoder.1} parent=5 // pred_fallthru
        _
      %p5594 = scmp.le.s32.totalorder 2, %s15
      // Predicated region
      $region49: #{music_encoder.1} parent=5 // pred_check
        %p5595 = pneg %p5594
      $region50: #{music_encoder.1} parent=5 // pred_check_branch
        %5597 = sbr.rel (%p5595) target = $region52
      $region51: #{music_encoder.1} parent=5 // pred_region
        %s5598 = ssub.s32 %s15, 2
        // Predicated region
        $region53: #{music_encoder.1} parent=51 // pred_check
          %p5599 = pneg %p175
        $region54: #{music_encoder.1} parent=51 // pred_check_branch
          %5601 = sbr.rel (%p5599) target = $region56
        $region55: #{music_encoder.1} parent=51 // pred_region
          %s5602 = sand.u32 %s160, 1
          %s5603 = scalar_lea.sflag [#allocation3], %s5602
          %s5604 = sand.u32 %s160, 1
          %s5605 = smul.addr %s5604, 64
          %s5606 = scalar_lea.vmem [#allocation2], %s5605
          %5608 = dma.done %s5603, 1024
        $region56: #{music_encoder.1} parent=51 // pred_fallthru
          _
      $region52: #{music_encoder.1} parent=5 // pred_fallthru
        _
    $region6: #{music_encoder.1} parent=1 // loop_footer
      %s19 = sadd.s32 1, %s15
    $region7: #{music_encoder.1} parent=1 // loop_footer_branch
      %14 = sbr.rel target = $region3
    $region8: #{music_encoder.1} parent=1 // loop_exit
      _
    %5609 = vsyncpa [#allocation3], 1
    %s5610 = scalar_lea.sflag [#allocation3], 1
    %5611 = vsyncpa %s5610, 1

</llo_original>
